<compile_context>
chip_gen: v7x
topology: tpu7x:2x2x1
jax: 0.10.0
libtpu: 0.0.40
codegen_flags: <defaults>
</compile_context>

<pallas_src>
import functools

import jax
import jax.numpy as jnp
import numpy as np
from jax.experimental import pallas as pl
from jax.experimental.pallas import tpu as pltpu


# ---------------------------------------------------------------------------
# Fused kernel: conv1+ReLU+pool -> conv2+ReLU+pool -> fc1 -> fc2 -> fc3
# One grid step = B_TILE images; every matmul has M = B_TILE * rows.
# ---------------------------------------------------------------------------

def _lenet_fused_kernel(k, ph2, b_tile,
                        x_ref, b1_ref, c1b_ref, selc1_ref,
                        b2_ref, c2b_ref, selc2_ref,
                        wf1_ref, f1b_ref, wf2_ref, f2b_ref, wf3_ref, f3b_ref,
                        out_ref, s1_ref, s2_ref, s3_ref):
    f32, bf16 = jnp.float32, jnp.bfloat16
    m1 = x_ref.shape[0]        # b_tile * 32 rows (28 valid per image)
    m2 = m1 // 2               # b_tile * 16 rows (14 valid per image)
    m3 = m1 // 4               # b_tile * 8  rows (5  valid per image)
    rows_per_img3 = m3 // b_tile   # == 8

    def mm(a, b):
        return jnp.dot(a, b, preferred_element_type=f32)

    def shift_rows(a, s):
        # out[r] = a[(r + s) % rows].  Wrapped rows only ever reach each
        # image's unused tail rows, never a valid output row.
        return a if s == 0 else pltpu.roll(a, shift=a.shape[0] - s, axis=0)

    # ---- conv1 + bias + ReLU: rows = (b, i), lanes = co*28 + j --------------
    x = x_ref[...]                                            # (m1, 96) f32
    acc1 = jnp.zeros((m1, b1_ref.shape[-1]), f32)
    for kh in range(k):
        acc1 = acc1 + mm(shift_rows(x, kh).astype(bf16), b1_ref[kh])
    s1_ref[...] = jnp.maximum(acc1 + c1b_ref[...], 0.0)

    # ---- 2x2 max pool: rows via strided sublane reads, cols via 0/1 matmul --
    rmax = jnp.maximum(s1_ref[pl.ds(0, m2, stride=2), :],
                       s1_ref[pl.ds(1, m2, stride=2), :]).astype(bf16)
    p1 = jnp.maximum(mm(rmax, selc1_ref[0]), mm(rmax, selc1_ref[1]))

    # ---- conv2 + bias + ReLU: rows = (b, i2), lanes = co*10 + j2 ------------
    acc2 = jnp.zeros((m2, b2_ref.shape[-1]), f32)
    for kh in range(k):
        acc2 = acc2 + mm(shift_rows(p1, kh).astype(bf16), b2_ref[kh])
    s2_ref[...] = jnp.maximum(acc2 + c2b_ref[...], 0.0)

    # ---- 2x2 max pool --------------------------------------------------------
    rmax2 = jnp.maximum(s2_ref[pl.ds(0, m3, stride=2), :],
                        s2_ref[pl.ds(1, m3, stride=2), :]).astype(bf16)
    s3_ref[...] = jnp.maximum(mm(rmax2, selc2_ref[0]), mm(rmax2, selc2_ref[1]))

    # ---- fc1 (+ReLU): contract the ph2 pooled rows of every image -----------
    # Pooled row u of image b sits at scratch row b*8 + u -> stride-8 gather.
    acc_f = jnp.zeros((b_tile, f1b_ref.shape[-1]), f32)
    for u in range(ph2):
        rows = s3_ref[pl.ds(u, b_tile, stride=rows_per_img3), :].astype(bf16)
        acc_f = acc_f + mm(rows, wf1_ref[u])
    y1 = jnp.maximum(acc_f + f1b_ref[...], 0.0)

    # ---- fc2 (+ReLU), fc3 ----------------------------------------------------
    y2 = jnp.maximum(mm(y1.astype(bf16), wf2_ref[...]) + f2b_ref[...], 0.0)
    out_ref[...] = mm(y2.astype(bf16), wf3_ref[...]) + f3b_ref[...]


# ---------------------------------------------------------------------------
# Host-side weight packing (runs once; results are jit constants)
# ---------------------------------------------------------------------------

def pack_params(params, super_para):
    k, c1, c2, h1, h2 = super_para
    cin, h_in = 3, 32
    oh1 = h_in - k + 1
    assert oh1 % 2 == 0, "conv1 output must be even for 2x2 pooling"
    ph1 = oh1 // 2
    oh2 = ph1 - k + 1
    assert oh2 % 2 == 0, "conv2 output must be even for 2x2 pooling"
    ph2 = oh2 // 2                       # == last_w in the PyTorch model

    w1 = np.asarray(params["conv1_w"], np.float32)      # (c1, cin, k, k)
    w2 = np.asarray(params["conv2_w"], np.float32)      # (c2, c1, k, k)

    # conv1 band matrices (one per kernel row):
    #   B1[kh, c*32 + (j+kw), co*oh1 + j] = w1[co, c, kh, kw]
    B1 = np.zeros((k, cin * h_in, c1 * oh1), np.float32)
    for kh in range(k):
        for kw in range(k):
            for j in range(oh1):
                for c in range(cin):
                    B1[kh, c * h_in + j + kw, np.arange(c1) * oh1 + j] = \
                        w1[:, c, kh, kw]

    # conv2 band matrices: B2[kh, c*ph1 + (j+kw), co*oh2 + j] = w2[co, c, kh, kw]
    B2 = np.zeros((k, c1 * ph1, c2 * oh2), np.float32)
    for kh in range(k):
        for kw in range(k):
            for j in range(oh2):
                for c in range(c1):
                    B2[kh, c * ph1 + j + kw, np.arange(c2) * oh2 + j] = \
                        w2[:, c, kh, kw]

    # 0/1 column-pooling selection matrices (index 0 = even col, 1 = odd col).
    def col_sel(nch, n_out):
        s = np.zeros((2, nch * 2 * n_out, nch * n_out), np.float32)
        for c in range(nch):
            for u in range(n_out):
                s[0, c * 2 * n_out + 2 * u,     c * n_out + u] = 1.0
                s[1, c * 2 * n_out + 2 * u + 1, c * n_out + u] = 1.0
        return s

    SelC1 = col_sel(c1, ph1)             # (2, 112, 56)
    SelC2 = col_sel(c2, ph2)             # (2, 80, 40)

    # Biases broadcast along the packed lane layout (co-major).
    c1b = np.repeat(np.asarray(params["conv1_b"], np.float32), oh1)[None]
    c2b = np.repeat(np.asarray(params["conv2_b"], np.float32), oh2)[None]

    # fc1 weight with PyTorch's (C, H, W) flatten folded in:
    #   Wfc1[i, c*ph2 + j, h] = fc1_w[h, c*ph2*ph2 + i*ph2 + j]
    fw1 = np.asarray(params["fc1_w"], np.float32).reshape(h1, c2, ph2, ph2)
    Wfc1 = np.transpose(fw1, (2, 1, 3, 0)).reshape(ph2, c2 * ph2, h1)

    bf16 = jnp.bfloat16
    packed = dict(
        B1=jnp.asarray(B1, bf16), c1b=jnp.asarray(c1b),
        SelC1=jnp.asarray(SelC1, bf16),
        B2=jnp.asarray(B2, bf16), c2b=jnp.asarray(c2b),
        SelC2=jnp.asarray(SelC2, bf16),
        Wfc1=jnp.asarray(Wfc1, bf16),
        f1b=jnp.asarray(np.asarray(params["fc1_b"], np.float32)[None]),
        Wfc2=jnp.asarray(np.asarray(params["fc2_w"], np.float32).T, bf16),
        f2b=jnp.asarray(np.asarray(params["fc2_b"], np.float32)[None]),
        Wfc3=jnp.asarray(np.asarray(params["fc3_w"], np.float32).T, bf16),
        f3b=jnp.asarray(np.asarray(params["fc3_b"], np.float32)[None]),
    )
    dims = (k, cin, oh1, oh2, ph2, ph1, c1, c2, h_in)
    return packed, dims


# ---------------------------------------------------------------------------
# Forward wrapper: one pallas_call for the whole network
# ---------------------------------------------------------------------------

def net_forward(x, packed, dims, b_tile=8):
    """x: (N, 3, 32, 32) float32 NCHW.  Returns (N, 10) logits."""
    k, cin, oh1, oh2, ph2, ph1, c1, c2, h_in = dims
    n = x.shape[0]
    n_cls = packed["f3b"].shape[-1]
    h1 = packed["f1b"].shape[-1]
    h2 = packed["f2b"].shape[-1]

    n_pad = pl.cdiv(n, b_tile) * b_tile
    xp = x.astype(jnp.float32)
    if n_pad != n:
        xp = jnp.pad(xp, ((0, n_pad - n), (0, 0), (0, 0), (0, 0)))
    # Layout plumbing only: (N,3,32,32) -> (N*32, 3*32), lane index = c*32 + w.
    xr = jnp.transpose(xp, (0, 2, 1, 3)).reshape(n_pad * h_in, cin * h_in)

    names = ("B1", "c1b", "SelC1", "B2", "c2b", "SelC2",
             "Wfc1", "f1b", "Wfc2", "f2b", "Wfc3", "f3b")
    consts = [packed[s] for s in names]

    def const_spec(a):
        nd = a.ndim
        return pl.BlockSpec(a.shape, lambda i, nd=nd: (0,) * nd)

    steps = n_pad // b_tile
    flops = steps * (
        2 * k * (b_tile * h_in) * (cin * h_in) * (c1 * oh1)
        + 2 * 2 * (b_tile * h_in // 2) * (c1 * oh1) * (c1 * ph1)
        + 2 * k * (b_tile * h_in // 2) * (c1 * ph1) * (c2 * oh2)
        + 2 * 2 * (b_tile * h_in // 4) * (c2 * oh2) * (c2 * ph2)
        + 2 * ph2 * b_tile * (c2 * ph2) * h1
        + 2 * b_tile * h1 * h2 + 2 * b_tile * h2 * n_cls)
    bytes_accessed = (xr.size * 4 + n_pad * n_cls * 4
                      + sum(int(np.prod(a.shape)) * a.dtype.itemsize
                            for a in consts))

    out = pl.pallas_call(
        functools.partial(_lenet_fused_kernel, k, ph2, b_tile),
        out_shape=jax.ShapeDtypeStruct((n_pad, n_cls), jnp.float32),
        grid=(steps,),
        in_specs=[pl.BlockSpec((b_tile * h_in, cin * h_in), lambda i: (i, 0))]
                 + [const_spec(a) for a in consts],
        out_specs=pl.BlockSpec((b_tile, n_cls), lambda i: (i, 0)),
        scratch_shapes=[pltpu.VMEM((b_tile * h_in, c1 * oh1), jnp.float32),
                        pltpu.VMEM((b_tile * h_in // 2, c2 * oh2), jnp.float32),
                        pltpu.VMEM((b_tile * h_in // 4, c2 * ph2), jnp.float32)],
        compiler_params=pltpu.CompilerParams(
            dimension_semantics=("parallel",)),
        cost_estimate=pl.CostEstimate(flops=flops, transcendentals=0,
                                      bytes_accessed=bytes_accessed),
    )(xr, *consts)
    return out[:n]


# ---------------------------------------------------------------------------
# Pure-JAX reference (for numerical check) and parameter init
# ---------------------------------------------------------------------------

def net_reference(x, params):
    hi = jax.lax.Precision.HIGHEST

    def conv(a, w, b):
        y = jax.lax.conv_general_dilated(
            a, w, window_strides=(1, 1), padding="VALID",
            dimension_numbers=("NCHW", "OIHW", "NCHW"), precision=hi)
        return y + b[None, :, None, None]

    def pool(a):
        return jax.lax.reduce_window(a, -jnp.inf, jax.lax.max,
                                     (1, 1, 2, 2), (1, 1, 2, 2), "VALID")

    a = pool(jax.nn.relu(conv(x, params["conv1_w"], params["conv1_b"])))
    a = pool(jax.nn.relu(conv(a, params["conv2_w"], params["conv2_b"])))
    a = a.reshape(a.shape[0], -1)
    a = jax.nn.relu(jnp.dot(a, params["fc1_w"].T, precision=hi) + params["fc1_b"])
    a = jax.nn.relu(jnp.dot(a, params["fc2_w"].T, precision=hi) + params["fc2_b"])
    return jnp.dot(a, params["fc3_w"].T, precision=hi) + params["fc3_b"]


def init_params(key, super_para):
    k, c1, c2, h1, h2 = super_para
    last_w = ((32 - k + 1) // 2 - k + 1) // 2
    ks = jax.random.split(key, 10)

    def u(rng, shape, fan_in):
        bound = 1.0 / jnp.sqrt(jnp.float32(fan_in))
        return jax.random.uniform(rng, shape, jnp.float32, -bound, bound)

    return {
        "conv1_w": u(ks[0], (c1, 3, k, k), 3 * k * k),
        "conv1_b": u(ks[1], (c1,), 3 * k * k),
        "conv2_w": u(ks[2], (c2, c1, k, k), c1 * k * k),
        "conv2_b": u(ks[3], (c2,), c1 * k * k),
        "fc1_w": u(ks[4], (h1, c2 * last_w * last_w), c2 * last_w * last_w),
        "fc1_b": u(ks[5], (h1,), c2 * last_w * last_w),
        "fc2_w": u(ks[6], (h2, h1), h1),
        "fc2_b": u(ks[7], (h2,), h1),
        "fc3_w": u(ks[8], (10, h2), h2),
        "fc3_b": u(ks[9], (10,), h2),
    }


# ---------------------------------------------------------------------------
# Main
# ---------------------------------------------------------------------------

if __name__ == "__main__":
    # super_para = [kernel_size, conv1_out, conv2_out, fc1_out, fc2_out]
    super_para = [5, 4, 8, 32, 16]

    key = jax.random.PRNGKey(0)
    pkey, xkey = jax.random.split(key)
    params = init_params(pkey, super_para)
    packed, dims = pack_params(params, super_para)

    # CIFAR-like NCHW input.  batch=10 exercises both zero-padding (10 -> 16)
    # and a multi-step "parallel" grid (2 steps of B_TILE=8 images).
    batch = 10
    x = jax.random.normal(xkey, (batch, 3, 32, 32), dtype=jnp.float32)

    fwd = jax.jit(lambda xx: net_forward(xx, packed, dims, b_tile=8))
    logits = fwd(x)
    jax.block_until_ready(logits)

    assert logits.shape == (batch, 10), logits.shape
    assert logits.dtype == jnp.float32

    # Numerical check vs a pure-JAX f32 reference (kernel uses bf16 MXU
    # operands with f32 accumulation -> modest tolerance).
    ref = net_reference(x, params)
    max_err = float(jnp.max(jnp.abs(logits - ref)))
    assert jnp.allclose(logits, ref, rtol=5e-2, atol=5e-2), f"max|err|={max_err}"
    print("KERNEL_OK")
</pallas_src>

<mosaic_0001>
module attributes {stable_mosaic.version = 11 : i64} {
  func.func @_lenet_fused_kernel(%arg0: i32, %arg1: memref<256x96xf32, #tpu.memory_space<vmem>>, %arg2: memref<5x96x112xbf16, #tpu.memory_space<vmem>>, %arg3: memref<1x112xf32, #tpu.memory_space<vmem>>, %arg4: memref<2x112x56xbf16, #tpu.memory_space<vmem>>, %arg5: memref<5x56x80xbf16, #tpu.memory_space<vmem>>, %arg6: memref<1x80xf32, #tpu.memory_space<vmem>>, %arg7: memref<2x80x40xbf16, #tpu.memory_space<vmem>>, %arg8: memref<5x40x32xbf16, #tpu.memory_space<vmem>>, %arg9: memref<1x32xf32, #tpu.memory_space<vmem>>, %arg10: memref<32x16xbf16, #tpu.memory_space<vmem>>, %arg11: memref<1x16xf32, #tpu.memory_space<vmem>>, %arg12: memref<16x10xbf16, #tpu.memory_space<vmem>>, %arg13: memref<1x10xf32, #tpu.memory_space<vmem>>, %arg14: memref<8x10xf32, #tpu.memory_space<vmem>>, %arg15: memref<256x112xf32, #tpu.memory_space<vmem>>, %arg16: memref<128x80xf32, #tpu.memory_space<vmem>>, %arg17: memref<64x40xf32, #tpu.memory_space<vmem>>) attributes {dimension_semantics = [#tpu.dimension_semantics<parallel>], iteration_bounds = array<i64: 2>, scalar_prefetch = 0 : i64, scratch_operands = 3 : i64, tpu.core_type = #tpu.core_type<tc>, window_params = [{transform_indices = @transform_0, window_bounds = array<i64: 256, 96>}, {pipeline_mode = #tpu.pipeline_mode<synchronous>, transform_indices = @transform_1, window_bounds = array<i64: 5, 96, 112>}, {pipeline_mode = #tpu.pipeline_mode<synchronous>, transform_indices = @transform_2, window_bounds = array<i64: 1, 112>}, {pipeline_mode = #tpu.pipeline_mode<synchronous>, transform_indices = @transform_3, window_bounds = array<i64: 2, 112, 56>}, {pipeline_mode = #tpu.pipeline_mode<synchronous>, transform_indices = @transform_4, window_bounds = array<i64: 5, 56, 80>}, {pipeline_mode = #tpu.pipeline_mode<synchronous>, transform_indices = @transform_5, window_bounds = array<i64: 1, 80>}, {pipeline_mode = #tpu.pipeline_mode<synchronous>, transform_indices = @transform_6, window_bounds = array<i64: 2, 80, 40>}, {pipeline_mode = #tpu.pipeline_mode<synchronous>, transform_indices = @transform_7, window_bounds = array<i64: 5, 40, 32>}, {pipeline_mode = #tpu.pipeline_mode<synchronous>, transform_indices = @transform_8, window_bounds = array<i64: 1, 32>}, {pipeline_mode = #tpu.pipeline_mode<synchronous>, transform_indices = @transform_9, window_bounds = array<i64: 32, 16>}, {pipeline_mode = #tpu.pipeline_mode<synchronous>, transform_indices = @transform_10, window_bounds = array<i64: 1, 16>}, {pipeline_mode = #tpu.pipeline_mode<synchronous>, transform_indices = @transform_11, window_bounds = array<i64: 16, 10>}, {pipeline_mode = #tpu.pipeline_mode<synchronous>, transform_indices = @transform_12, window_bounds = array<i64: 1, 10>}, {transform_indices = @transform_13, window_bounds = array<i64: 8, 10>}]} {
    %c0 = arith.constant 0 : index
    %c0_0 = arith.constant 0 : index
    %0 = vector.load %arg1[%c0, %c0_0] : memref<256x96xf32, #tpu.memory_space<vmem>>, vector<256x96xf32>
    %cst = arith.constant 0.000000e+00 : f32
    %1 = vector.broadcast %cst : f32 to vector<256x112xf32>
    %2 = arith.truncf %0 : vector<256x96xf32> to vector<256x96xbf16>
    %c0_1 = arith.constant 0 : index
    %c0_2 = arith.constant 0 : index
    %c0_3 = arith.constant 0 : index
    %3 = vector.load %arg2[%c0_1, %c0_2, %c0_3] : memref<5x96x112xbf16, #tpu.memory_space<vmem>>, vector<1x96x112xbf16>
    %4 = vector.shape_cast %3 : vector<1x96x112xbf16> to vector<96x112xbf16>
    %cst_4 = arith.constant dense<0.000000e+00> : vector<256x112xf32>
    %5 = tpu.matmul %2, %4, %cst_4 {dimension_numbers = #tpu.dot_dimension_numbers<[1], [0], [0], [1], [0, 0, 1, 1], [], []>} : vector<256x96xbf16>, vector<96x112xbf16>, vector<256x112xf32> -> vector<256x112xf32>
    %6 = arith.addf %1, %5 : vector<256x112xf32>
    %c255_i32 = arith.constant 255 : i32
    %7 = tpu.dynamic_rotate %0 by %c255_i32 dim 0 : vector<256x96xf32>, i32 -> vector<256x96xf32>
    %8 = arith.truncf %7 : vector<256x96xf32> to vector<256x96xbf16>
    %c1 = arith.constant 1 : index
    %c0_5 = arith.constant 0 : index
    %c0_6 = arith.constant 0 : index
    %9 = vector.load %arg2[%c1, %c0_5, %c0_6] : memref<5x96x112xbf16, #tpu.memory_space<vmem>>, vector<1x96x112xbf16>
    %10 = vector.shape_cast %9 : vector<1x96x112xbf16> to vector<96x112xbf16>
    %cst_7 = arith.constant dense<0.000000e+00> : vector<256x112xf32>
    %11 = tpu.matmul %8, %10, %cst_7 {dimension_numbers = #tpu.dot_dimension_numbers<[1], [0], [0], [1], [0, 0, 1, 1], [], []>} : vector<256x96xbf16>, vector<96x112xbf16>, vector<256x112xf32> -> vector<256x112xf32>
    %12 = arith.addf %6, %11 : vector<256x112xf32>
    %c254_i32 = arith.constant 254 : i32
    %13 = tpu.dynamic_rotate %0 by %c254_i32 dim 0 : vector<256x96xf32>, i32 -> vector<256x96xf32>
    %14 = arith.truncf %13 : vector<256x96xf32> to vector<256x96xbf16>
    %c2 = arith.constant 2 : index
    %c0_8 = arith.constant 0 : index
    %c0_9 = arith.constant 0 : index
    %15 = vector.load %arg2[%c2, %c0_8, %c0_9] : memref<5x96x112xbf16, #tpu.memory_space<vmem>>, vector<1x96x112xbf16>
    %16 = vector.shape_cast %15 : vector<1x96x112xbf16> to vector<96x112xbf16>
    %cst_10 = arith.constant dense<0.000000e+00> : vector<256x112xf32>
    %17 = tpu.matmul %14, %16, %cst_10 {dimension_numbers = #tpu.dot_dimension_numbers<[1], [0], [0], [1], [0, 0, 1, 1], [], []>} : vector<256x96xbf16>, vector<96x112xbf16>, vector<256x112xf32> -> vector<256x112xf32>
    %18 = arith.addf %12, %17 : vector<256x112xf32>
    %c253_i32 = arith.constant 253 : i32
    %19 = tpu.dynamic_rotate %0 by %c253_i32 dim 0 : vector<256x96xf32>, i32 -> vector<256x96xf32>
    %20 = arith.truncf %19 : vector<256x96xf32> to vector<256x96xbf16>
    %c3 = arith.constant 3 : index
    %c0_11 = arith.constant 0 : index
    %c0_12 = arith.constant 0 : index
    %21 = vector.load %arg2[%c3, %c0_11, %c0_12] : memref<5x96x112xbf16, #tpu.memory_space<vmem>>, vector<1x96x112xbf16>
    %22 = vector.shape_cast %21 : vector<1x96x112xbf16> to vector<96x112xbf16>
    %cst_13 = arith.constant dense<0.000000e+00> : vector<256x112xf32>
    %23 = tpu.matmul %20, %22, %cst_13 {dimension_numbers = #tpu.dot_dimension_numbers<[1], [0], [0], [1], [0, 0, 1, 1], [], []>} : vector<256x96xbf16>, vector<96x112xbf16>, vector<256x112xf32> -> vector<256x112xf32>
    %24 = arith.addf %18, %23 : vector<256x112xf32>
    %c252_i32 = arith.constant 252 : i32
    %25 = tpu.dynamic_rotate %0 by %c252_i32 dim 0 : vector<256x96xf32>, i32 -> vector<256x96xf32>
    %26 = arith.truncf %25 : vector<256x96xf32> to vector<256x96xbf16>
    %c4 = arith.constant 4 : index
    %c0_14 = arith.constant 0 : index
    %c0_15 = arith.constant 0 : index
    %27 = vector.load %arg2[%c4, %c0_14, %c0_15] : memref<5x96x112xbf16, #tpu.memory_space<vmem>>, vector<1x96x112xbf16>
    %28 = vector.shape_cast %27 : vector<1x96x112xbf16> to vector<96x112xbf16>
    %cst_16 = arith.constant dense<0.000000e+00> : vector<256x112xf32>
    %29 = tpu.matmul %26, %28, %cst_16 {dimension_numbers = #tpu.dot_dimension_numbers<[1], [0], [0], [1], [0, 0, 1, 1], [], []>} : vector<256x96xbf16>, vector<96x112xbf16>, vector<256x112xf32> -> vector<256x112xf32>
    %30 = arith.addf %24, %29 : vector<256x112xf32>
    %c0_17 = arith.constant 0 : index
    %c0_18 = arith.constant 0 : index
    %31 = vector.load %arg3[%c0_17, %c0_18] : memref<1x112xf32, #tpu.memory_space<vmem>>, vector<1x112xf32>
    %32 = vector.broadcast %31 : vector<1x112xf32> to vector<256x112xf32>
    %33 = arith.addf %30, %32 : vector<256x112xf32>
    %cst_19 = arith.constant 0.000000e+00 : f32
    %34 = vector.broadcast %cst_19 : f32 to vector<256x112xf32>
    %35 = arith.maximumf %33, %34 : vector<256x112xf32>
    %c0_20 = arith.constant 0 : index
    %c0_21 = arith.constant 0 : index
    %36 = vector.load %arg15[%c0_20, %c0_21] : memref<256x112xf32, #tpu.memory_space<vmem>>, vector<256x112xf32>
    tpu.vector_store %arg15[%c0_20, %c0_21], %35 {strides = array<i32>} : memref<256x112xf32, #tpu.memory_space<vmem>>, vector<256x112xf32>,
    %c0_22 = arith.constant 0 : index
    %c0_23 = arith.constant 0 : index
    %37 = tpu.strided_load %arg15[%c0_22, %c0_23] {strides = array<i32: 2, 1>} : memref<256x112xf32, #tpu.memory_space<vmem>>, vector<128x112xf32>
    %c1_24 = arith.constant 1 : index
    %c0_25 = arith.constant 0 : index
    %38 = tpu.strided_load %arg15[%c1_24, %c0_25] {strides = array<i32: 2, 1>} : memref<256x112xf32, #tpu.memory_space<vmem>>, vector<128x112xf32>
    %39 = arith.maximumf %37, %38 : vector<128x112xf32>
    %40 = arith.truncf %39 : vector<128x112xf32> to vector<128x112xbf16>
    %c0_26 = arith.constant 0 : index
    %c0_27 = arith.constant 0 : index
    %c0_28 = arith.constant 0 : index
    %41 = vector.load %arg4[%c0_26, %c0_27, %c0_28] : memref<2x112x56xbf16, #tpu.memory_space<vmem>>, vector<1x112x56xbf16>
    %42 = vector.shape_cast %41 : vector<1x112x56xbf16> to vector<112x56xbf16>
    %cst_29 = arith.constant dense<0.000000e+00> : vector<128x56xf32>
    %43 = tpu.matmul %40, %42, %cst_29 {dimension_numbers = #tpu.dot_dimension_numbers<[1], [0], [0], [1], [0, 0, 1, 1], [], []>} : vector<128x112xbf16>, vector<112x56xbf16>, vector<128x56xf32> -> vector<128x56xf32>
    %c1_30 = arith.constant 1 : index
    %c0_31 = arith.constant 0 : index
    %c0_32 = arith.constant 0 : index
    %44 = vector.load %arg4[%c1_30, %c0_31, %c0_32] : memref<2x112x56xbf16, #tpu.memory_space<vmem>>, vector<1x112x56xbf16>
    %45 = vector.shape_cast %44 : vector<1x112x56xbf16> to vector<112x56xbf16>
    %cst_33 = arith.constant dense<0.000000e+00> : vector<128x56xf32>
    %46 = tpu.matmul %40, %45, %cst_33 {dimension_numbers = #tpu.dot_dimension_numbers<[1], [0], [0], [1], [0, 0, 1, 1], [], []>} : vector<128x112xbf16>, vector<112x56xbf16>, vector<128x56xf32> -> vector<128x56xf32>
    %47 = arith.maximumf %43, %46 : vector<128x56xf32>
    %cst_34 = arith.constant 0.000000e+00 : f32
    %48 = vector.broadcast %cst_34 : f32 to vector<128x80xf32>
    %49 = arith.truncf %47 : vector<128x56xf32> to vector<128x56xbf16>
    %c0_35 = arith.constant 0 : index
    %c0_36 = arith.constant 0 : index
    %c0_37 = arith.constant 0 : index
    %50 = vector.load %arg5[%c0_35, %c0_36, %c0_37] : memref<5x56x80xbf16, #tpu.memory_space<vmem>>, vector<1x56x80xbf16>
    %51 = vector.shape_cast %50 : vector<1x56x80xbf16> to vector<56x80xbf16>
    %cst_38 = arith.constant dense<0.000000e+00> : vector<128x80xf32>
    %52 = tpu.matmul %49, %51, %cst_38 {dimension_numbers = #tpu.dot_dimension_numbers<[1], [0], [0], [1], [0, 0, 1, 1], [], []>} : vector<128x56xbf16>, vector<56x80xbf16>, vector<128x80xf32> -> vector<128x80xf32>
    %53 = arith.addf %48, %52 : vector<128x80xf32>
    %c127_i32 = arith.constant 127 : i32
    %54 = tpu.dynamic_rotate %47 by %c127_i32 dim 0 : vector<128x56xf32>, i32 -> vector<128x56xf32>
    %55 = arith.truncf %54 : vector<128x56xf32> to vector<128x56xbf16>
    %c1_39 = arith.constant 1 : index
    %c0_40 = arith.constant 0 : index
    %c0_41 = arith.constant 0 : index
    %56 = vector.load %arg5[%c1_39, %c0_40, %c0_41] : memref<5x56x80xbf16, #tpu.memory_space<vmem>>, vector<1x56x80xbf16>
    %57 = vector.shape_cast %56 : vector<1x56x80xbf16> to vector<56x80xbf16>
    %cst_42 = arith.constant dense<0.000000e+00> : vector<128x80xf32>
    %58 = tpu.matmul %55, %57, %cst_42 {dimension_numbers = #tpu.dot_dimension_numbers<[1], [0], [0], [1], [0, 0, 1, 1], [], []>} : vector<128x56xbf16>, vector<56x80xbf16>, vector<128x80xf32> -> vector<128x80xf32>
    %59 = arith.addf %53, %58 : vector<128x80xf32>
    %c126_i32 = arith.constant 126 : i32
    %60 = tpu.dynamic_rotate %47 by %c126_i32 dim 0 : vector<128x56xf32>, i32 -> vector<128x56xf32>
    %61 = arith.truncf %60 : vector<128x56xf32> to vector<128x56xbf16>
    %c2_43 = arith.constant 2 : index
    %c0_44 = arith.constant 0 : index
    %c0_45 = arith.constant 0 : index
    %62 = vector.load %arg5[%c2_43, %c0_44, %c0_45] : memref<5x56x80xbf16, #tpu.memory_space<vmem>>, vector<1x56x80xbf16>
    %63 = vector.shape_cast %62 : vector<1x56x80xbf16> to vector<56x80xbf16>
    %cst_46 = arith.constant dense<0.000000e+00> : vector<128x80xf32>
    %64 = tpu.matmul %61, %63, %cst_46 {dimension_numbers = #tpu.dot_dimension_numbers<[1], [0], [0], [1], [0, 0, 1, 1], [], []>} : vector<128x56xbf16>, vector<56x80xbf16>, vector<128x80xf32> -> vector<128x80xf32>
    %65 = arith.addf %59, %64 : vector<128x80xf32>
    %c125_i32 = arith.constant 125 : i32
    %66 = tpu.dynamic_rotate %47 by %c125_i32 dim 0 : vector<128x56xf32>, i32 -> vector<128x56xf32>
    %67 = arith.truncf %66 : vector<128x56xf32> to vector<128x56xbf16>
    %c3_47 = arith.constant 3 : index
    %c0_48 = arith.constant 0 : index
    %c0_49 = arith.constant 0 : index
    %68 = vector.load %arg5[%c3_47, %c0_48, %c0_49] : memref<5x56x80xbf16, #tpu.memory_space<vmem>>, vector<1x56x80xbf16>
    %69 = vector.shape_cast %68 : vector<1x56x80xbf16> to vector<56x80xbf16>
    %cst_50 = arith.constant dense<0.000000e+00> : vector<128x80xf32>
    %70 = tpu.matmul %67, %69, %cst_50 {dimension_numbers = #tpu.dot_dimension_numbers<[1], [0], [0], [1], [0, 0, 1, 1], [], []>} : vector<128x56xbf16>, vector<56x80xbf16>, vector<128x80xf32> -> vector<128x80xf32>
    %71 = arith.addf %65, %70 : vector<128x80xf32>
    %c124_i32 = arith.constant 124 : i32
    %72 = tpu.dynamic_rotate %47 by %c124_i32 dim 0 : vector<128x56xf32>, i32 -> vector<128x56xf32>
    %73 = arith.truncf %72 : vector<128x56xf32> to vector<128x56xbf16>
    %c4_51 = arith.constant 4 : index
    %c0_52 = arith.constant 0 : index
    %c0_53 = arith.constant 0 : index
    %74 = vector.load %arg5[%c4_51, %c0_52, %c0_53] : memref<5x56x80xbf16, #tpu.memory_space<vmem>>, vector<1x56x80xbf16>
    %75 = vector.shape_cast %74 : vector<1x56x80xbf16> to vector<56x80xbf16>
    %cst_54 = arith.constant dense<0.000000e+00> : vector<128x80xf32>
    %76 = tpu.matmul %73, %75, %cst_54 {dimension_numbers = #tpu.dot_dimension_numbers<[1], [0], [0], [1], [0, 0, 1, 1], [], []>} : vector<128x56xbf16>, vector<56x80xbf16>, vector<128x80xf32> -> vector<128x80xf32>
    %77 = arith.addf %71, %76 : vector<128x80xf32>
    %c0_55 = arith.constant 0 : index
    %c0_56 = arith.constant 0 : index
    %78 = vector.load %arg6[%c0_55, %c0_56] : memref<1x80xf32, #tpu.memory_space<vmem>>, vector<1x80xf32>
    %79 = vector.broadcast %78 : vector<1x80xf32> to vector<128x80xf32>
    %80 = arith.addf %77, %79 : vector<128x80xf32>
    %cst_57 = arith.constant 0.000000e+00 : f32
    %81 = vector.broadcast %cst_57 : f32 to vector<128x80xf32>
    %82 = arith.maximumf %80, %81 : vector<128x80xf32>
    %c0_58 = arith.constant 0 : index
    %c0_59 = arith.constant 0 : index
    %83 = vector.load %arg16[%c0_58, %c0_59] : memref<128x80xf32, #tpu.memory_space<vmem>>, vector<128x80xf32>
    tpu.vector_store %arg16[%c0_58, %c0_59], %82 {strides = array<i32>} : memref<128x80xf32, #tpu.memory_space<vmem>>, vector<128x80xf32>,
    %c0_60 = arith.constant 0 : index
    %c0_61 = arith.constant 0 : index
    %84 = tpu.strided_load %arg16[%c0_60, %c0_61] {strides = array<i32: 2, 1>} : memref<128x80xf32, #tpu.memory_space<vmem>>, vector<64x80xf32>
    %c1_62 = arith.constant 1 : index
    %c0_63 = arith.constant 0 : index
    %85 = tpu.strided_load %arg16[%c1_62, %c0_63] {strides = array<i32: 2, 1>} : memref<128x80xf32, #tpu.memory_space<vmem>>, vector<64x80xf32>
    %86 = arith.maximumf %84, %85 : vector<64x80xf32>
    %87 = arith.truncf %86 : vector<64x80xf32> to vector<64x80xbf16>
    %c0_64 = arith.constant 0 : index
    %c0_65 = arith.constant 0 : index
    %c0_66 = arith.constant 0 : index
    %88 = vector.load %arg7[%c0_64, %c0_65, %c0_66] : memref<2x80x40xbf16, #tpu.memory_space<vmem>>, vector<1x80x40xbf16>
    %89 = vector.shape_cast %88 : vector<1x80x40xbf16> to vector<80x40xbf16>
    %cst_67 = arith.constant dense<0.000000e+00> : vector<64x40xf32>
    %90 = tpu.matmul %87, %89, %cst_67 {dimension_numbers = #tpu.dot_dimension_numbers<[1], [0], [0], [1], [0, 0, 1, 1], [], []>} : vector<64x80xbf16>, vector<80x40xbf16>, vector<64x40xf32> -> vector<64x40xf32>
    %c1_68 = arith.constant 1 : index
    %c0_69 = arith.constant 0 : index
    %c0_70 = arith.constant 0 : index
    %91 = vector.load %arg7[%c1_68, %c0_69, %c0_70] : memref<2x80x40xbf16, #tpu.memory_space<vmem>>, vector<1x80x40xbf16>
    %92 = vector.shape_cast %91 : vector<1x80x40xbf16> to vector<80x40xbf16>
    %cst_71 = arith.constant dense<0.000000e+00> : vector<64x40xf32>
    %93 = tpu.matmul %87, %92, %cst_71 {dimension_numbers = #tpu.dot_dimension_numbers<[1], [0], [0], [1], [0, 0, 1, 1], [], []>} : vector<64x80xbf16>, vector<80x40xbf16>, vector<64x40xf32> -> vector<64x40xf32>
    %94 = arith.maximumf %90, %93 : vector<64x40xf32>
    %c0_72 = arith.constant 0 : index
    %c0_73 = arith.constant 0 : index
    %95 = vector.load %arg17[%c0_72, %c0_73] : memref<64x40xf32, #tpu.memory_space<vmem>>, vector<64x40xf32>
    tpu.vector_store %arg17[%c0_72, %c0_73], %94 {strides = array<i32>} : memref<64x40xf32, #tpu.memory_space<vmem>>, vector<64x40xf32>,
    %cst_74 = arith.constant 0.000000e+00 : f32
    %96 = vector.broadcast %cst_74 : f32 to vector<8x32xf32>
    %c0_75 = arith.constant 0 : index
    %c0_76 = arith.constant 0 : index
    %97 = tpu.strided_load %arg17[%c0_75, %c0_76] {strides = array<i32: 8, 1>} : memref<64x40xf32, #tpu.memory_space<vmem>>, vector<8x40xf32>
    %98 = arith.truncf %97 : vector<8x40xf32> to vector<8x40xbf16>
    %c0_77 = arith.constant 0 : index
    %c0_78 = arith.constant 0 : index
    %c0_79 = arith.constant 0 : index
    %99 = vector.load %arg8[%c0_77, %c0_78, %c0_79] : memref<5x40x32xbf16, #tpu.memory_space<vmem>>, vector<1x40x32xbf16>
    %100 = vector.shape_cast %99 : vector<1x40x32xbf16> to vector<40x32xbf16>
    %cst_80 = arith.constant dense<0.000000e+00> : vector<8x32xf32>
    %101 = tpu.matmul %98, %100, %cst_80 {dimension_numbers = #tpu.dot_dimension_numbers<[1], [0], [0], [1], [0, 0, 1, 1], [], []>} : vector<8x40xbf16>, vector<40x32xbf16>, vector<8x32xf32> -> vector<8x32xf32>
    %102 = arith.addf %96, %101 : vector<8x32xf32>
    %c1_81 = arith.constant 1 : index
    %c0_82 = arith.constant 0 : index
    %103 = tpu.strided_load %arg17[%c1_81, %c0_82] {strides = array<i32: 8, 1>} : memref<64x40xf32, #tpu.memory_space<vmem>>, vector<8x40xf32>
    %104 = arith.truncf %103 : vector<8x40xf32> to vector<8x40xbf16>
    %c1_83 = arith.constant 1 : index
    %c0_84 = arith.constant 0 : index
    %c0_85 = arith.constant 0 : index
    %105 = vector.load %arg8[%c1_83, %c0_84, %c0_85] : memref<5x40x32xbf16, #tpu.memory_space<vmem>>, vector<1x40x32xbf16>
    %106 = vector.shape_cast %105 : vector<1x40x32xbf16> to vector<40x32xbf16>
    %cst_86 = arith.constant dense<0.000000e+00> : vector<8x32xf32>
    %107 = tpu.matmul %104, %106, %cst_86 {dimension_numbers = #tpu.dot_dimension_numbers<[1], [0], [0], [1], [0, 0, 1, 1], [], []>} : vector<8x40xbf16>, vector<40x32xbf16>, vector<8x32xf32> -> vector<8x32xf32>
    %108 = arith.addf %102, %107 : vector<8x32xf32>
    %c2_87 = arith.constant 2 : index
    %c0_88 = arith.constant 0 : index
    %109 = tpu.strided_load %arg17[%c2_87, %c0_88] {strides = array<i32: 8, 1>} : memref<64x40xf32, #tpu.memory_space<vmem>>, vector<8x40xf32>
    %110 = arith.truncf %109 : vector<8x40xf32> to vector<8x40xbf16>
    %c2_89 = arith.constant 2 : index
    %c0_90 = arith.constant 0 : index
    %c0_91 = arith.constant 0 : index
    %111 = vector.load %arg8[%c2_89, %c0_90, %c0_91] : memref<5x40x32xbf16, #tpu.memory_space<vmem>>, vector<1x40x32xbf16>
    %112 = vector.shape_cast %111 : vector<1x40x32xbf16> to vector<40x32xbf16>
    %cst_92 = arith.constant dense<0.000000e+00> : vector<8x32xf32>
    %113 = tpu.matmul %110, %112, %cst_92 {dimension_numbers = #tpu.dot_dimension_numbers<[1], [0], [0], [1], [0, 0, 1, 1], [], []>} : vector<8x40xbf16>, vector<40x32xbf16>, vector<8x32xf32> -> vector<8x32xf32>
    %114 = arith.addf %108, %113 : vector<8x32xf32>
    %c3_93 = arith.constant 3 : index
    %c0_94 = arith.constant 0 : index
    %115 = tpu.strided_load %arg17[%c3_93, %c0_94] {strides = array<i32: 8, 1>} : memref<64x40xf32, #tpu.memory_space<vmem>>, vector<8x40xf32>
    %116 = arith.truncf %115 : vector<8x40xf32> to vector<8x40xbf16>
    %c3_95 = arith.constant 3 : index
    %c0_96 = arith.constant 0 : index
    %c0_97 = arith.constant 0 : index
    %117 = vector.load %arg8[%c3_95, %c0_96, %c0_97] : memref<5x40x32xbf16, #tpu.memory_space<vmem>>, vector<1x40x32xbf16>
    %118 = vector.shape_cast %117 : vector<1x40x32xbf16> to vector<40x32xbf16>
    %cst_98 = arith.constant dense<0.000000e+00> : vector<8x32xf32>
    %119 = tpu.matmul %116, %118, %cst_98 {dimension_numbers = #tpu.dot_dimension_numbers<[1], [0], [0], [1], [0, 0, 1, 1], [], []>} : vector<8x40xbf16>, vector<40x32xbf16>, vector<8x32xf32> -> vector<8x32xf32>
    %120 = arith.addf %114, %119 : vector<8x32xf32>
    %c4_99 = arith.constant 4 : index
    %c0_100 = arith.constant 0 : index
    %121 = tpu.strided_load %arg17[%c4_99, %c0_100] {strides = array<i32: 8, 1>} : memref<64x40xf32, #tpu.memory_space<vmem>>, vector<8x40xf32>
    %122 = arith.truncf %121 : vector<8x40xf32> to vector<8x40xbf16>
    %c4_101 = arith.constant 4 : index
    %c0_102 = arith.constant 0 : index
    %c0_103 = arith.constant 0 : index
    %123 = vector.load %arg8[%c4_101, %c0_102, %c0_103] : memref<5x40x32xbf16, #tpu.memory_space<vmem>>, vector<1x40x32xbf16>
    %124 = vector.shape_cast %123 : vector<1x40x32xbf16> to vector<40x32xbf16>
    %cst_104 = arith.constant dense<0.000000e+00> : vector<8x32xf32>
    %125 = tpu.matmul %122, %124, %cst_104 {dimension_numbers = #tpu.dot_dimension_numbers<[1], [0], [0], [1], [0, 0, 1, 1], [], []>} : vector<8x40xbf16>, vector<40x32xbf16>, vector<8x32xf32> -> vector<8x32xf32>
    %126 = arith.addf %120, %125 : vector<8x32xf32>
    %c0_105 = arith.constant 0 : index
    %c0_106 = arith.constant 0 : index
    %127 = vector.load %arg9[%c0_105, %c0_106] : memref<1x32xf32, #tpu.memory_space<vmem>>, vector<1x32xf32>
    %128 = vector.broadcast %127 : vector<1x32xf32> to vector<8x32xf32>
    %129 = arith.addf %126, %128 : vector<8x32xf32>
    %cst_107 = arith.constant 0.000000e+00 : f32
    %130 = vector.broadcast %cst_107 : f32 to vector<8x32xf32>
    %131 = arith.maximumf %129, %130 : vector<8x32xf32>
    %132 = arith.truncf %131 : vector<8x32xf32> to vector<8x32xbf16>
    %c0_108 = arith.constant 0 : index
    %c0_109 = arith.constant 0 : index
    %133 = vector.load %arg10[%c0_108, %c0_109] : memref<32x16xbf16, #tpu.memory_space<vmem>>, vector<32x16xbf16>
    %cst_110 = arith.constant dense<0.000000e+00> : vector<8x16xf32>
    %134 = tpu.matmul %132, %133, %cst_110 {dimension_numbers = #tpu.dot_dimension_numbers<[1], [0], [0], [1], [0, 0, 1, 1], [], []>} : vector<8x32xbf16>, vector<32x16xbf16>, vector<8x16xf32> -> vector<8x16xf32>
    %c0_111 = arith.constant 0 : index
    %c0_112 = arith.constant 0 : index
    %135 = vector.load %arg11[%c0_111, %c0_112] : memref<1x16xf32, #tpu.memory_space<vmem>>, vector<1x16xf32>
    %136 = vector.broadcast %135 : vector<1x16xf32> to vector<8x16xf32>
    %137 = arith.addf %134, %136 : vector<8x16xf32>
    %cst_113 = arith.constant 0.000000e+00 : f32
    %138 = vector.broadcast %cst_113 : f32 to vector<8x16xf32>
    %139 = arith.maximumf %137, %138 : vector<8x16xf32>
    %140 = arith.truncf %139 : vector<8x16xf32> to vector<8x16xbf16>
    %c0_114 = arith.constant 0 : index
    %c0_115 = arith.constant 0 : index
    %141 = vector.load %arg12[%c0_114, %c0_115] : memref<16x10xbf16, #tpu.memory_space<vmem>>, vector<16x10xbf16>
    %cst_116 = arith.constant dense<0.000000e+00> : vector<8x10xf32>
    %142 = tpu.matmul %140, %141, %cst_116 {dimension_numbers = #tpu.dot_dimension_numbers<[1], [0], [0], [1], [0, 0, 1, 1], [], []>} : vector<8x16xbf16>, vector<16x10xbf16>, vector<8x10xf32> -> vector<8x10xf32>
    %c0_117 = arith.constant 0 : index
    %c0_118 = arith.constant 0 : index
    %143 = vector.load %arg13[%c0_117, %c0_118] : memref<1x10xf32, #tpu.memory_space<vmem>>, vector<1x10xf32>
    %144 = vector.broadcast %143 : vector<1x10xf32> to vector<8x10xf32>
    %145 = arith.addf %142, %144 : vector<8x10xf32>
    %c0_119 = arith.constant 0 : index
    %c0_120 = arith.constant 0 : index
    %146 = vector.load %arg14[%c0_119, %c0_120] : memref<8x10xf32, #tpu.memory_space<vmem>>, vector<8x10xf32>
    tpu.vector_store %arg14[%c0_119, %c0_120], %145 {strides = array<i32>} : memref<8x10xf32, #tpu.memory_space<vmem>>, vector<8x10xf32>,
    return
  }
  func.func @transform_0(%arg0: i32) -> (i32, i32) {
    %c0_i32 = arith.constant 0 : i32
    %c0_i32_0 = arith.constant 0 : i32
    return %arg0, %c0_i32 : i32, i32
  }
  func.func @transform_1(%arg0: i32) -> (i32, i32, i32) {
    %c0_i32 = arith.constant 0 : i32
    %c0_i32_0 = arith.constant 0 : i32
    %c0_i32_1 = arith.constant 0 : i32
    %c0_i32_2 = arith.constant 0 : i32
    return %c0_i32, %c0_i32_0, %c0_i32_1 : i32, i32, i32
  }
  func.func @transform_2(%arg0: i32) -> (i32, i32) {
    %c0_i32 = arith.constant 0 : i32
    %c0_i32_0 = arith.constant 0 : i32
    %c0_i32_1 = arith.constant 0 : i32
    return %c0_i32, %c0_i32_0 : i32, i32
  }
  func.func @transform_3(%arg0: i32) -> (i32, i32, i32) {
    %c0_i32 = arith.constant 0 : i32
    %c0_i32_0 = arith.constant 0 : i32
    %c0_i32_1 = arith.constant 0 : i32
    %c0_i32_2 = arith.constant 0 : i32
    return %c0_i32, %c0_i32_0, %c0_i32_1 : i32, i32, i32
  }
  func.func @transform_4(%arg0: i32) -> (i32, i32, i32) {
    %c0_i32 = arith.constant 0 : i32
    %c0_i32_0 = arith.constant 0 : i32
    %c0_i32_1 = arith.constant 0 : i32
    %c0_i32_2 = arith.constant 0 : i32
    return %c0_i32, %c0_i32_0, %c0_i32_1 : i32, i32, i32
  }
  func.func @transform_5(%arg0: i32) -> (i32, i32) {
    %c0_i32 = arith.constant 0 : i32
    %c0_i32_0 = arith.constant 0 : i32
    %c0_i32_1 = arith.constant 0 : i32
    return %c0_i32, %c0_i32_0 : i32, i32
  }
  func.func @transform_6(%arg0: i32) -> (i32, i32, i32) {
    %c0_i32 = arith.constant 0 : i32
    %c0_i32_0 = arith.constant 0 : i32
    %c0_i32_1 = arith.constant 0 : i32
    %c0_i32_2 = arith.constant 0 : i32
    return %c0_i32, %c0_i32_0, %c0_i32_1 : i32, i32, i32
  }
  func.func @transform_7(%arg0: i32) -> (i32, i32, i32) {
    %c0_i32 = arith.constant 0 : i32
    %c0_i32_0 = arith.constant 0 : i32
    %c0_i32_1 = arith.constant 0 : i32
    %c0_i32_2 = arith.constant 0 : i32
    return %c0_i32, %c0_i32_0, %c0_i32_1 : i32, i32, i32
  }
  func.func @transform_8(%arg0: i32) -> (i32, i32) {
    %c0_i32 = arith.constant 0 : i32
    %c0_i32_0 = arith.constant 0 : i32
    %c0_i32_1 = arith.constant 0 : i32
    return %c0_i32, %c0_i32_0 : i32, i32
  }
  func.func @transform_9(%arg0: i32) -> (i32, i32) {
    %c0_i32 = arith.constant 0 : i32
    %c0_i32_0 = arith.constant 0 : i32
    %c0_i32_1 = arith.constant 0 : i32
    return %c0_i32, %c0_i32_0 : i32, i32
  }
  func.func @transform_10(%arg0: i32) -> (i32, i32) {
    %c0_i32 = arith.constant 0 : i32
    %c0_i32_0 = arith.constant 0 : i32
    %c0_i32_1 = arith.constant 0 : i32
    return %c0_i32, %c0_i32_0 : i32, i32
  }
  func.func @transform_11(%arg0: i32) -> (i32, i32) {
    %c0_i32 = arith.constant 0 : i32
    %c0_i32_0 = arith.constant 0 : i32
    %c0_i32_1 = arith.constant 0 : i32
    return %c0_i32, %c0_i32_0 : i32, i32
  }
  func.func @transform_12(%arg0: i32) -> (i32, i32) {
    %c0_i32 = arith.constant 0 : i32
    %c0_i32_0 = arith.constant 0 : i32
    %c0_i32_1 = arith.constant 0 : i32
    return %c0_i32, %c0_i32_0 : i32, i32
  }
  func.func @transform_13(%arg0: i32) -> (i32, i32) {
    %c0_i32 = arith.constant 0 : i32
    %c0_i32_0 = arith.constant 0 : i32
    return %arg0, %c0_i32 : i32, i32
  }
}

</mosaic_0001>

<llo_original>
// kernel: _lambda_.1
$region0: #{_lambda_.1}
  #allocation0 [shape = 'u32[]', space=smem, size = 0x4, offset = 0x4, fixed_abs, tag = 'smem constant byte address 0x4 - core index']
  #allocation1 [shape = 'u32[144,128]{1,0:T(1,128)}', space=vmem, size = 0x12000, scoped, tag = 'internal scratch']
  #allocation2 [shape = 'f32[256,112]{1,0:T(8,128)}', space=vmem, size = 0x20000, scoped, tag = 'scratch operand']
  #allocation3 [shape = 'f32[128,80]{1,0:T(8,128)}', space=vmem, size = 0x10000, scoped, tag = 'scratch operand']
  #allocation4 [shape = 'f32[64,40]{1,0:T(8,128)}', space=vmem, size = 0x8000, scoped, tag = 'scratch operand']
  %s0 = inlined_call_operand.vmem [shape: f32[512,96], index: 0, kind: input, shape index: {}]
  %s1 = inlined_call_operand.vmem [shape: bf16[5,96,112], index: 1, kind: input, shape index: {}]
  %s2 = inlined_call_operand.vmem [shape: f32[1,112], index: 2, kind: input, shape index: {}]
  %s3 = inlined_call_operand.vmem [shape: bf16[2,112,56], index: 3, kind: input, shape index: {}]
  %s4 = inlined_call_operand.vmem [shape: bf16[5,56,80], index: 4, kind: input, shape index: {}]
  %s5 = inlined_call_operand.vmem [shape: f32[1,80], index: 5, kind: input, shape index: {}]
  %s6 = inlined_call_operand.vmem [shape: bf16[2,80,40], index: 6, kind: input, shape index: {}]
  %s7 = inlined_call_operand.vmem [shape: bf16[5,40,32], index: 7, kind: input, shape index: {}]
  %s8 = inlined_call_operand.vmem [shape: f32[1,32], index: 8, kind: input, shape index: {}]
  %s9 = inlined_call_operand.vmem [shape: bf16[32,16], index: 9, kind: input, shape index: {}]
  %s10 = inlined_call_operand.vmem [shape: f32[1,16], index: 10, kind: input, shape index: {}]
  %s11 = inlined_call_operand.vmem [shape: bf16[16,10], index: 11, kind: input, shape index: {}]
  %s12 = inlined_call_operand.vmem [shape: f32[1,10], index: 12, kind: input, shape index: {}]
  %s13 = inlined_call_operand.hbm [shape: f32[16,10], index: 13, kind: output, shape index: {}]
  %s14 = sld [smem:[#allocation0]]
  $region85: #{_lambda_.1} parent=0
    _
  %s16 = ssub.s32 1, %s14
  %s17 = scalar_select 0, %s16, %s14
  $region1: #{_lambda_.1} parent=0
    #allocation5 [shape = 'u8[8192]{0}', space=vmem, size = 0x2000, scoped, tag = 'output window, operand 0']
    #allocation6 [shape = 's32[2]{0}', space=sflag, size = 0x8, scoped, tag = 'scoped memory for _lambda_.1']
    %18 = vsyncpa [#allocation6], 0
    %s19 = scalar_lea.sflag [#allocation6], 1
    %20 = vsyncpa %s19, 0
    loop: start=0, step=1, limit=4
    $region2: #{_lambda_.1} parent=1 // loop_pre_header
      _
    $region3: #{_lambda_.1} parent=1 // loop_header
      %s22 = sphi 0, %s26
      %p23 = scmp.ge.s32.totalorder %s22, 4
      %s32 = sphi 0, %s34
      %s35 = sphi 0, %s32
      %s36 = sphi 0, %s35
      %s52 = sphi 0, %s36
      %s56 = sphi 0, %s56
      %s58 = sphi 0, %s56
      %s59 = sphi 0, %s58
      %s73 = sphi 0, %s59
      %s77 = sphi 0, %s77
      %s79 = sphi 0, %s77
      %s80 = sphi 0, %s79
      %s94 = sphi 0, %s80
      %s98 = sphi 0, %s98
      %s100 = sphi 0, %s98
      %s101 = sphi 0, %s100
      %s115 = sphi 0, %s101
      %s119 = sphi 0, %s119
      %s121 = sphi 0, %s119
      %s122 = sphi 0, %s121
      %s136 = sphi 0, %s122
      %s140 = sphi 0, %s140
      %s142 = sphi 0, %s140
      %s143 = sphi 0, %s142
      %s157 = sphi 0, %s143
      %s161 = sphi 0, %s161
      %s163 = sphi 0, %s161
      %s164 = sphi 0, %s163
      %s178 = sphi 0, %s164
      %s182 = sphi 0, %s182
      %s184 = sphi 0, %s182
      %s185 = sphi 0, %s184
      %s199 = sphi 0, %s185
      %s203 = sphi 0, %s203
      %s205 = sphi 0, %s203
      %s206 = sphi 0, %s205
      %s220 = sphi 0, %s206
      %s224 = sphi 0, %s224
      %s226 = sphi 0, %s224
      %s227 = sphi 0, %s226
      %s241 = sphi 0, %s227
      %s245 = sphi 0, %s245
      %s247 = sphi 0, %s245
      %s248 = sphi 0, %s247
      %s262 = sphi 0, %s248
      %s266 = sphi 0, %s266
      %s268 = sphi 0, %s266
      %s269 = sphi 0, %s268
      %s283 = sphi 0, %s269
      %s287 = sphi 0, %s287
      %s289 = sphi 0, %s287
      %s290 = sphi 0, %s289
      %s304 = sphi 0, %s290
      %s310 = sphi 0, %s312
      %s313 = sphi 0, %s310
      %s314 = sphi 0, %s313
      %s330 = sphi 0, %s314
    $region4: #{_lambda_.1} parent=1 // loop_header_branch
      %25 = sbr.rel (%p23) target = $region8
    $region5: #{_lambda_.1} parent=1 // loop_body
      %s27 = ssub.s32 %s22, 1
      %s28 = ssub.s32 %s22, 2
      %s29 = sadd.s32 %s22, 1
      %s30 = ssub.s32 %s22, %s29
      %p31 = scmp.eq.s32.totalorder %s30, 0
      %s33 = sadd.s32 %s32, 1
      %s34 = scalar_select %p31, %s32, %s33
      %p37 = pneg %p31
      %p38 = scmp.eq.s32.totalorder %s22, 1
      %p39 = por %p37, %p38
      %p40 = scmp.ne.s32.totalorder %s32, %s35
      %p41 = scmp.eq.s32.totalorder %s22, 0
      %p42 = por %p40, %p41
      %p43 = scmp.ne.s32.totalorder %s32, %s35
      %p44 = scmp.eq.s32.totalorder %s27, 1
      %p45 = por %p43, %p44
      %p46 = scmp.ne.s32.totalorder %s35, %s36
      %p47 = scmp.eq.s32.totalorder %s27, 0
      %p48 = por %p46, %p47
      %p49 = scmp.ne.s32.totalorder %s35, %s36
      %p50 = scmp.eq.s32.totalorder %s28, 1
      %p51 = por %p49, %p50
      %p53 = scmp.ne.s32.totalorder %s36, %s52
      %p54 = scmp.eq.s32.totalorder %s28, 0
      %p55 = por %p53, %p54
      %s57 = sadd.s32 %s56, 1
      %p60 = scmp.eq.s32.totalorder %s22, 1
      %p61 = scmp.ne.s32.totalorder %s56, %s58
      %p62 = scmp.eq.s32.totalorder %s22, 0
      %p63 = por %p61, %p62
      %p64 = scmp.ne.s32.totalorder %s56, %s58
      %p65 = scmp.eq.s32.totalorder %s27, 1
      %p66 = por %p64, %p65
      %p67 = scmp.ne.s32.totalorder %s58, %s59
      %p68 = scmp.eq.s32.totalorder %s27, 0
      %p69 = por %p67, %p68
      %p70 = scmp.ne.s32.totalorder %s58, %s59
      %p71 = scmp.eq.s32.totalorder %s28, 1
      %p72 = por %p70, %p71
      %p74 = scmp.ne.s32.totalorder %s59, %s73
      %p75 = scmp.eq.s32.totalorder %s28, 0
      %p76 = por %p74, %p75
      %s78 = sadd.s32 %s77, 1
      %p81 = scmp.eq.s32.totalorder %s22, 1
      %p82 = scmp.ne.s32.totalorder %s77, %s79
      %p83 = scmp.eq.s32.totalorder %s22, 0
      %p84 = por %p82, %p83
      %p85 = scmp.ne.s32.totalorder %s77, %s79
      %p86 = scmp.eq.s32.totalorder %s27, 1
      %p87 = por %p85, %p86
      %p88 = scmp.ne.s32.totalorder %s79, %s80
      %p89 = scmp.eq.s32.totalorder %s27, 0
      %p90 = por %p88, %p89
      %p91 = scmp.ne.s32.totalorder %s79, %s80
      %p92 = scmp.eq.s32.totalorder %s28, 1
      %p93 = por %p91, %p92
      %p95 = scmp.ne.s32.totalorder %s80, %s94
      %p96 = scmp.eq.s32.totalorder %s28, 0
      %p97 = por %p95, %p96
      %s99 = sadd.s32 %s98, 1
      %p102 = scmp.eq.s32.totalorder %s22, 1
      %p103 = scmp.ne.s32.totalorder %s98, %s100
      %p104 = scmp.eq.s32.totalorder %s22, 0
      %p105 = por %p103, %p104
      %p106 = scmp.ne.s32.totalorder %s98, %s100
      %p107 = scmp.eq.s32.totalorder %s27, 1
      %p108 = por %p106, %p107
      %p109 = scmp.ne.s32.totalorder %s100, %s101
      %p110 = scmp.eq.s32.totalorder %s27, 0
      %p111 = por %p109, %p110
      %p112 = scmp.ne.s32.totalorder %s100, %s101
      %p113 = scmp.eq.s32.totalorder %s28, 1
      %p114 = por %p112, %p113
      %p116 = scmp.ne.s32.totalorder %s101, %s115
      %p117 = scmp.eq.s32.totalorder %s28, 0
      %p118 = por %p116, %p117
      %s120 = sadd.s32 %s119, 1
      %p123 = scmp.eq.s32.totalorder %s22, 1
      %p124 = scmp.ne.s32.totalorder %s119, %s121
      %p125 = scmp.eq.s32.totalorder %s22, 0
      %p126 = por %p124, %p125
      %p127 = scmp.ne.s32.totalorder %s119, %s121
      %p128 = scmp.eq.s32.totalorder %s27, 1
      %p129 = por %p127, %p128
      %p130 = scmp.ne.s32.totalorder %s121, %s122
      %p131 = scmp.eq.s32.totalorder %s27, 0
      %p132 = por %p130, %p131
      %p133 = scmp.ne.s32.totalorder %s121, %s122
      %p134 = scmp.eq.s32.totalorder %s28, 1
      %p135 = por %p133, %p134
      %p137 = scmp.ne.s32.totalorder %s122, %s136
      %p138 = scmp.eq.s32.totalorder %s28, 0
      %p139 = por %p137, %p138
      %s141 = sadd.s32 %s140, 1
      %p144 = scmp.eq.s32.totalorder %s22, 1
      %p145 = scmp.ne.s32.totalorder %s140, %s142
      %p146 = scmp.eq.s32.totalorder %s22, 0
      %p147 = por %p145, %p146
      %p148 = scmp.ne.s32.totalorder %s140, %s142
      %p149 = scmp.eq.s32.totalorder %s27, 1
      %p150 = por %p148, %p149
      %p151 = scmp.ne.s32.totalorder %s142, %s143
      %p152 = scmp.eq.s32.totalorder %s27, 0
      %p153 = por %p151, %p152
      %p154 = scmp.ne.s32.totalorder %s142, %s143
      %p155 = scmp.eq.s32.totalorder %s28, 1
      %p156 = por %p154, %p155
      %p158 = scmp.ne.s32.totalorder %s143, %s157
      %p159 = scmp.eq.s32.totalorder %s28, 0
      %p160 = por %p158, %p159
      %s162 = sadd.s32 %s161, 1
      %p165 = scmp.eq.s32.totalorder %s22, 1
      %p166 = scmp.ne.s32.totalorder %s161, %s163
      %p167 = scmp.eq.s32.totalorder %s22, 0
      %p168 = por %p166, %p167
      %p169 = scmp.ne.s32.totalorder %s161, %s163
      %p170 = scmp.eq.s32.totalorder %s27, 1
      %p171 = por %p169, %p170
      %p172 = scmp.ne.s32.totalorder %s163, %s164
      %p173 = scmp.eq.s32.totalorder %s27, 0
      %p174 = por %p172, %p173
      %p175 = scmp.ne.s32.totalorder %s163, %s164
      %p176 = scmp.eq.s32.totalorder %s28, 1
      %p177 = por %p175, %p176
      %p179 = scmp.ne.s32.totalorder %s164, %s178
      %p180 = scmp.eq.s32.totalorder %s28, 0
      %p181 = por %p179, %p180
      %s183 = sadd.s32 %s182, 1
      %p186 = scmp.eq.s32.totalorder %s22, 1
      %p187 = scmp.ne.s32.totalorder %s182, %s184
      %p188 = scmp.eq.s32.totalorder %s22, 0
      %p189 = por %p187, %p188
      %p190 = scmp.ne.s32.totalorder %s182, %s184
      %p191 = scmp.eq.s32.totalorder %s27, 1
      %p192 = por %p190, %p191
      %p193 = scmp.ne.s32.totalorder %s184, %s185
      %p194 = scmp.eq.s32.totalorder %s27, 0
      %p195 = por %p193, %p194
      %p196 = scmp.ne.s32.totalorder %s184, %s185
      %p197 = scmp.eq.s32.totalorder %s28, 1
      %p198 = por %p196, %p197
      %p200 = scmp.ne.s32.totalorder %s185, %s199
      %p201 = scmp.eq.s32.totalorder %s28, 0
      %p202 = por %p200, %p201
      %s204 = sadd.s32 %s203, 1
      %p207 = scmp.eq.s32.totalorder %s22, 1
      %p208 = scmp.ne.s32.totalorder %s203, %s205
      %p209 = scmp.eq.s32.totalorder %s22, 0
      %p210 = por %p208, %p209
      %p211 = scmp.ne.s32.totalorder %s203, %s205
      %p212 = scmp.eq.s32.totalorder %s27, 1
      %p213 = por %p211, %p212
      %p214 = scmp.ne.s32.totalorder %s205, %s206
      %p215 = scmp.eq.s32.totalorder %s27, 0
      %p216 = por %p214, %p215
      %p217 = scmp.ne.s32.totalorder %s205, %s206
      %p218 = scmp.eq.s32.totalorder %s28, 1
      %p219 = por %p217, %p218
      %p221 = scmp.ne.s32.totalorder %s206, %s220
      %p222 = scmp.eq.s32.totalorder %s28, 0
      %p223 = por %p221, %p222
      %s225 = sadd.s32 %s224, 1
      %p228 = scmp.eq.s32.totalorder %s22, 1
      %p229 = scmp.ne.s32.totalorder %s224, %s226
      %p230 = scmp.eq.s32.totalorder %s22, 0
      %p231 = por %p229, %p230
      %p232 = scmp.ne.s32.totalorder %s224, %s226
      %p233 = scmp.eq.s32.totalorder %s27, 1
      %p234 = por %p232, %p233
      %p235 = scmp.ne.s32.totalorder %s226, %s227
      %p236 = scmp.eq.s32.totalorder %s27, 0
      %p237 = por %p235, %p236
      %p238 = scmp.ne.s32.totalorder %s226, %s227
      %p239 = scmp.eq.s32.totalorder %s28, 1
      %p240 = por %p238, %p239
      %p242 = scmp.ne.s32.totalorder %s227, %s241
      %p243 = scmp.eq.s32.totalorder %s28, 0
      %p244 = por %p242, %p243
      %s246 = sadd.s32 %s245, 1
      %p249 = scmp.eq.s32.totalorder %s22, 1
      %p250 = scmp.ne.s32.totalorder %s245, %s247
      %p251 = scmp.eq.s32.totalorder %s22, 0
      %p252 = por %p250, %p251
      %p253 = scmp.ne.s32.totalorder %s245, %s247
      %p254 = scmp.eq.s32.totalorder %s27, 1
      %p255 = por %p253, %p254
      %p256 = scmp.ne.s32.totalorder %s247, %s248
      %p257 = scmp.eq.s32.totalorder %s27, 0
      %p258 = por %p256, %p257
      %p259 = scmp.ne.s32.totalorder %s247, %s248
      %p260 = scmp.eq.s32.totalorder %s28, 1
      %p261 = por %p259, %p260
      %p263 = scmp.ne.s32.totalorder %s248, %s262
      %p264 = scmp.eq.s32.totalorder %s28, 0
      %p265 = por %p263, %p264
      %s267 = sadd.s32 %s266, 1
      %p270 = scmp.eq.s32.totalorder %s22, 1
      %p271 = scmp.ne.s32.totalorder %s266, %s268
      %p272 = scmp.eq.s32.totalorder %s22, 0
      %p273 = por %p271, %p272
      %p274 = scmp.ne.s32.totalorder %s266, %s268
      %p275 = scmp.eq.s32.totalorder %s27, 1
      %p276 = por %p274, %p275
      %p277 = scmp.ne.s32.totalorder %s268, %s269
      %p278 = scmp.eq.s32.totalorder %s27, 0
      %p279 = por %p277, %p278
      %p280 = scmp.ne.s32.totalorder %s268, %s269
      %p281 = scmp.eq.s32.totalorder %s28, 1
      %p282 = por %p280, %p281
      %p284 = scmp.ne.s32.totalorder %s269, %s283
      %p285 = scmp.eq.s32.totalorder %s28, 0
      %p286 = por %p284, %p285
      %s288 = sadd.s32 %s287, 1
      %p291 = scmp.eq.s32.totalorder %s22, 1
      %p292 = scmp.ne.s32.totalorder %s287, %s289
      %p293 = scmp.eq.s32.totalorder %s22, 0
      %p294 = por %p292, %p293
      %p295 = scmp.ne.s32.totalorder %s287, %s289
      %p296 = scmp.eq.s32.totalorder %s27, 1
      %p297 = por %p295, %p296
      %p298 = scmp.ne.s32.totalorder %s289, %s290
      %p299 = scmp.eq.s32.totalorder %s27, 0
      %p300 = por %p298, %p299
      %p301 = scmp.ne.s32.totalorder %s289, %s290
      %p302 = scmp.eq.s32.totalorder %s28, 1
      %p303 = por %p301, %p302
      %p305 = scmp.ne.s32.totalorder %s290, %s304
      %p306 = scmp.eq.s32.totalorder %s28, 0
      %p307 = por %p305, %p306
      %s308 = ssub.s32 %s22, %s29
      %p309 = scmp.eq.s32.totalorder %s308, 0
      %s311 = sadd.s32 %s310, 1
      %s312 = scalar_select %p309, %s310, %s311
      %p315 = pneg %p309
      %p316 = scmp.eq.s32.totalorder %s22, 1
      %p317 = por %p315, %p316
      %p318 = scmp.ne.s32.totalorder %s310, %s313
      %p319 = scmp.eq.s32.totalorder %s22, 0
      %p320 = por %p318, %p319
      %p321 = scmp.ne.s32.totalorder %s310, %s313
      %p322 = scmp.eq.s32.totalorder %s27, 1
      %p323 = por %p321, %p322
      %p324 = scmp.ne.s32.totalorder %s313, %s314
      %p325 = scmp.eq.s32.totalorder %s27, 0
      %p326 = por %p324, %p325
      %p327 = scmp.ne.s32.totalorder %s313, %s314
      %p328 = scmp.eq.s32.totalorder %s28, 1
      %p329 = por %p327, %p328
      %p331 = scmp.ne.s32.totalorder %s314, %s330
      %p332 = scmp.eq.s32.totalorder %s28, 0
      %p333 = por %p331, %p332
      %p334 = scmp.le.s32.totalorder 1, %s22
      %p335 = scmp.lt.s32.totalorder %s22, 3
      %p336 = pnand %p334, %p335
      %p337 = pneg %p336
      // Predicated region
      $region9: #{_lambda_.1} parent=5 // pred_check
        _
      $region10: #{_lambda_.1} parent=5 // pred_check_branch
        %339 = sbr.rel (%p336) target = $region12
      $region11: #{_lambda_.1} parent=5 // pred_region
        %s340 = ssub.s32 %s22, 1
        // Predicated region
        $region13: #{_lambda_.1} parent=11 // pred_check
          %p341 = pneg %p69
        $region14: #{_lambda_.1} parent=11 // pred_check_branch
          %343 = sbr.rel (%p341) target = $region16
        $region15: #{_lambda_.1} parent=11 // pred_region
          _
        $region16: #{_lambda_.1} parent=11 // pred_fallthru
          _
        // Predicated region
        $region17: #{_lambda_.1} parent=11 // pred_check
          %p344 = pneg %p90
        $region18: #{_lambda_.1} parent=11 // pred_check_branch
          %346 = sbr.rel (%p344) target = $region20
        $region19: #{_lambda_.1} parent=11 // pred_region
          _
        $region20: #{_lambda_.1} parent=11 // pred_fallthru
          _
        // Predicated region
        $region21: #{_lambda_.1} parent=11 // pred_check
          %p347 = pneg %p111
        $region22: #{_lambda_.1} parent=11 // pred_check_branch
          %349 = sbr.rel (%p347) target = $region24
        $region23: #{_lambda_.1} parent=11 // pred_region
          _
        $region24: #{_lambda_.1} parent=11 // pred_fallthru
          _
        // Predicated region
        $region25: #{_lambda_.1} parent=11 // pred_check
          %p350 = pneg %p132
        $region26: #{_lambda_.1} parent=11 // pred_check_branch
          %352 = sbr.rel (%p350) target = $region28
        $region27: #{_lambda_.1} parent=11 // pred_region
          _
        $region28: #{_lambda_.1} parent=11 // pred_fallthru
          _
        // Predicated region
        $region29: #{_lambda_.1} parent=11 // pred_check
          %p353 = pneg %p153
        $region30: #{_lambda_.1} parent=11 // pred_check_branch
          %355 = sbr.rel (%p353) target = $region32
        $region31: #{_lambda_.1} parent=11 // pred_region
          _
        $region32: #{_lambda_.1} parent=11 // pred_fallthru
          _
        // Predicated region
        $region33: #{_lambda_.1} parent=11 // pred_check
          %p356 = pneg %p174
        $region34: #{_lambda_.1} parent=11 // pred_check_branch
          %358 = sbr.rel (%p356) target = $region36
        $region35: #{_lambda_.1} parent=11 // pred_region
          _
        $region36: #{_lambda_.1} parent=11 // pred_fallthru
          _
        // Predicated region
        $region37: #{_lambda_.1} parent=11 // pred_check
          %p359 = pneg %p195
        $region38: #{_lambda_.1} parent=11 // pred_check_branch
          %361 = sbr.rel (%p359) target = $region40
        $region39: #{_lambda_.1} parent=11 // pred_region
          _
        $region40: #{_lambda_.1} parent=11 // pred_fallthru
          _
        // Predicated region
        $region41: #{_lambda_.1} parent=11 // pred_check
          %p362 = pneg %p216
        $region42: #{_lambda_.1} parent=11 // pred_check_branch
          %364 = sbr.rel (%p362) target = $region44
        $region43: #{_lambda_.1} parent=11 // pred_region
          _
        $region44: #{_lambda_.1} parent=11 // pred_fallthru
          _
        // Predicated region
        $region45: #{_lambda_.1} parent=11 // pred_check
          %p365 = pneg %p237
        $region46: #{_lambda_.1} parent=11 // pred_check_branch
          %367 = sbr.rel (%p365) target = $region48
        $region47: #{_lambda_.1} parent=11 // pred_region
          _
        $region48: #{_lambda_.1} parent=11 // pred_fallthru
          _
        // Predicated region
        $region49: #{_lambda_.1} parent=11 // pred_check
          %p368 = pneg %p258
        $region50: #{_lambda_.1} parent=11 // pred_check_branch
          %370 = sbr.rel (%p368) target = $region52
        $region51: #{_lambda_.1} parent=11 // pred_region
          _
        $region52: #{_lambda_.1} parent=11 // pred_fallthru
          _
        // Predicated region
        $region53: #{_lambda_.1} parent=11 // pred_check
          %p371 = pneg %p279
        $region54: #{_lambda_.1} parent=11 // pred_check_branch
          %373 = sbr.rel (%p371) target = $region56
        $region55: #{_lambda_.1} parent=11 // pred_region
          _
        $region56: #{_lambda_.1} parent=11 // pred_fallthru
          _
        // Predicated region
        $region57: #{_lambda_.1} parent=11 // pred_check
          %p374 = pneg %p300
        $region58: #{_lambda_.1} parent=11 // pred_check_branch
          %376 = sbr.rel (%p374) target = $region60
        $region59: #{_lambda_.1} parent=11 // pred_region
          _
        $region60: #{_lambda_.1} parent=11 // pred_fallthru
          _
      $region12: #{_lambda_.1} parent=5 // pred_fallthru
        _
      %p377 = scmp.lt.s32.totalorder %s22, 2
      // Predicated region
      $region61: #{_lambda_.1} parent=5 // pred_check
        %p378 = pneg %p377
      $region62: #{_lambda_.1} parent=5 // pred_check_branch
        %380 = sbr.rel (%p378) target = $region64
      $region63: #{_lambda_.1} parent=5 // pred_region
        // Predicated region
        $region65: #{_lambda_.1} parent=63 // pred_check
          %p381 = pneg %p42
        $region66: #{_lambda_.1} parent=63 // pred_check_branch
          %383 = sbr.rel (%p381) target = $region68
        $region67: #{_lambda_.1} parent=63 // pred_region
          %s384 = smul.u32 32, %s22
          %p385 = scmp.lt.s32.totalorder %s384, 63
          %s386 = scalar_select %p385, %s384, 63
          %s387 = smul.addr %s386, 8
          %s388 = scalar_lea.vmem %s0, %s387
          %s389 = smul.u32 32, %s22
        $region68: #{_lambda_.1} parent=63 // pred_fallthru
          _
      $region64: #{_lambda_.1} parent=5 // pred_fallthru
        _
      %p390 = scmp.le.s32.totalorder 1, %s22
      %p391 = scmp.lt.s32.totalorder %s22, 3
      %p392 = pnand %p390, %p391
      %p393 = pneg %p392
      // Predicated region
      $region69: #{_lambda_.1} parent=5 // pred_check
        _
      $region70: #{_lambda_.1} parent=5 // pred_check_branch
        %395 = sbr.rel (%p392) target = $region72
      $region71: #{_lambda_.1} parent=5 // pred_region
        %s396 = ssub.s32 %s22, 1
        %s397 = smul.u32 32, %s27
        %p398 = scmp.lt.s32.totalorder %s397, 63
        %s399 = scalar_select %p398, %s397, 63
        %s400 = smul.addr %s399, 8
        %s401 = scalar_lea.vmem %s0, %s400
        %p402 = pneg %p48
        %p403 = pneg %p45
        %p404 = pneg %p69
        %p405 = pneg %p66
        %p406 = pneg %p90
        %p407 = pneg %p87
        %p408 = pneg %p111
        %p409 = pneg %p108
        %p410 = pneg %p132
        %p411 = pneg %p129
        %p412 = pneg %p153
        %p413 = pneg %p150
        %p414 = pneg %p174
        %p415 = pneg %p171
        %p416 = pneg %p195
        %p417 = pneg %p192
        %p418 = pneg %p216
        %p419 = pneg %p213
        %p420 = pneg %p237
        %p421 = pneg %p234
        %p422 = pneg %p258
        %p423 = pneg %p255
        %p424 = pneg %p279
        %p425 = pneg %p276
        %p426 = pneg %p300
        %p427 = pneg %p297
        %p428 = pneg %p326
        %p429 = pneg %p323
        %s430 = sand.u32 %s313, 1
        %s431 = scalar_lea.sflag [#allocation6], %s430
        %s432 = sand.u32 %s313, 1
        %s433 = smul.addr %s432, 8
        %s434 = scalar_lea.vmem [#allocation5], %s433
        %s435 = smul.u32 32, %s27
        %p436 = scmp.lt.s32.totalorder %s435, 63
        %s437 = scalar_select %p436, %s435, 63
        %s438 = smul.addr %s437, 8
        %s439 = scalar_lea.vmem %s0, %s438
        %s440 = smul.u32 32, %s27
        %v442 = vld [vmem:[%s439] sm:$0xff]
        %v443 = vld [vmem:[%s439 + $0x8] sm:$0xff]
        %v444 = vld [vmem:[%s439 + $0x10] sm:$0xff]
        %v445 = vld [vmem:[%s439 + $0x18] sm:$0xff]
        %v446 = vld [vmem:[%s439 + $0x20] sm:$0xff]
        %v447 = vld [vmem:[%s439 + $0x28] sm:$0xff]
        %v448 = vld [vmem:[%s439 + $0x30] sm:$0xff]
        %v449 = vld [vmem:[%s439 + $0x38] sm:$0xff]
        %v450 = vld [vmem:[%s439 + $0x40] sm:$0xff]
        %v451 = vld [vmem:[%s439 + $0x48] sm:$0xff]
        %v452 = vld [vmem:[%s439 + $0x50] sm:$0xff]
        %v453 = vld [vmem:[%s439 + $0x58] sm:$0xff]
        %v454 = vld [vmem:[%s439 + $0x60] sm:$0xff]
        %v455 = vld [vmem:[%s439 + $0x68] sm:$0xff]
        %v456 = vld [vmem:[%s439 + $0x70] sm:$0xff]
        %v457 = vld [vmem:[%s439 + $0x78] sm:$0xff]
        %v458 = vld [vmem:[%s439 + $0x80] sm:$0xff]
        %v459 = vld [vmem:[%s439 + $0x88] sm:$0xff]
        %v460 = vld [vmem:[%s439 + $0x90] sm:$0xff]
        %v461 = vld [vmem:[%s439 + $0x98] sm:$0xff]
        %v462 = vld [vmem:[%s439 + $0xa0] sm:$0xff]
        %v463 = vld [vmem:[%s439 + $0xa8] sm:$0xff]
        %v464 = vld [vmem:[%s439 + $0xb0] sm:$0xff]
        %v465 = vld [vmem:[%s439 + $0xb8] sm:$0xff]
        %v466 = vld [vmem:[%s439 + $0xc0] sm:$0xff]
        %v467 = vld [vmem:[%s439 + $0xc8] sm:$0xff]
        %v468 = vld [vmem:[%s439 + $0xd0] sm:$0xff]
        %v469 = vld [vmem:[%s439 + $0xd8] sm:$0xff]
        %v470 = vld [vmem:[%s439 + $0xe0] sm:$0xff]
        %v471 = vld [vmem:[%s439 + $0xe8] sm:$0xff]
        %v472 = vld [vmem:[%s439 + $0xf0] sm:$0xff]
        %v473 = vld [vmem:[%s439 + $0xf8] sm:$0xff]
        %v474 = vpack.c.bf16 %v443, %v442
        %v475 = vpack.c.bf16 %v445, %v444
        %v476 = vpack.c.bf16 %v447, %v446
        %v477 = vpack.c.bf16 %v449, %v448
        %v478 = vpack.c.bf16 %v451, %v450
        %v479 = vpack.c.bf16 %v453, %v452
        %v480 = vpack.c.bf16 %v455, %v454
        %v481 = vpack.c.bf16 %v457, %v456
        %v482 = vpack.c.bf16 %v459, %v458
        %v483 = vpack.c.bf16 %v461, %v460
        %v484 = vpack.c.bf16 %v463, %v462
        %v485 = vpack.c.bf16 %v465, %v464
        %v486 = vpack.c.bf16 %v467, %v466
        %v487 = vpack.c.bf16 %v469, %v468
        %v488 = vpack.c.bf16 %v471, %v470
        %v489 = vpack.c.bf16 %v473, %v472
        %v490 = vld [vmem:[%s1] sm:$0xf]
        %v491 = vld [vmem:[%s1 + $0x4] sm:$0xf]
        %v492 = vld [vmem:[%s1 + $0x8] sm:$0xf]
        %v493 = vld [vmem:[%s1 + $0xc] sm:$0xf]
        %v494 = vld [vmem:[%s1 + $0x10] sm:$0xf]
        %v495 = vld [vmem:[%s1 + $0x14] sm:$0xf]
        %v496 = vld [vmem:[%s1 + $0x18] sm:$0xf]
        %v497 = vld [vmem:[%s1 + $0x1c] sm:$0xf]
        %v498 = vld [vmem:[%s1 + $0x20] sm:$0xf]
        %v499 = vld [vmem:[%s1 + $0x24] sm:$0xf]
        %v500 = vld [vmem:[%s1 + $0x28] sm:$0xf]
        %v501 = vld [vmem:[%s1 + $0x2c] sm:$0xf]
        %v502 = vrot.slane %v442, 1
        %v503 = vrot.slane %v443, 1
        %v504 = vrot.slane %v444, 1
        %v505 = vrot.slane %v445, 1
        %v506 = vrot.slane %v446, 1
        %v507 = vrot.slane %v447, 1
        %v508 = vrot.slane %v448, 1
        %v509 = vrot.slane %v449, 1
        %v510 = vrot.slane %v450, 1
        %v511 = vrot.slane %v451, 1
        %v512 = vrot.slane %v452, 1
        %v513 = vrot.slane %v453, 1
        %v514 = vrot.slane %v454, 1
        %v515 = vrot.slane %v455, 1
        %v516 = vrot.slane %v456, 1
        %v517 = vrot.slane %v457, 1
        %v518 = vrot.slane %v458, 1
        %v519 = vrot.slane %v459, 1
        %v520 = vrot.slane %v460, 1
        %v521 = vrot.slane %v461, 1
        %v522 = vrot.slane %v462, 1
        %v523 = vrot.slane %v463, 1
        %v524 = vrot.slane %v464, 1
        %v525 = vrot.slane %v465, 1
        %v526 = vrot.slane %v466, 1
        %v527 = vrot.slane %v467, 1
        %v528 = vrot.slane %v468, 1
        %v529 = vrot.slane %v469, 1
        %v530 = vrot.slane %v470, 1
        %v531 = vrot.slane %v471, 1
        %v532 = vrot.slane %v472, 1
        %v533 = vrot.slane %v473, 1
        %v534 = vlaneseq
        %v535 = vshrl.u32 %v534, 7
        %vm536 = vcmp.lt.s32.totalorder %v535, 7
        %v537 = vsel %vm536, %v532, %v533
        %v538 = vsel %vm536, %v531, %v532
        %v539 = vsel %vm536, %v530, %v531
        %v540 = vsel %vm536, %v529, %v530
        %v541 = vsel %vm536, %v528, %v529
        %v542 = vsel %vm536, %v527, %v528
        %v543 = vsel %vm536, %v526, %v527
        %v544 = vsel %vm536, %v525, %v526
        %v545 = vsel %vm536, %v524, %v525
        %v546 = vsel %vm536, %v523, %v524
        %v547 = vsel %vm536, %v522, %v523
        %v548 = vsel %vm536, %v521, %v522
        %v549 = vsel %vm536, %v520, %v521
        %v550 = vsel %vm536, %v519, %v520
        %v551 = vsel %vm536, %v518, %v519
        %v552 = vsel %vm536, %v517, %v518
        %v553 = vsel %vm536, %v516, %v517
        %v554 = vsel %vm536, %v515, %v516
        %v555 = vsel %vm536, %v514, %v515
        %v556 = vsel %vm536, %v513, %v514
        %v557 = vsel %vm536, %v512, %v513
        %v558 = vsel %vm536, %v511, %v512
        %v559 = vsel %vm536, %v510, %v511
        %v560 = vsel %vm536, %v509, %v510
        %v561 = vsel %vm536, %v508, %v509
        %v562 = vsel %vm536, %v507, %v508
        %v563 = vsel %vm536, %v506, %v507
        %v564 = vsel %vm536, %v505, %v506
        %v565 = vsel %vm536, %v504, %v505
        %v566 = vsel %vm536, %v503, %v504
        %v567 = vsel %vm536, %v502, %v503
        %v568 = vsel %vm536, %v533, %v502
        %v569 = vpack.c.bf16 %v566, %v567
        %v570 = vpack.c.bf16 %v564, %v565
        %v571 = vpack.c.bf16 %v562, %v563
        %v572 = vpack.c.bf16 %v560, %v561
        %v573 = vpack.c.bf16 %v558, %v559
        %v574 = vpack.c.bf16 %v556, %v557
        %v575 = vpack.c.bf16 %v554, %v555
        %v576 = vpack.c.bf16 %v552, %v553
        %v577 = vpack.c.bf16 %v550, %v551
        %v578 = vpack.c.bf16 %v548, %v549
        %v579 = vpack.c.bf16 %v546, %v547
        %v580 = vpack.c.bf16 %v544, %v545
        %v581 = vpack.c.bf16 %v542, %v543
        %v582 = vpack.c.bf16 %v540, %v541
        %v583 = vpack.c.bf16 %v538, %v539
        %v584 = vpack.c.bf16 %v568, %v537
        %s585 = scalar_lea.vmem %s1, 48
        %v586 = vld [vmem:[%s585] sm:$0xf]
        %v587 = vld [vmem:[%s585 + $0x4] sm:$0xf]
        %v588 = vld [vmem:[%s585 + $0x8] sm:$0xf]
        %v589 = vld [vmem:[%s585 + $0xc] sm:$0xf]
        %v590 = vld [vmem:[%s585 + $0x10] sm:$0xf]
        %v591 = vld [vmem:[%s585 + $0x14] sm:$0xf]
        %v592 = vld [vmem:[%s585 + $0x18] sm:$0xf]
        %v593 = vld [vmem:[%s585 + $0x1c] sm:$0xf]
        %v594 = vld [vmem:[%s585 + $0x20] sm:$0xf]
        %v595 = vld [vmem:[%s585 + $0x24] sm:$0xf]
        %v596 = vld [vmem:[%s585 + $0x28] sm:$0xf]
        %v597 = vld [vmem:[%s585 + $0x2c] sm:$0xf]
        %v610 = vunpack.c.l.b16 %v586
        %v611 = vunpack.c.l.b16 %v587
        %v612 = vunpack.c.l.b16 %v588
        %v613 = vunpack.c.l.b16 %v589
        %v614 = vunpack.c.l.b16 %v590
        %v615 = vunpack.c.l.b16 %v591
        %v616 = vunpack.c.l.b16 %v592
        %v617 = vunpack.c.l.b16 %v593
        %v618 = vunpack.c.l.b16 %v594
        %v619 = vunpack.c.l.b16 %v595
        %v620 = vunpack.c.l.b16 %v596
        %v621 = vunpack.c.l.b16 %v597
        %v622 = vpack.c.b16 %v611, %v610
        %v623 = vpack.c.b16 %v613, %v612
        %v624 = vpack.c.b16 %v615, %v614
        %v625 = vpack.c.b16 %v617, %v616
        %v626 = vpack.c.b16 %v619, %v618
        %v627 = vpack.c.b16 %v621, %v620
        %vm634 = vcmask 785408
        %v636 = vsel %vm634, %v569, 0
        %v639 = vsel %vm634, %v570, 0
        %v642 = vsel %vm634, %v571, 0
        %v645 = vsel %vm634, %v572, 0
        %v648 = vsel %vm634, %v573, 0
        %v651 = vsel %vm634, %v574, 0
        %v654 = vsel %vm634, %v575, 0
        %v657 = vsel %vm634, %v576, 0
        %v660 = vsel %vm634, %v577, 0
        %v663 = vsel %vm634, %v578, 0
        %v666 = vsel %vm634, %v579, 0
        %v669 = vsel %vm634, %v580, 0
        %v672 = vsel %vm634, %v581, 0
        %v675 = vsel %vm634, %v582, 0
        %v678 = vsel %vm634, %v583, 0
        %v681 = vsel %vm634, %v584, 0
        %683 = vmatprep.subr.bf16.mxu0 0
        %684 = vmatpush1.bf16.msra.mxu0 %v622
        %685 = vmatprep.subr.bf16.mxu0 0
        %686 = vmatpush1.bf16.msra.mxu0 %v623
        %687 = vmatprep.subr.bf16.mxu0 0
        %688 = vmatpush1.bf16.msra.mxu0 %v624
        %689 = vmatprep.subr.bf16.mxu0 0
        %690 = vmatpush1.bf16.msra.mxu0 %v625
        %691 = vmatprep.subr.bf16.mxu0 0
        %692 = vmatpush1.bf16.msra.mxu0 %v626
        %693 = vmatprep.subr.bf16.mxu0 0
        %694 = vmatpush1.bf16.msra.mxu0 %v627
        %695 = vmatprep.subr.bf16.mxu0 0
        %696 = vmatpush1.bf16.msra.mxu0 0
        %697 = vmatprep.subr.bf16.mxu0 0
        %698 = vmatpush1.bf16.msra.mxu0 0
        %699 = vmatprep.subr.bf16.mxu0 0
        %700 = vmatpush1.bf16.msra.mxu0 0
        %701 = vmatprep.subr.bf16.mxu0 0
        %702 = vmatpush1.bf16.msra.mxu0 0
        %703 = vmatprep.subr.bf16.mxu0 0
        %704 = vmatpush1.bf16.msra.mxu0 0
        %705 = vmatprep.subr.bf16.mxu0 0
        %706 = vmatpush1.bf16.msra.mxu0 0
        %707 = vmatprep.subr.bf16.mxu0 0
        %708 = vmatpush1.bf16.msra.mxu0 0
        %709 = vmatprep.subr.bf16.mxu0 0
        %710 = vmatpush1.bf16.msra.mxu0 0
        %711 = vmatprep.subr.bf16.mxu0 0
        %712 = vmatpush1.bf16.msra.mxu0 0
        %713 = vmatprep.subr.bf16.mxu0 0
        %714 = vmatpush1.bf16.msra.mxu0 0
        %715 = vmatprep.mubr.bf16.mxu0 0
        %716 = vmatmul.mubr.bf16.gmra.mrb[0].mxu0 %v636
        %v717 = vpop.f32.mrb[0].mxu0
        %v718 = vadd.f32 0.0, %v717
        %v719 = vpop.f32.mrb[0].mxu0
        %v720 = vpop.f32.mrb[0].mxu0
        %v721 = vadd.f32 0.0, %v720
        %v722 = vpop.f32.mrb[0].mxu0
        %723 = vmatprep.mubr.bf16.mxu0 0
        %724 = vmatmul.mubr.bf16.gmra.mrb[0].mxu0 %v639
        %v725 = vpop.f32.mrb[0].mxu0
        %v726 = vadd.f32 0.0, %v725
        %v727 = vpop.f32.mrb[0].mxu0
        %v728 = vpop.f32.mrb[0].mxu0
        %v729 = vadd.f32 0.0, %v728
        %v730 = vpop.f32.mrb[0].mxu0
        %731 = vmatprep.mubr.bf16.mxu0 0
        %732 = vmatmul.mubr.bf16.gmra.mrb[0].mxu0 %v642
        %v733 = vpop.f32.mrb[0].mxu0
        %v734 = vadd.f32 0.0, %v733
        %v735 = vpop.f32.mrb[0].mxu0
        %v736 = vpop.f32.mrb[0].mxu0
        %v737 = vadd.f32 0.0, %v736
        %v738 = vpop.f32.mrb[0].mxu0
        %739 = vmatprep.mubr.bf16.mxu0 0
        %740 = vmatmul.mubr.bf16.gmra.mrb[0].mxu0 %v645
        %v741 = vpop.f32.mrb[0].mxu0
        %v742 = vadd.f32 0.0, %v741
        %v743 = vpop.f32.mrb[0].mxu0
        %v744 = vpop.f32.mrb[0].mxu0
        %v745 = vadd.f32 0.0, %v744
        %v746 = vpop.f32.mrb[0].mxu0
        %747 = vmatprep.mubr.bf16.mxu0 0
        %748 = vmatmul.mubr.bf16.gmra.mrb[0].mxu0 %v648
        %v749 = vpop.f32.mrb[0].mxu0
        %v750 = vadd.f32 0.0, %v749
        %v751 = vpop.f32.mrb[0].mxu0
        %v752 = vpop.f32.mrb[0].mxu0
        %v753 = vadd.f32 0.0, %v752
        %v754 = vpop.f32.mrb[0].mxu0
        %755 = vmatprep.mubr.bf16.mxu0 0
        %756 = vmatmul.mubr.bf16.gmra.mrb[0].mxu0 %v651
        %v757 = vpop.f32.mrb[0].mxu0
        %v758 = vadd.f32 0.0, %v757
        %v759 = vpop.f32.mrb[0].mxu0
        %v760 = vpop.f32.mrb[0].mxu0
        %v761 = vadd.f32 0.0, %v760
        %v762 = vpop.f32.mrb[0].mxu0
        %763 = vmatprep.mubr.bf16.mxu0 0
        %764 = vmatmul.mubr.bf16.gmra.mrb[0].mxu0 %v654
        %v765 = vpop.f32.mrb[0].mxu0
        %v766 = vadd.f32 0.0, %v765
        %v767 = vpop.f32.mrb[0].mxu0
        %v768 = vpop.f32.mrb[0].mxu0
        %v769 = vadd.f32 0.0, %v768
        %v770 = vpop.f32.mrb[0].mxu0
        %771 = vmatprep.mubr.bf16.mxu0 0
        %772 = vmatmul.mubr.bf16.gmra.mrb[0].mxu0 %v657
        %v773 = vpop.f32.mrb[0].mxu0
        %v774 = vadd.f32 0.0, %v773
        %v775 = vpop.f32.mrb[0].mxu0
        %v776 = vpop.f32.mrb[0].mxu0
        %v777 = vadd.f32 0.0, %v776
        %v778 = vpop.f32.mrb[0].mxu0
        %779 = vmatprep.mubr.bf16.mxu0 0
        %780 = vmatmul.mubr.bf16.gmra.mrb[0].mxu0 %v660
        %v781 = vpop.f32.mrb[0].mxu0
        %v782 = vadd.f32 0.0, %v781
        %v783 = vpop.f32.mrb[0].mxu0
        %v784 = vpop.f32.mrb[0].mxu0
        %v785 = vadd.f32 0.0, %v784
        %v786 = vpop.f32.mrb[0].mxu0
        %787 = vmatprep.mubr.bf16.mxu0 0
        %788 = vmatmul.mubr.bf16.gmra.mrb[0].mxu0 %v663
        %v789 = vpop.f32.mrb[0].mxu0
        %v790 = vadd.f32 0.0, %v789
        %v791 = vpop.f32.mrb[0].mxu0
        %v792 = vpop.f32.mrb[0].mxu0
        %v793 = vadd.f32 0.0, %v792
        %v794 = vpop.f32.mrb[0].mxu0
        %795 = vmatprep.mubr.bf16.mxu0 0
        %796 = vmatmul.mubr.bf16.gmra.mrb[0].mxu0 %v666
        %v797 = vpop.f32.mrb[0].mxu0
        %v798 = vadd.f32 0.0, %v797
        %v799 = vpop.f32.mrb[0].mxu0
        %v800 = vpop.f32.mrb[0].mxu0
        %v801 = vadd.f32 0.0, %v800
        %v802 = vpop.f32.mrb[0].mxu0
        %803 = vmatprep.mubr.bf16.mxu0 0
        %804 = vmatmul.mubr.bf16.gmra.mrb[0].mxu0 %v669
        %v805 = vpop.f32.mrb[0].mxu0
        %v806 = vadd.f32 0.0, %v805
        %v807 = vpop.f32.mrb[0].mxu0
        %v808 = vpop.f32.mrb[0].mxu0
        %v809 = vadd.f32 0.0, %v808
        %v810 = vpop.f32.mrb[0].mxu0
        %811 = vmatprep.mubr.bf16.mxu0 0
        %812 = vmatmul.mubr.bf16.gmra.mrb[0].mxu0 %v672
        %v813 = vpop.f32.mrb[0].mxu0
        %v814 = vadd.f32 0.0, %v813
        %v815 = vpop.f32.mrb[0].mxu0
        %v816 = vpop.f32.mrb[0].mxu0
        %v817 = vadd.f32 0.0, %v816
        %v818 = vpop.f32.mrb[0].mxu0
        %819 = vmatprep.mubr.bf16.mxu0 0
        %820 = vmatmul.mubr.bf16.gmra.mrb[0].mxu0 %v675
        %v821 = vpop.f32.mrb[0].mxu0
        %v822 = vadd.f32 0.0, %v821
        %v823 = vpop.f32.mrb[0].mxu0
        %v824 = vpop.f32.mrb[0].mxu0
        %v825 = vadd.f32 0.0, %v824
        %v826 = vpop.f32.mrb[0].mxu0
        %827 = vmatprep.mubr.bf16.mxu0 0
        %828 = vmatmul.mubr.bf16.gmra.mrb[0].mxu0 %v678
        %v829 = vpop.f32.mrb[0].mxu0
        %v830 = vadd.f32 0.0, %v829
        %v831 = vpop.f32.mrb[0].mxu0
        %v832 = vpop.f32.mrb[0].mxu0
        %v833 = vadd.f32 0.0, %v832
        %v834 = vpop.f32.mrb[0].mxu0
        %835 = vmatprep.mubr.bf16.mxu0 0
        %836 = vmatmul.mubr.bf16.gmra.mrb[0].mxu0 %v681
        %v837 = vpop.f32.mrb[0].mxu0
        %v838 = vadd.f32 0.0, %v837
        %v839 = vpop.f32.mrb[0].mxu0
        %v840 = vpop.f32.mrb[0].mxu0
        %v841 = vadd.f32 0.0, %v840
        %v842 = vpop.f32.mrb[0].mxu0
        %843 = vdwg.mxu0
        %v856 = vunpack.c.l.b16 %v490
        %v857 = vunpack.c.l.b16 %v491
        %v858 = vunpack.c.l.b16 %v492
        %v859 = vunpack.c.l.b16 %v493
        %v860 = vunpack.c.l.b16 %v494
        %v861 = vunpack.c.l.b16 %v495
        %v862 = vunpack.c.l.b16 %v496
        %v863 = vunpack.c.l.b16 %v497
        %v864 = vunpack.c.l.b16 %v498
        %v865 = vunpack.c.l.b16 %v499
        %v866 = vunpack.c.l.b16 %v500
        %v867 = vunpack.c.l.b16 %v501
        %v868 = vpack.c.b16 %v857, %v856
        %v869 = vpack.c.b16 %v859, %v858
        %v870 = vpack.c.b16 %v861, %v860
        %v871 = vpack.c.b16 %v863, %v862
        %v872 = vpack.c.b16 %v865, %v864
        %v873 = vpack.c.b16 %v867, %v866
        %v881 = vsel %vm634, %v474, 0
        %v884 = vsel %vm634, %v475, 0
        %v887 = vsel %vm634, %v476, 0
        %v890 = vsel %vm634, %v477, 0
        %v893 = vsel %vm634, %v478, 0
        %v896 = vsel %vm634, %v479, 0
        %v899 = vsel %vm634, %v480, 0
        %v902 = vsel %vm634, %v481, 0
        %v905 = vsel %vm634, %v482, 0
        %v908 = vsel %vm634, %v483, 0
        %v911 = vsel %vm634, %v484, 0
        %v914 = vsel %vm634, %v485, 0
        %v917 = vsel %vm634, %v486, 0
        %v920 = vsel %vm634, %v487, 0
        %v923 = vsel %vm634, %v488, 0
        %v926 = vsel %vm634, %v489, 0
        %928 = vmatprep.subr.bf16.mxu0 0
        %929 = vmatpush1.bf16.msra.mxu0 %v868
        %930 = vmatprep.subr.bf16.mxu0 0
        %931 = vmatpush1.bf16.msra.mxu0 %v869
        %932 = vmatprep.subr.bf16.mxu0 0
        %933 = vmatpush1.bf16.msra.mxu0 %v870
        %934 = vmatprep.subr.bf16.mxu0 0
        %935 = vmatpush1.bf16.msra.mxu0 %v871
        %936 = vmatprep.subr.bf16.mxu0 0
        %937 = vmatpush1.bf16.msra.mxu0 %v872
        %938 = vmatprep.subr.bf16.mxu0 0
        %939 = vmatpush1.bf16.msra.mxu0 %v873
        %940 = vmatprep.subr.bf16.mxu0 0
        %941 = vmatpush1.bf16.msra.mxu0 0
        %942 = vmatprep.subr.bf16.mxu0 0
        %943 = vmatpush1.bf16.msra.mxu0 0
        %944 = vmatprep.subr.bf16.mxu0 0
        %945 = vmatpush1.bf16.msra.mxu0 0
        %946 = vmatprep.subr.bf16.mxu0 0
        %947 = vmatpush1.bf16.msra.mxu0 0
        %948 = vmatprep.subr.bf16.mxu0 0
        %949 = vmatpush1.bf16.msra.mxu0 0
        %950 = vmatprep.subr.bf16.mxu0 0
        %951 = vmatpush1.bf16.msra.mxu0 0
        %952 = vmatprep.subr.bf16.mxu0 0
        %953 = vmatpush1.bf16.msra.mxu0 0
        %954 = vmatprep.subr.bf16.mxu0 0
        %955 = vmatpush1.bf16.msra.mxu0 0
        %956 = vmatprep.subr.bf16.mxu0 0
        %957 = vmatpush1.bf16.msra.mxu0 0
        %958 = vmatprep.subr.bf16.mxu0 0
        %959 = vmatpush1.bf16.msra.mxu0 0
        %960 = vmatprep.mubr.bf16.mxu0 0
        %961 = vmatmul.mubr.bf16.gmra.mrb[0].mxu0 %v881
        %v962 = vpop.f32.mrb[0].mxu0
        %v963 = vadd.f32 %v718, %v962
        %v964 = vpop.f32.mrb[0].mxu0
        %v965 = vpop.f32.mrb[0].mxu0
        %v966 = vadd.f32 %v721, %v965
        %v967 = vpop.f32.mrb[0].mxu0
        %968 = vmatprep.mubr.bf16.mxu0 0
        %969 = vmatmul.mubr.bf16.gmra.mrb[0].mxu0 %v884
        %v970 = vpop.f32.mrb[0].mxu0
        %v971 = vadd.f32 %v726, %v970
        %v972 = vpop.f32.mrb[0].mxu0
        %v973 = vpop.f32.mrb[0].mxu0
        %v974 = vadd.f32 %v729, %v973
        %v975 = vpop.f32.mrb[0].mxu0
        %976 = vmatprep.mubr.bf16.mxu0 0
        %977 = vmatmul.mubr.bf16.gmra.mrb[0].mxu0 %v887
        %v978 = vpop.f32.mrb[0].mxu0
        %v979 = vadd.f32 %v734, %v978
        %v980 = vpop.f32.mrb[0].mxu0
        %v981 = vpop.f32.mrb[0].mxu0
        %v982 = vadd.f32 %v737, %v981
        %v983 = vpop.f32.mrb[0].mxu0
        %984 = vmatprep.mubr.bf16.mxu0 0
        %985 = vmatmul.mubr.bf16.gmra.mrb[0].mxu0 %v890
        %v986 = vpop.f32.mrb[0].mxu0
        %v987 = vadd.f32 %v742, %v986
        %v988 = vpop.f32.mrb[0].mxu0
        %v989 = vpop.f32.mrb[0].mxu0
        %v990 = vadd.f32 %v745, %v989
        %v991 = vpop.f32.mrb[0].mxu0
        %992 = vmatprep.mubr.bf16.mxu0 0
        %993 = vmatmul.mubr.bf16.gmra.mrb[0].mxu0 %v893
        %v994 = vpop.f32.mrb[0].mxu0
        %v995 = vadd.f32 %v750, %v994
        %v996 = vpop.f32.mrb[0].mxu0
        %v997 = vpop.f32.mrb[0].mxu0
        %v998 = vadd.f32 %v753, %v997
        %v999 = vpop.f32.mrb[0].mxu0
        %1000 = vmatprep.mubr.bf16.mxu0 0
        %1001 = vmatmul.mubr.bf16.gmra.mrb[0].mxu0 %v896
        %v1002 = vpop.f32.mrb[0].mxu0
        %v1003 = vadd.f32 %v758, %v1002
        %v1004 = vpop.f32.mrb[0].mxu0
        %v1005 = vpop.f32.mrb[0].mxu0
        %v1006 = vadd.f32 %v761, %v1005
        %v1007 = vpop.f32.mrb[0].mxu0
        %1008 = vmatprep.mubr.bf16.mxu0 0
        %1009 = vmatmul.mubr.bf16.gmra.mrb[0].mxu0 %v899
        %v1010 = vpop.f32.mrb[0].mxu0
        %v1011 = vadd.f32 %v766, %v1010
        %v1012 = vpop.f32.mrb[0].mxu0
        %v1013 = vpop.f32.mrb[0].mxu0
        %v1014 = vadd.f32 %v769, %v1013
        %v1015 = vpop.f32.mrb[0].mxu0
        %1016 = vmatprep.mubr.bf16.mxu0 0
        %1017 = vmatmul.mubr.bf16.gmra.mrb[0].mxu0 %v902
        %v1018 = vpop.f32.mrb[0].mxu0
        %v1019 = vadd.f32 %v774, %v1018
        %v1020 = vpop.f32.mrb[0].mxu0
        %v1021 = vpop.f32.mrb[0].mxu0
        %v1022 = vadd.f32 %v777, %v1021
        %v1023 = vpop.f32.mrb[0].mxu0
        %1024 = vmatprep.mubr.bf16.mxu0 0
        %1025 = vmatmul.mubr.bf16.gmra.mrb[0].mxu0 %v905
        %v1026 = vpop.f32.mrb[0].mxu0
        %v1027 = vadd.f32 %v782, %v1026
        %v1028 = vpop.f32.mrb[0].mxu0
        %v1029 = vpop.f32.mrb[0].mxu0
        %v1030 = vadd.f32 %v785, %v1029
        %v1031 = vpop.f32.mrb[0].mxu0
        %1032 = vmatprep.mubr.bf16.mxu0 0
        %1033 = vmatmul.mubr.bf16.gmra.mrb[0].mxu0 %v908
        %v1034 = vpop.f32.mrb[0].mxu0
        %v1035 = vadd.f32 %v790, %v1034
        %v1036 = vpop.f32.mrb[0].mxu0
        %v1037 = vpop.f32.mrb[0].mxu0
        %v1038 = vadd.f32 %v793, %v1037
        %v1039 = vpop.f32.mrb[0].mxu0
        %1040 = vmatprep.mubr.bf16.mxu0 0
        %1041 = vmatmul.mubr.bf16.gmra.mrb[0].mxu0 %v911
        %v1042 = vpop.f32.mrb[0].mxu0
        %v1043 = vadd.f32 %v798, %v1042
        %v1044 = vpop.f32.mrb[0].mxu0
        %v1045 = vpop.f32.mrb[0].mxu0
        %v1046 = vadd.f32 %v801, %v1045
        %v1047 = vpop.f32.mrb[0].mxu0
        %1048 = vmatprep.mubr.bf16.mxu0 0
        %1049 = vmatmul.mubr.bf16.gmra.mrb[0].mxu0 %v914
        %v1050 = vpop.f32.mrb[0].mxu0
        %v1051 = vadd.f32 %v806, %v1050
        %v1052 = vpop.f32.mrb[0].mxu0
        %v1053 = vpop.f32.mrb[0].mxu0
        %v1054 = vadd.f32 %v809, %v1053
        %v1055 = vpop.f32.mrb[0].mxu0
        %1056 = vmatprep.mubr.bf16.mxu0 0
        %1057 = vmatmul.mubr.bf16.gmra.mrb[0].mxu0 %v917
        %v1058 = vpop.f32.mrb[0].mxu0
        %v1059 = vadd.f32 %v814, %v1058
        %v1060 = vpop.f32.mrb[0].mxu0
        %v1061 = vpop.f32.mrb[0].mxu0
        %v1062 = vadd.f32 %v817, %v1061
        %v1063 = vpop.f32.mrb[0].mxu0
        %1064 = vmatprep.mubr.bf16.mxu0 0
        %1065 = vmatmul.mubr.bf16.gmra.mrb[0].mxu0 %v920
        %v1066 = vpop.f32.mrb[0].mxu0
        %v1067 = vadd.f32 %v822, %v1066
        %v1068 = vpop.f32.mrb[0].mxu0
        %v1069 = vpop.f32.mrb[0].mxu0
        %v1070 = vadd.f32 %v825, %v1069
        %v1071 = vpop.f32.mrb[0].mxu0
        %1072 = vmatprep.mubr.bf16.mxu0 0
        %1073 = vmatmul.mubr.bf16.gmra.mrb[0].mxu0 %v923
        %v1074 = vpop.f32.mrb[0].mxu0
        %v1075 = vadd.f32 %v830, %v1074
        %v1076 = vpop.f32.mrb[0].mxu0
        %v1077 = vpop.f32.mrb[0].mxu0
        %v1078 = vadd.f32 %v833, %v1077
        %v1079 = vpop.f32.mrb[0].mxu0
        %1080 = vmatprep.mubr.bf16.mxu0 0
        %1081 = vmatmul.mubr.bf16.gmra.mrb[0].mxu0 %v926
        %v1082 = vpop.f32.mrb[0].mxu0
        %v1083 = vadd.f32 %v838, %v1082
        %v1084 = vpop.f32.mrb[0].mxu0
        %v1085 = vpop.f32.mrb[0].mxu0
        %v1086 = vadd.f32 %v841, %v1085
        %v1087 = vpop.f32.mrb[0].mxu0
        %1088 = vdwg.mxu0
        %v1089 = vrot.slane %v442, 2
        %v1090 = vrot.slane %v443, 2
        %v1091 = vrot.slane %v444, 2
        %v1092 = vrot.slane %v445, 2
        %v1093 = vrot.slane %v446, 2
        %v1094 = vrot.slane %v447, 2
        %v1095 = vrot.slane %v448, 2
        %v1096 = vrot.slane %v449, 2
        %v1097 = vrot.slane %v450, 2
        %v1098 = vrot.slane %v451, 2
        %v1099 = vrot.slane %v452, 2
        %v1100 = vrot.slane %v453, 2
        %v1101 = vrot.slane %v454, 2
        %v1102 = vrot.slane %v455, 2
        %v1103 = vrot.slane %v456, 2
        %v1104 = vrot.slane %v457, 2
        %v1105 = vrot.slane %v458, 2
        %v1106 = vrot.slane %v459, 2
        %v1107 = vrot.slane %v460, 2
        %v1108 = vrot.slane %v461, 2
        %v1109 = vrot.slane %v462, 2
        %v1110 = vrot.slane %v463, 2
        %v1111 = vrot.slane %v464, 2
        %v1112 = vrot.slane %v465, 2
        %v1113 = vrot.slane %v466, 2
        %v1114 = vrot.slane %v467, 2
        %v1115 = vrot.slane %v468, 2
        %v1116 = vrot.slane %v469, 2
        %v1117 = vrot.slane %v470, 2
        %v1118 = vrot.slane %v471, 2
        %v1119 = vrot.slane %v472, 2
        %v1120 = vrot.slane %v473, 2
        %vm1121 = vcmp.lt.s32.totalorder %v535, 6
        %v1122 = vsel %vm1121, %v1119, %v1120
        %v1123 = vsel %vm1121, %v1118, %v1119
        %v1124 = vsel %vm1121, %v1117, %v1118
        %v1125 = vsel %vm1121, %v1116, %v1117
        %v1126 = vsel %vm1121, %v1115, %v1116
        %v1127 = vsel %vm1121, %v1114, %v1115
        %v1128 = vsel %vm1121, %v1113, %v1114
        %v1129 = vsel %vm1121, %v1112, %v1113
        %v1130 = vsel %vm1121, %v1111, %v1112
        %v1131 = vsel %vm1121, %v1110, %v1111
        %v1132 = vsel %vm1121, %v1109, %v1110
        %v1133 = vsel %vm1121, %v1108, %v1109
        %v1134 = vsel %vm1121, %v1107, %v1108
        %v1135 = vsel %vm1121, %v1106, %v1107
        %v1136 = vsel %vm1121, %v1105, %v1106
        %v1137 = vsel %vm1121, %v1104, %v1105
        %v1138 = vsel %vm1121, %v1103, %v1104
        %v1139 = vsel %vm1121, %v1102, %v1103
        %v1140 = vsel %vm1121, %v1101, %v1102
        %v1141 = vsel %vm1121, %v1100, %v1101
        %v1142 = vsel %vm1121, %v1099, %v1100
        %v1143 = vsel %vm1121, %v1098, %v1099
        %v1144 = vsel %vm1121, %v1097, %v1098
        %v1145 = vsel %vm1121, %v1096, %v1097
        %v1146 = vsel %vm1121, %v1095, %v1096
        %v1147 = vsel %vm1121, %v1094, %v1095
        %v1148 = vsel %vm1121, %v1093, %v1094
        %v1149 = vsel %vm1121, %v1092, %v1093
        %v1150 = vsel %vm1121, %v1091, %v1092
        %v1151 = vsel %vm1121, %v1090, %v1091
        %v1152 = vsel %vm1121, %v1089, %v1090
        %v1153 = vsel %vm1121, %v1120, %v1089
        %v1154 = vpack.c.bf16 %v1151, %v1152
        %v1155 = vpack.c.bf16 %v1149, %v1150
        %v1156 = vpack.c.bf16 %v1147, %v1148
        %v1157 = vpack.c.bf16 %v1145, %v1146
        %v1158 = vpack.c.bf16 %v1143, %v1144
        %v1159 = vpack.c.bf16 %v1141, %v1142
        %v1160 = vpack.c.bf16 %v1139, %v1140
        %v1161 = vpack.c.bf16 %v1137, %v1138
        %v1162 = vpack.c.bf16 %v1135, %v1136
        %v1163 = vpack.c.bf16 %v1133, %v1134
        %v1164 = vpack.c.bf16 %v1131, %v1132
        %v1165 = vpack.c.bf16 %v1129, %v1130
        %v1166 = vpack.c.bf16 %v1127, %v1128
        %v1167 = vpack.c.bf16 %v1125, %v1126
        %v1168 = vpack.c.bf16 %v1123, %v1124
        %v1169 = vpack.c.bf16 %v1153, %v1122
        %s1170 = scalar_lea.vmem %s1, 96
        %v1171 = vld [vmem:[%s1170] sm:$0xf]
        %v1172 = vld [vmem:[%s1170 + $0x4] sm:$0xf]
        %v1173 = vld [vmem:[%s1170 + $0x8] sm:$0xf]
        %v1174 = vld [vmem:[%s1170 + $0xc] sm:$0xf]
        %v1175 = vld [vmem:[%s1170 + $0x10] sm:$0xf]
        %v1176 = vld [vmem:[%s1170 + $0x14] sm:$0xf]
        %v1177 = vld [vmem:[%s1170 + $0x18] sm:$0xf]
        %v1178 = vld [vmem:[%s1170 + $0x1c] sm:$0xf]
        %v1179 = vld [vmem:[%s1170 + $0x20] sm:$0xf]
        %v1180 = vld [vmem:[%s1170 + $0x24] sm:$0xf]
        %v1181 = vld [vmem:[%s1170 + $0x28] sm:$0xf]
        %v1182 = vld [vmem:[%s1170 + $0x2c] sm:$0xf]
        %v1195 = vunpack.c.l.b16 %v1171
        %v1196 = vunpack.c.l.b16 %v1172
        %v1197 = vunpack.c.l.b16 %v1173
        %v1198 = vunpack.c.l.b16 %v1174
        %v1199 = vunpack.c.l.b16 %v1175
        %v1200 = vunpack.c.l.b16 %v1176
        %v1201 = vunpack.c.l.b16 %v1177
        %v1202 = vunpack.c.l.b16 %v1178
        %v1203 = vunpack.c.l.b16 %v1179
        %v1204 = vunpack.c.l.b16 %v1180
        %v1205 = vunpack.c.l.b16 %v1181
        %v1206 = vunpack.c.l.b16 %v1182
        %v1207 = vpack.c.b16 %v1196, %v1195
        %v1208 = vpack.c.b16 %v1198, %v1197
        %v1209 = vpack.c.b16 %v1200, %v1199
        %v1210 = vpack.c.b16 %v1202, %v1201
        %v1211 = vpack.c.b16 %v1204, %v1203
        %v1212 = vpack.c.b16 %v1206, %v1205
        %v1220 = vsel %vm634, %v1154, 0
        %v1223 = vsel %vm634, %v1155, 0
        %v1226 = vsel %vm634, %v1156, 0
        %v1229 = vsel %vm634, %v1157, 0
        %v1232 = vsel %vm634, %v1158, 0
        %v1235 = vsel %vm634, %v1159, 0
        %v1238 = vsel %vm634, %v1160, 0
        %v1241 = vsel %vm634, %v1161, 0
        %v1244 = vsel %vm634, %v1162, 0
        %v1247 = vsel %vm634, %v1163, 0
        %v1250 = vsel %vm634, %v1164, 0
        %v1253 = vsel %vm634, %v1165, 0
        %v1256 = vsel %vm634, %v1166, 0
        %v1259 = vsel %vm634, %v1167, 0
        %v1262 = vsel %vm634, %v1168, 0
        %v1265 = vsel %vm634, %v1169, 0
        %1267 = vmatprep.subr.bf16.mxu0 0
        %1268 = vmatpush1.bf16.msra.mxu0 %v1207
        %1269 = vmatprep.subr.bf16.mxu0 0
        %1270 = vmatpush1.bf16.msra.mxu0 %v1208
        %1271 = vmatprep.subr.bf16.mxu0 0
        %1272 = vmatpush1.bf16.msra.mxu0 %v1209
        %1273 = vmatprep.subr.bf16.mxu0 0
        %1274 = vmatpush1.bf16.msra.mxu0 %v1210
        %1275 = vmatprep.subr.bf16.mxu0 0
        %1276 = vmatpush1.bf16.msra.mxu0 %v1211
        %1277 = vmatprep.subr.bf16.mxu0 0
        %1278 = vmatpush1.bf16.msra.mxu0 %v1212
        %1279 = vmatprep.subr.bf16.mxu0 0
        %1280 = vmatpush1.bf16.msra.mxu0 0
        %1281 = vmatprep.subr.bf16.mxu0 0
        %1282 = vmatpush1.bf16.msra.mxu0 0
        %1283 = vmatprep.subr.bf16.mxu0 0
        %1284 = vmatpush1.bf16.msra.mxu0 0
        %1285 = vmatprep.subr.bf16.mxu0 0
        %1286 = vmatpush1.bf16.msra.mxu0 0
        %1287 = vmatprep.subr.bf16.mxu0 0
        %1288 = vmatpush1.bf16.msra.mxu0 0
        %1289 = vmatprep.subr.bf16.mxu0 0
        %1290 = vmatpush1.bf16.msra.mxu0 0
        %1291 = vmatprep.subr.bf16.mxu0 0
        %1292 = vmatpush1.bf16.msra.mxu0 0
        %1293 = vmatprep.subr.bf16.mxu0 0
        %1294 = vmatpush1.bf16.msra.mxu0 0
        %1295 = vmatprep.subr.bf16.mxu0 0
        %1296 = vmatpush1.bf16.msra.mxu0 0
        %1297 = vmatprep.subr.bf16.mxu0 0
        %1298 = vmatpush1.bf16.msra.mxu0 0
        %1299 = vmatprep.mubr.bf16.mxu0 0
        %1300 = vmatmul.mubr.bf16.gmra.mrb[0].mxu0 %v1220
        %v1301 = vpop.f32.mrb[0].mxu0
        %v1302 = vadd.f32 0.0, %v1301
        %v1303 = vpop.f32.mrb[0].mxu0
        %v1304 = vpop.f32.mrb[0].mxu0
        %v1305 = vadd.f32 0.0, %v1304
        %v1306 = vpop.f32.mrb[0].mxu0
        %1307 = vmatprep.mubr.bf16.mxu0 0
        %1308 = vmatmul.mubr.bf16.gmra.mrb[0].mxu0 %v1223
        %v1309 = vpop.f32.mrb[0].mxu0
        %v1310 = vadd.f32 0.0, %v1309
        %v1311 = vpop.f32.mrb[0].mxu0
        %v1312 = vpop.f32.mrb[0].mxu0
        %v1313 = vadd.f32 0.0, %v1312
        %v1314 = vpop.f32.mrb[0].mxu0
        %1315 = vmatprep.mubr.bf16.mxu0 0
        %1316 = vmatmul.mubr.bf16.gmra.mrb[0].mxu0 %v1226
        %v1317 = vpop.f32.mrb[0].mxu0
        %v1318 = vadd.f32 0.0, %v1317
        %v1319 = vpop.f32.mrb[0].mxu0
        %v1320 = vpop.f32.mrb[0].mxu0
        %v1321 = vadd.f32 0.0, %v1320
        %v1322 = vpop.f32.mrb[0].mxu0
        %1323 = vmatprep.mubr.bf16.mxu0 0
        %1324 = vmatmul.mubr.bf16.gmra.mrb[0].mxu0 %v1229
        %v1325 = vpop.f32.mrb[0].mxu0
        %v1326 = vadd.f32 0.0, %v1325
        %v1327 = vpop.f32.mrb[0].mxu0
        %v1328 = vpop.f32.mrb[0].mxu0
        %v1329 = vadd.f32 0.0, %v1328
        %v1330 = vpop.f32.mrb[0].mxu0
        %1331 = vmatprep.mubr.bf16.mxu0 0
        %1332 = vmatmul.mubr.bf16.gmra.mrb[0].mxu0 %v1232
        %v1333 = vpop.f32.mrb[0].mxu0
        %v1334 = vadd.f32 0.0, %v1333
        %v1335 = vpop.f32.mrb[0].mxu0
        %v1336 = vpop.f32.mrb[0].mxu0
        %v1337 = vadd.f32 0.0, %v1336
        %v1338 = vpop.f32.mrb[0].mxu0
        %1339 = vmatprep.mubr.bf16.mxu0 0
        %1340 = vmatmul.mubr.bf16.gmra.mrb[0].mxu0 %v1235
        %v1341 = vpop.f32.mrb[0].mxu0
        %v1342 = vadd.f32 0.0, %v1341
        %v1343 = vpop.f32.mrb[0].mxu0
        %v1344 = vpop.f32.mrb[0].mxu0
        %v1345 = vadd.f32 0.0, %v1344
        %v1346 = vpop.f32.mrb[0].mxu0
        %1347 = vmatprep.mubr.bf16.mxu0 0
        %1348 = vmatmul.mubr.bf16.gmra.mrb[0].mxu0 %v1238
        %v1349 = vpop.f32.mrb[0].mxu0
        %v1350 = vadd.f32 0.0, %v1349
        %v1351 = vpop.f32.mrb[0].mxu0
        %v1352 = vpop.f32.mrb[0].mxu0
        %v1353 = vadd.f32 0.0, %v1352
        %v1354 = vpop.f32.mrb[0].mxu0
        %1355 = vmatprep.mubr.bf16.mxu0 0
        %1356 = vmatmul.mubr.bf16.gmra.mrb[0].mxu0 %v1241
        %v1357 = vpop.f32.mrb[0].mxu0
        %v1358 = vadd.f32 0.0, %v1357
        %v1359 = vpop.f32.mrb[0].mxu0
        %v1360 = vpop.f32.mrb[0].mxu0
        %v1361 = vadd.f32 0.0, %v1360
        %v1362 = vpop.f32.mrb[0].mxu0
        %1363 = vmatprep.mubr.bf16.mxu0 0
        %1364 = vmatmul.mubr.bf16.gmra.mrb[0].mxu0 %v1244
        %v1365 = vpop.f32.mrb[0].mxu0
        %v1366 = vadd.f32 0.0, %v1365
        %v1367 = vpop.f32.mrb[0].mxu0
        %v1368 = vpop.f32.mrb[0].mxu0
        %v1369 = vadd.f32 0.0, %v1368
        %v1370 = vpop.f32.mrb[0].mxu0
        %1371 = vmatprep.mubr.bf16.mxu0 0
        %1372 = vmatmul.mubr.bf16.gmra.mrb[0].mxu0 %v1247
        %v1373 = vpop.f32.mrb[0].mxu0
        %v1374 = vadd.f32 0.0, %v1373
        %v1375 = vpop.f32.mrb[0].mxu0
        %v1376 = vpop.f32.mrb[0].mxu0
        %v1377 = vadd.f32 0.0, %v1376
        %v1378 = vpop.f32.mrb[0].mxu0
        %1379 = vmatprep.mubr.bf16.mxu0 0
        %1380 = vmatmul.mubr.bf16.gmra.mrb[0].mxu0 %v1250
        %v1381 = vpop.f32.mrb[0].mxu0
        %v1382 = vadd.f32 0.0, %v1381
        %v1383 = vpop.f32.mrb[0].mxu0
        %v1384 = vpop.f32.mrb[0].mxu0
        %v1385 = vadd.f32 0.0, %v1384
        %v1386 = vpop.f32.mrb[0].mxu0
        %1387 = vmatprep.mubr.bf16.mxu0 0
        %1388 = vmatmul.mubr.bf16.gmra.mrb[0].mxu0 %v1253
        %v1389 = vpop.f32.mrb[0].mxu0
        %v1390 = vadd.f32 0.0, %v1389
        %v1391 = vpop.f32.mrb[0].mxu0
        %v1392 = vpop.f32.mrb[0].mxu0
        %v1393 = vadd.f32 0.0, %v1392
        %v1394 = vpop.f32.mrb[0].mxu0
        %1395 = vmatprep.mubr.bf16.mxu0 0
        %1396 = vmatmul.mubr.bf16.gmra.mrb[0].mxu0 %v1256
        %v1397 = vpop.f32.mrb[0].mxu0
        %v1398 = vadd.f32 0.0, %v1397
        %v1399 = vpop.f32.mrb[0].mxu0
        %v1400 = vpop.f32.mrb[0].mxu0
        %v1401 = vadd.f32 0.0, %v1400
        %v1402 = vpop.f32.mrb[0].mxu0
        %1403 = vmatprep.mubr.bf16.mxu0 0
        %1404 = vmatmul.mubr.bf16.gmra.mrb[0].mxu0 %v1259
        %v1405 = vpop.f32.mrb[0].mxu0
        %v1406 = vadd.f32 0.0, %v1405
        %v1407 = vpop.f32.mrb[0].mxu0
        %v1408 = vpop.f32.mrb[0].mxu0
        %v1409 = vadd.f32 0.0, %v1408
        %v1410 = vpop.f32.mrb[0].mxu0
        %1411 = vmatprep.mubr.bf16.mxu0 0
        %1412 = vmatmul.mubr.bf16.gmra.mrb[0].mxu0 %v1262
        %v1413 = vpop.f32.mrb[0].mxu0
        %v1414 = vadd.f32 0.0, %v1413
        %v1415 = vpop.f32.mrb[0].mxu0
        %v1416 = vpop.f32.mrb[0].mxu0
        %v1417 = vadd.f32 0.0, %v1416
        %v1418 = vpop.f32.mrb[0].mxu0
        %1419 = vmatprep.mubr.bf16.mxu0 0
        %1420 = vmatmul.mubr.bf16.gmra.mrb[0].mxu0 %v1265
        %v1421 = vpop.f32.mrb[0].mxu0
        %v1422 = vadd.f32 0.0, %v1421
        %v1423 = vpop.f32.mrb[0].mxu0
        %v1424 = vpop.f32.mrb[0].mxu0
        %v1425 = vadd.f32 0.0, %v1424
        %v1426 = vpop.f32.mrb[0].mxu0
        %1427 = vdwg.mxu0
        %v1428 = vadd.f32 %v963, %v1302
        %v1429 = vadd.f32 %v966, %v1305
        %v1430 = vadd.f32 %v971, %v1310
        %v1431 = vadd.f32 %v974, %v1313
        %v1432 = vadd.f32 %v979, %v1318
        %v1433 = vadd.f32 %v982, %v1321
        %v1434 = vadd.f32 %v987, %v1326
        %v1435 = vadd.f32 %v990, %v1329
        %v1436 = vadd.f32 %v995, %v1334
        %v1437 = vadd.f32 %v998, %v1337
        %v1438 = vadd.f32 %v1003, %v1342
        %v1439 = vadd.f32 %v1006, %v1345
        %v1440 = vadd.f32 %v1011, %v1350
        %v1441 = vadd.f32 %v1014, %v1353
        %v1442 = vadd.f32 %v1019, %v1358
        %v1443 = vadd.f32 %v1022, %v1361
        %v1444 = vadd.f32 %v1027, %v1366
        %v1445 = vadd.f32 %v1030, %v1369
        %v1446 = vadd.f32 %v1035, %v1374
        %v1447 = vadd.f32 %v1038, %v1377
        %v1448 = vadd.f32 %v1043, %v1382
        %v1449 = vadd.f32 %v1046, %v1385
        %v1450 = vadd.f32 %v1051, %v1390
        %v1451 = vadd.f32 %v1054, %v1393
        %v1452 = vadd.f32 %v1059, %v1398
        %v1453 = vadd.f32 %v1062, %v1401
        %v1454 = vadd.f32 %v1067, %v1406
        %v1455 = vadd.f32 %v1070, %v1409
        %v1456 = vadd.f32 %v1075, %v1414
        %v1457 = vadd.f32 %v1078, %v1417
        %v1458 = vadd.f32 %v1083, %v1422
        %v1459 = vadd.f32 %v1086, %v1425
        %v1460 = vrot.slane %v442, 3
        %v1461 = vrot.slane %v443, 3
        %v1462 = vrot.slane %v444, 3
        %v1463 = vrot.slane %v445, 3
        %v1464 = vrot.slane %v446, 3
        %v1465 = vrot.slane %v447, 3
        %v1466 = vrot.slane %v448, 3
        %v1467 = vrot.slane %v449, 3
        %v1468 = vrot.slane %v450, 3
        %v1469 = vrot.slane %v451, 3
        %v1470 = vrot.slane %v452, 3
        %v1471 = vrot.slane %v453, 3
        %v1472 = vrot.slane %v454, 3
        %v1473 = vrot.slane %v455, 3
        %v1474 = vrot.slane %v456, 3
        %v1475 = vrot.slane %v457, 3
        %v1476 = vrot.slane %v458, 3
        %v1477 = vrot.slane %v459, 3
        %v1478 = vrot.slane %v460, 3
        %v1479 = vrot.slane %v461, 3
        %v1480 = vrot.slane %v462, 3
        %v1481 = vrot.slane %v463, 3
        %v1482 = vrot.slane %v464, 3
        %v1483 = vrot.slane %v465, 3
        %v1484 = vrot.slane %v466, 3
        %v1485 = vrot.slane %v467, 3
        %v1486 = vrot.slane %v468, 3
        %v1487 = vrot.slane %v469, 3
        %v1488 = vrot.slane %v470, 3
        %v1489 = vrot.slane %v471, 3
        %v1490 = vrot.slane %v472, 3
        %v1491 = vrot.slane %v473, 3
        %vm1492 = vcmp.lt.s32.totalorder %v535, 5
        %v1493 = vsel %vm1492, %v1490, %v1491
        %v1494 = vsel %vm1492, %v1489, %v1490
        %v1495 = vsel %vm1492, %v1488, %v1489
        %v1496 = vsel %vm1492, %v1487, %v1488
        %v1497 = vsel %vm1492, %v1486, %v1487
        %v1498 = vsel %vm1492, %v1485, %v1486
        %v1499 = vsel %vm1492, %v1484, %v1485
        %v1500 = vsel %vm1492, %v1483, %v1484
        %v1501 = vsel %vm1492, %v1482, %v1483
        %v1502 = vsel %vm1492, %v1481, %v1482
        %v1503 = vsel %vm1492, %v1480, %v1481
        %v1504 = vsel %vm1492, %v1479, %v1480
        %v1505 = vsel %vm1492, %v1478, %v1479
        %v1506 = vsel %vm1492, %v1477, %v1478
        %v1507 = vsel %vm1492, %v1476, %v1477
        %v1508 = vsel %vm1492, %v1475, %v1476
        %v1509 = vsel %vm1492, %v1474, %v1475
        %v1510 = vsel %vm1492, %v1473, %v1474
        %v1511 = vsel %vm1492, %v1472, %v1473
        %v1512 = vsel %vm1492, %v1471, %v1472
        %v1513 = vsel %vm1492, %v1470, %v1471
        %v1514 = vsel %vm1492, %v1469, %v1470
        %v1515 = vsel %vm1492, %v1468, %v1469
        %v1516 = vsel %vm1492, %v1467, %v1468
        %v1517 = vsel %vm1492, %v1466, %v1467
        %v1518 = vsel %vm1492, %v1465, %v1466
        %v1519 = vsel %vm1492, %v1464, %v1465
        %v1520 = vsel %vm1492, %v1463, %v1464
        %v1521 = vsel %vm1492, %v1462, %v1463
        %v1522 = vsel %vm1492, %v1461, %v1462
        %v1523 = vsel %vm1492, %v1460, %v1461
        %v1524 = vsel %vm1492, %v1491, %v1460
        %v1525 = vpack.c.bf16 %v1522, %v1523
        %v1526 = vpack.c.bf16 %v1520, %v1521
        %v1527 = vpack.c.bf16 %v1518, %v1519
        %v1528 = vpack.c.bf16 %v1516, %v1517
        %v1529 = vpack.c.bf16 %v1514, %v1515
        %v1530 = vpack.c.bf16 %v1512, %v1513
        %v1531 = vpack.c.bf16 %v1510, %v1511
        %v1532 = vpack.c.bf16 %v1508, %v1509
        %v1533 = vpack.c.bf16 %v1506, %v1507
        %v1534 = vpack.c.bf16 %v1504, %v1505
        %v1535 = vpack.c.bf16 %v1502, %v1503
        %v1536 = vpack.c.bf16 %v1500, %v1501
        %v1537 = vpack.c.bf16 %v1498, %v1499
        %v1538 = vpack.c.bf16 %v1496, %v1497
        %v1539 = vpack.c.bf16 %v1494, %v1495
        %v1540 = vpack.c.bf16 %v1524, %v1493
        %s1541 = scalar_lea.vmem %s1, 144
        %v1542 = vld [vmem:[%s1541] sm:$0xf]
        %v1543 = vld [vmem:[%s1541 + $0x4] sm:$0xf]
        %v1544 = vld [vmem:[%s1541 + $0x8] sm:$0xf]
        %v1545 = vld [vmem:[%s1541 + $0xc] sm:$0xf]
        %v1546 = vld [vmem:[%s1541 + $0x10] sm:$0xf]
        %v1547 = vld [vmem:[%s1541 + $0x14] sm:$0xf]
        %v1548 = vld [vmem:[%s1541 + $0x18] sm:$0xf]
        %v1549 = vld [vmem:[%s1541 + $0x1c] sm:$0xf]
        %v1550 = vld [vmem:[%s1541 + $0x20] sm:$0xf]
        %v1551 = vld [vmem:[%s1541 + $0x24] sm:$0xf]
        %v1552 = vld [vmem:[%s1541 + $0x28] sm:$0xf]
        %v1553 = vld [vmem:[%s1541 + $0x2c] sm:$0xf]
        %v1566 = vunpack.c.l.b16 %v1542
        %v1567 = vunpack.c.l.b16 %v1543
        %v1568 = vunpack.c.l.b16 %v1544
        %v1569 = vunpack.c.l.b16 %v1545
        %v1570 = vunpack.c.l.b16 %v1546
        %v1571 = vunpack.c.l.b16 %v1547
        %v1572 = vunpack.c.l.b16 %v1548
        %v1573 = vunpack.c.l.b16 %v1549
        %v1574 = vunpack.c.l.b16 %v1550
        %v1575 = vunpack.c.l.b16 %v1551
        %v1576 = vunpack.c.l.b16 %v1552
        %v1577 = vunpack.c.l.b16 %v1553
        %v1578 = vpack.c.b16 %v1567, %v1566
        %v1579 = vpack.c.b16 %v1569, %v1568
        %v1580 = vpack.c.b16 %v1571, %v1570
        %v1581 = vpack.c.b16 %v1573, %v1572
        %v1582 = vpack.c.b16 %v1575, %v1574
        %v1583 = vpack.c.b16 %v1577, %v1576
        %v1591 = vsel %vm634, %v1525, 0
        %v1594 = vsel %vm634, %v1526, 0
        %v1597 = vsel %vm634, %v1527, 0
        %v1600 = vsel %vm634, %v1528, 0
        %v1603 = vsel %vm634, %v1529, 0
        %v1606 = vsel %vm634, %v1530, 0
        %v1609 = vsel %vm634, %v1531, 0
        %v1612 = vsel %vm634, %v1532, 0
        %v1615 = vsel %vm634, %v1533, 0
        %v1618 = vsel %vm634, %v1534, 0
        %v1621 = vsel %vm634, %v1535, 0
        %v1624 = vsel %vm634, %v1536, 0
        %v1627 = vsel %vm634, %v1537, 0
        %v1630 = vsel %vm634, %v1538, 0
        %v1633 = vsel %vm634, %v1539, 0
        %v1636 = vsel %vm634, %v1540, 0
        %1638 = vmatprep.subr.bf16.mxu0 0
        %1639 = vmatpush1.bf16.msra.mxu0 %v1578
        %1640 = vmatprep.subr.bf16.mxu0 0
        %1641 = vmatpush1.bf16.msra.mxu0 %v1579
        %1642 = vmatprep.subr.bf16.mxu0 0
        %1643 = vmatpush1.bf16.msra.mxu0 %v1580
        %1644 = vmatprep.subr.bf16.mxu0 0
        %1645 = vmatpush1.bf16.msra.mxu0 %v1581
        %1646 = vmatprep.subr.bf16.mxu0 0
        %1647 = vmatpush1.bf16.msra.mxu0 %v1582
        %1648 = vmatprep.subr.bf16.mxu0 0
        %1649 = vmatpush1.bf16.msra.mxu0 %v1583
        %1650 = vmatprep.subr.bf16.mxu0 0
        %1651 = vmatpush1.bf16.msra.mxu0 0
        %1652 = vmatprep.subr.bf16.mxu0 0
        %1653 = vmatpush1.bf16.msra.mxu0 0
        %1654 = vmatprep.subr.bf16.mxu0 0
        %1655 = vmatpush1.bf16.msra.mxu0 0
        %1656 = vmatprep.subr.bf16.mxu0 0
        %1657 = vmatpush1.bf16.msra.mxu0 0
        %1658 = vmatprep.subr.bf16.mxu0 0
        %1659 = vmatpush1.bf16.msra.mxu0 0
        %1660 = vmatprep.subr.bf16.mxu0 0
        %1661 = vmatpush1.bf16.msra.mxu0 0
        %1662 = vmatprep.subr.bf16.mxu0 0
        %1663 = vmatpush1.bf16.msra.mxu0 0
        %1664 = vmatprep.subr.bf16.mxu0 0
        %1665 = vmatpush1.bf16.msra.mxu0 0
        %1666 = vmatprep.subr.bf16.mxu0 0
        %1667 = vmatpush1.bf16.msra.mxu0 0
        %1668 = vmatprep.subr.bf16.mxu0 0
        %1669 = vmatpush1.bf16.msra.mxu0 0
        %1670 = vmatprep.mubr.bf16.mxu0 0
        %1671 = vmatmul.mubr.bf16.gmra.mrb[0].mxu0 %v1591
        %v1672 = vpop.f32.mrb[0].mxu0
        %v1673 = vadd.f32 0.0, %v1672
        %v1674 = vpop.f32.mrb[0].mxu0
        %v1675 = vpop.f32.mrb[0].mxu0
        %v1676 = vadd.f32 0.0, %v1675
        %v1677 = vpop.f32.mrb[0].mxu0
        %1678 = vmatprep.mubr.bf16.mxu0 0
        %1679 = vmatmul.mubr.bf16.gmra.mrb[0].mxu0 %v1594
        %v1680 = vpop.f32.mrb[0].mxu0
        %v1681 = vadd.f32 0.0, %v1680
        %v1682 = vpop.f32.mrb[0].mxu0
        %v1683 = vpop.f32.mrb[0].mxu0
        %v1684 = vadd.f32 0.0, %v1683
        %v1685 = vpop.f32.mrb[0].mxu0
        %1686 = vmatprep.mubr.bf16.mxu0 0
        %1687 = vmatmul.mubr.bf16.gmra.mrb[0].mxu0 %v1597
        %v1688 = vpop.f32.mrb[0].mxu0
        %v1689 = vadd.f32 0.0, %v1688
        %v1690 = vpop.f32.mrb[0].mxu0
        %v1691 = vpop.f32.mrb[0].mxu0
        %v1692 = vadd.f32 0.0, %v1691
        %v1693 = vpop.f32.mrb[0].mxu0
        %1694 = vmatprep.mubr.bf16.mxu0 0
        %1695 = vmatmul.mubr.bf16.gmra.mrb[0].mxu0 %v1600
        %v1696 = vpop.f32.mrb[0].mxu0
        %v1697 = vadd.f32 0.0, %v1696
        %v1698 = vpop.f32.mrb[0].mxu0
        %v1699 = vpop.f32.mrb[0].mxu0
        %v1700 = vadd.f32 0.0, %v1699
        %v1701 = vpop.f32.mrb[0].mxu0
        %1702 = vmatprep.mubr.bf16.mxu0 0
        %1703 = vmatmul.mubr.bf16.gmra.mrb[0].mxu0 %v1603
        %v1704 = vpop.f32.mrb[0].mxu0
        %v1705 = vadd.f32 0.0, %v1704
        %v1706 = vpop.f32.mrb[0].mxu0
        %v1707 = vpop.f32.mrb[0].mxu0
        %v1708 = vadd.f32 0.0, %v1707
        %v1709 = vpop.f32.mrb[0].mxu0
        %1710 = vmatprep.mubr.bf16.mxu0 0
        %1711 = vmatmul.mubr.bf16.gmra.mrb[0].mxu0 %v1606
        %v1712 = vpop.f32.mrb[0].mxu0
        %v1713 = vadd.f32 0.0, %v1712
        %v1714 = vpop.f32.mrb[0].mxu0
        %v1715 = vpop.f32.mrb[0].mxu0
        %v1716 = vadd.f32 0.0, %v1715
        %v1717 = vpop.f32.mrb[0].mxu0
        %1718 = vmatprep.mubr.bf16.mxu0 0
        %1719 = vmatmul.mubr.bf16.gmra.mrb[0].mxu0 %v1609
        %v1720 = vpop.f32.mrb[0].mxu0
        %v1721 = vadd.f32 0.0, %v1720
        %v1722 = vpop.f32.mrb[0].mxu0
        %v1723 = vpop.f32.mrb[0].mxu0
        %v1724 = vadd.f32 0.0, %v1723
        %v1725 = vpop.f32.mrb[0].mxu0
        %1726 = vmatprep.mubr.bf16.mxu0 0
        %1727 = vmatmul.mubr.bf16.gmra.mrb[0].mxu0 %v1612
        %v1728 = vpop.f32.mrb[0].mxu0
        %v1729 = vadd.f32 0.0, %v1728
        %v1730 = vpop.f32.mrb[0].mxu0
        %v1731 = vpop.f32.mrb[0].mxu0
        %v1732 = vadd.f32 0.0, %v1731
        %v1733 = vpop.f32.mrb[0].mxu0
        %1734 = vmatprep.mubr.bf16.mxu0 0
        %1735 = vmatmul.mubr.bf16.gmra.mrb[0].mxu0 %v1615
        %v1736 = vpop.f32.mrb[0].mxu0
        %v1737 = vadd.f32 0.0, %v1736
        %v1738 = vpop.f32.mrb[0].mxu0
        %v1739 = vpop.f32.mrb[0].mxu0
        %v1740 = vadd.f32 0.0, %v1739
        %v1741 = vpop.f32.mrb[0].mxu0
        %1742 = vmatprep.mubr.bf16.mxu0 0
        %1743 = vmatmul.mubr.bf16.gmra.mrb[0].mxu0 %v1618
        %v1744 = vpop.f32.mrb[0].mxu0
        %v1745 = vadd.f32 0.0, %v1744
        %v1746 = vpop.f32.mrb[0].mxu0
        %v1747 = vpop.f32.mrb[0].mxu0
        %v1748 = vadd.f32 0.0, %v1747
        %v1749 = vpop.f32.mrb[0].mxu0
        %1750 = vmatprep.mubr.bf16.mxu0 0
        %1751 = vmatmul.mubr.bf16.gmra.mrb[0].mxu0 %v1621
        %v1752 = vpop.f32.mrb[0].mxu0
        %v1753 = vadd.f32 0.0, %v1752
        %v1754 = vpop.f32.mrb[0].mxu0
        %v1755 = vpop.f32.mrb[0].mxu0
        %v1756 = vadd.f32 0.0, %v1755
        %v1757 = vpop.f32.mrb[0].mxu0
        %1758 = vmatprep.mubr.bf16.mxu0 0
        %1759 = vmatmul.mubr.bf16.gmra.mrb[0].mxu0 %v1624
        %v1760 = vpop.f32.mrb[0].mxu0
        %v1761 = vadd.f32 0.0, %v1760
        %v1762 = vpop.f32.mrb[0].mxu0
        %v1763 = vpop.f32.mrb[0].mxu0
        %v1764 = vadd.f32 0.0, %v1763
        %v1765 = vpop.f32.mrb[0].mxu0
        %1766 = vmatprep.mubr.bf16.mxu0 0
        %1767 = vmatmul.mubr.bf16.gmra.mrb[0].mxu0 %v1627
        %v1768 = vpop.f32.mrb[0].mxu0
        %v1769 = vadd.f32 0.0, %v1768
        %v1770 = vpop.f32.mrb[0].mxu0
        %v1771 = vpop.f32.mrb[0].mxu0
        %v1772 = vadd.f32 0.0, %v1771
        %v1773 = vpop.f32.mrb[0].mxu0
        %1774 = vmatprep.mubr.bf16.mxu0 0
        %1775 = vmatmul.mubr.bf16.gmra.mrb[0].mxu0 %v1630
        %v1776 = vpop.f32.mrb[0].mxu0
        %v1777 = vadd.f32 0.0, %v1776
        %v1778 = vpop.f32.mrb[0].mxu0
        %v1779 = vpop.f32.mrb[0].mxu0
        %v1780 = vadd.f32 0.0, %v1779
        %v1781 = vpop.f32.mrb[0].mxu0
        %1782 = vmatprep.mubr.bf16.mxu0 0
        %1783 = vmatmul.mubr.bf16.gmra.mrb[0].mxu0 %v1633
        %v1784 = vpop.f32.mrb[0].mxu0
        %v1785 = vadd.f32 0.0, %v1784
        %v1786 = vpop.f32.mrb[0].mxu0
        %v1787 = vpop.f32.mrb[0].mxu0
        %v1788 = vadd.f32 0.0, %v1787
        %v1789 = vpop.f32.mrb[0].mxu0
        %1790 = vmatprep.mubr.bf16.mxu0 0
        %1791 = vmatmul.mubr.bf16.gmra.mrb[0].mxu0 %v1636
        %v1792 = vpop.f32.mrb[0].mxu0
        %v1793 = vadd.f32 0.0, %v1792
        %v1794 = vpop.f32.mrb[0].mxu0
        %v1795 = vpop.f32.mrb[0].mxu0
        %v1796 = vadd.f32 0.0, %v1795
        %v1797 = vpop.f32.mrb[0].mxu0
        %1798 = vdwg.mxu0
        %v1799 = vadd.f32 %v1428, %v1673
        %v1800 = vadd.f32 %v1429, %v1676
        %v1801 = vadd.f32 %v1430, %v1681
        %v1802 = vadd.f32 %v1431, %v1684
        %v1803 = vadd.f32 %v1432, %v1689
        %v1804 = vadd.f32 %v1433, %v1692
        %v1805 = vadd.f32 %v1434, %v1697
        %v1806 = vadd.f32 %v1435, %v1700
        %v1807 = vadd.f32 %v1436, %v1705
        %v1808 = vadd.f32 %v1437, %v1708
        %v1809 = vadd.f32 %v1438, %v1713
        %v1810 = vadd.f32 %v1439, %v1716
        %v1811 = vadd.f32 %v1440, %v1721
        %v1812 = vadd.f32 %v1441, %v1724
        %v1813 = vadd.f32 %v1442, %v1729
        %v1814 = vadd.f32 %v1443, %v1732
        %v1815 = vadd.f32 %v1444, %v1737
        %v1816 = vadd.f32 %v1445, %v1740
        %v1817 = vadd.f32 %v1446, %v1745
        %v1818 = vadd.f32 %v1447, %v1748
        %v1819 = vadd.f32 %v1448, %v1753
        %v1820 = vadd.f32 %v1449, %v1756
        %v1821 = vadd.f32 %v1450, %v1761
        %v1822 = vadd.f32 %v1451, %v1764
        %v1823 = vadd.f32 %v1452, %v1769
        %v1824 = vadd.f32 %v1453, %v1772
        %v1825 = vadd.f32 %v1454, %v1777
        %v1826 = vadd.f32 %v1455, %v1780
        %v1827 = vadd.f32 %v1456, %v1785
        %v1828 = vadd.f32 %v1457, %v1788
        %v1829 = vadd.f32 %v1458, %v1793
        %v1830 = vadd.f32 %v1459, %v1796
        %v1831 = vrot.slane %v442, 4
        %v1832 = vrot.slane %v443, 4
        %v1833 = vrot.slane %v444, 4
        %v1834 = vrot.slane %v445, 4
        %v1835 = vrot.slane %v446, 4
        %v1836 = vrot.slane %v447, 4
        %v1837 = vrot.slane %v448, 4
        %v1838 = vrot.slane %v449, 4
        %v1839 = vrot.slane %v450, 4
        %v1840 = vrot.slane %v451, 4
        %v1841 = vrot.slane %v452, 4
        %v1842 = vrot.slane %v453, 4
        %v1843 = vrot.slane %v454, 4
        %v1844 = vrot.slane %v455, 4
        %v1845 = vrot.slane %v456, 4
        %v1846 = vrot.slane %v457, 4
        %v1847 = vrot.slane %v458, 4
        %v1848 = vrot.slane %v459, 4
        %v1849 = vrot.slane %v460, 4
        %v1850 = vrot.slane %v461, 4
        %v1851 = vrot.slane %v462, 4
        %v1852 = vrot.slane %v463, 4
        %v1853 = vrot.slane %v464, 4
        %v1854 = vrot.slane %v465, 4
        %v1855 = vrot.slane %v466, 4
        %v1856 = vrot.slane %v467, 4
        %v1857 = vrot.slane %v468, 4
        %v1858 = vrot.slane %v469, 4
        %v1859 = vrot.slane %v470, 4
        %v1860 = vrot.slane %v471, 4
        %v1861 = vrot.slane %v472, 4
        %v1862 = vrot.slane %v473, 4
        %vm1863 = vcmp.lt.s32.totalorder %v535, 4
        %v1864 = vsel %vm1863, %v1861, %v1862
        %v1865 = vsel %vm1863, %v1860, %v1861
        %v1866 = vsel %vm1863, %v1859, %v1860
        %v1867 = vsel %vm1863, %v1858, %v1859
        %v1868 = vsel %vm1863, %v1857, %v1858
        %v1869 = vsel %vm1863, %v1856, %v1857
        %v1870 = vsel %vm1863, %v1855, %v1856
        %v1871 = vsel %vm1863, %v1854, %v1855
        %v1872 = vsel %vm1863, %v1853, %v1854
        %v1873 = vsel %vm1863, %v1852, %v1853
        %v1874 = vsel %vm1863, %v1851, %v1852
        %v1875 = vsel %vm1863, %v1850, %v1851
        %v1876 = vsel %vm1863, %v1849, %v1850
        %v1877 = vsel %vm1863, %v1848, %v1849
        %v1878 = vsel %vm1863, %v1847, %v1848
        %v1879 = vsel %vm1863, %v1846, %v1847
        %v1880 = vsel %vm1863, %v1845, %v1846
        %v1881 = vsel %vm1863, %v1844, %v1845
        %v1882 = vsel %vm1863, %v1843, %v1844
        %v1883 = vsel %vm1863, %v1842, %v1843
        %v1884 = vsel %vm1863, %v1841, %v1842
        %v1885 = vsel %vm1863, %v1840, %v1841
        %v1886 = vsel %vm1863, %v1839, %v1840
        %v1887 = vsel %vm1863, %v1838, %v1839
        %v1888 = vsel %vm1863, %v1837, %v1838
        %v1889 = vsel %vm1863, %v1836, %v1837
        %v1890 = vsel %vm1863, %v1835, %v1836
        %v1891 = vsel %vm1863, %v1834, %v1835
        %v1892 = vsel %vm1863, %v1833, %v1834
        %v1893 = vsel %vm1863, %v1832, %v1833
        %v1894 = vsel %vm1863, %v1831, %v1832
        %v1895 = vsel %vm1863, %v1862, %v1831
        %v1896 = vpack.c.bf16 %v1893, %v1894
        %v1897 = vpack.c.bf16 %v1891, %v1892
        %v1898 = vpack.c.bf16 %v1889, %v1890
        %v1899 = vpack.c.bf16 %v1887, %v1888
        %v1900 = vpack.c.bf16 %v1885, %v1886
        %v1901 = vpack.c.bf16 %v1883, %v1884
        %v1902 = vpack.c.bf16 %v1881, %v1882
        %v1903 = vpack.c.bf16 %v1879, %v1880
        %v1904 = vpack.c.bf16 %v1877, %v1878
        %v1905 = vpack.c.bf16 %v1875, %v1876
        %v1906 = vpack.c.bf16 %v1873, %v1874
        %v1907 = vpack.c.bf16 %v1871, %v1872
        %v1908 = vpack.c.bf16 %v1869, %v1870
        %v1909 = vpack.c.bf16 %v1867, %v1868
        %v1910 = vpack.c.bf16 %v1865, %v1866
        %v1911 = vpack.c.bf16 %v1895, %v1864
        %s1912 = scalar_lea.vmem %s1, 192
        %v1913 = vld [vmem:[%s1912] sm:$0xf]
        %v1914 = vld [vmem:[%s1912 + $0x4] sm:$0xf]
        %v1915 = vld [vmem:[%s1912 + $0x8] sm:$0xf]
        %v1916 = vld [vmem:[%s1912 + $0xc] sm:$0xf]
        %v1917 = vld [vmem:[%s1912 + $0x10] sm:$0xf]
        %v1918 = vld [vmem:[%s1912 + $0x14] sm:$0xf]
        %v1919 = vld [vmem:[%s1912 + $0x18] sm:$0xf]
        %v1920 = vld [vmem:[%s1912 + $0x1c] sm:$0xf]
        %v1921 = vld [vmem:[%s1912 + $0x20] sm:$0xf]
        %v1922 = vld [vmem:[%s1912 + $0x24] sm:$0xf]
        %v1923 = vld [vmem:[%s1912 + $0x28] sm:$0xf]
        %v1924 = vld [vmem:[%s1912 + $0x2c] sm:$0xf]
        %v1937 = vunpack.c.l.b16 %v1913
        %v1938 = vunpack.c.l.b16 %v1914
        %v1939 = vunpack.c.l.b16 %v1915
        %v1940 = vunpack.c.l.b16 %v1916
        %v1941 = vunpack.c.l.b16 %v1917
        %v1942 = vunpack.c.l.b16 %v1918
        %v1943 = vunpack.c.l.b16 %v1919
        %v1944 = vunpack.c.l.b16 %v1920
        %v1945 = vunpack.c.l.b16 %v1921
        %v1946 = vunpack.c.l.b16 %v1922
        %v1947 = vunpack.c.l.b16 %v1923
        %v1948 = vunpack.c.l.b16 %v1924
        %v1949 = vpack.c.b16 %v1938, %v1937
        %v1950 = vpack.c.b16 %v1940, %v1939
        %v1951 = vpack.c.b16 %v1942, %v1941
        %v1952 = vpack.c.b16 %v1944, %v1943
        %v1953 = vpack.c.b16 %v1946, %v1945
        %v1954 = vpack.c.b16 %v1948, %v1947
        %v1962 = vsel %vm634, %v1896, 0
        %v1965 = vsel %vm634, %v1897, 0
        %v1968 = vsel %vm634, %v1898, 0
        %v1971 = vsel %vm634, %v1899, 0
        %v1974 = vsel %vm634, %v1900, 0
        %v1977 = vsel %vm634, %v1901, 0
        %v1980 = vsel %vm634, %v1902, 0
        %v1983 = vsel %vm634, %v1903, 0
        %v1986 = vsel %vm634, %v1904, 0
        %v1989 = vsel %vm634, %v1905, 0
        %v1992 = vsel %vm634, %v1906, 0
        %v1995 = vsel %vm634, %v1907, 0
        %v1998 = vsel %vm634, %v1908, 0
        %v2001 = vsel %vm634, %v1909, 0
        %v2004 = vsel %vm634, %v1910, 0
        %v2007 = vsel %vm634, %v1911, 0
        %2009 = vmatprep.subr.bf16.mxu0 0
        %2010 = vmatpush1.bf16.msra.mxu0 %v1949
        %2011 = vmatprep.subr.bf16.mxu0 0
        %2012 = vmatpush1.bf16.msra.mxu0 %v1950
        %2013 = vmatprep.subr.bf16.mxu0 0
        %2014 = vmatpush1.bf16.msra.mxu0 %v1951
        %2015 = vmatprep.subr.bf16.mxu0 0
        %2016 = vmatpush1.bf16.msra.mxu0 %v1952
        %2017 = vmatprep.subr.bf16.mxu0 0
        %2018 = vmatpush1.bf16.msra.mxu0 %v1953
        %2019 = vmatprep.subr.bf16.mxu0 0
        %2020 = vmatpush1.bf16.msra.mxu0 %v1954
        %2021 = vmatprep.subr.bf16.mxu0 0
        %2022 = vmatpush1.bf16.msra.mxu0 0
        %2023 = vmatprep.subr.bf16.mxu0 0
        %2024 = vmatpush1.bf16.msra.mxu0 0
        %2025 = vmatprep.subr.bf16.mxu0 0
        %2026 = vmatpush1.bf16.msra.mxu0 0
        %2027 = vmatprep.subr.bf16.mxu0 0
        %2028 = vmatpush1.bf16.msra.mxu0 0
        %2029 = vmatprep.subr.bf16.mxu0 0
        %2030 = vmatpush1.bf16.msra.mxu0 0
        %2031 = vmatprep.subr.bf16.mxu0 0
        %2032 = vmatpush1.bf16.msra.mxu0 0
        %2033 = vmatprep.subr.bf16.mxu0 0
        %2034 = vmatpush1.bf16.msra.mxu0 0
        %2035 = vmatprep.subr.bf16.mxu0 0
        %2036 = vmatpush1.bf16.msra.mxu0 0
        %2037 = vmatprep.subr.bf16.mxu0 0
        %2038 = vmatpush1.bf16.msra.mxu0 0
        %2039 = vmatprep.subr.bf16.mxu0 0
        %2040 = vmatpush1.bf16.msra.mxu0 0
        %2041 = vmatprep.mubr.bf16.mxu0 0
        %2042 = vmatmul.mubr.bf16.gmra.mrb[0].mxu0 %v1962
        %v2043 = vpop.f32.mrb[0].mxu0
        %v2044 = vadd.f32 0.0, %v2043
        %v2045 = vpop.f32.mrb[0].mxu0
        %v2046 = vpop.f32.mrb[0].mxu0
        %v2047 = vadd.f32 0.0, %v2046
        %v2048 = vpop.f32.mrb[0].mxu0
        %2049 = vmatprep.mubr.bf16.mxu0 0
        %2050 = vmatmul.mubr.bf16.gmra.mrb[0].mxu0 %v1965
        %v2051 = vpop.f32.mrb[0].mxu0
        %v2052 = vadd.f32 0.0, %v2051
        %v2053 = vpop.f32.mrb[0].mxu0
        %v2054 = vpop.f32.mrb[0].mxu0
        %v2055 = vadd.f32 0.0, %v2054
        %v2056 = vpop.f32.mrb[0].mxu0
        %2057 = vmatprep.mubr.bf16.mxu0 0
        %2058 = vmatmul.mubr.bf16.gmra.mrb[0].mxu0 %v1968
        %v2059 = vpop.f32.mrb[0].mxu0
        %v2060 = vadd.f32 0.0, %v2059
        %v2061 = vpop.f32.mrb[0].mxu0
        %v2062 = vpop.f32.mrb[0].mxu0
        %v2063 = vadd.f32 0.0, %v2062
        %v2064 = vpop.f32.mrb[0].mxu0
        %2065 = vmatprep.mubr.bf16.mxu0 0
        %2066 = vmatmul.mubr.bf16.gmra.mrb[0].mxu0 %v1971
        %v2067 = vpop.f32.mrb[0].mxu0
        %v2068 = vadd.f32 0.0, %v2067
        %v2069 = vpop.f32.mrb[0].mxu0
        %v2070 = vpop.f32.mrb[0].mxu0
        %v2071 = vadd.f32 0.0, %v2070
        %v2072 = vpop.f32.mrb[0].mxu0
        %2073 = vmatprep.mubr.bf16.mxu0 0
        %2074 = vmatmul.mubr.bf16.gmra.mrb[0].mxu0 %v1974
        %v2075 = vpop.f32.mrb[0].mxu0
        %v2076 = vadd.f32 0.0, %v2075
        %v2077 = vpop.f32.mrb[0].mxu0
        %v2078 = vpop.f32.mrb[0].mxu0
        %v2079 = vadd.f32 0.0, %v2078
        %v2080 = vpop.f32.mrb[0].mxu0
        %2081 = vmatprep.mubr.bf16.mxu0 0
        %2082 = vmatmul.mubr.bf16.gmra.mrb[0].mxu0 %v1977
        %v2083 = vpop.f32.mrb[0].mxu0
        %v2084 = vadd.f32 0.0, %v2083
        %v2085 = vpop.f32.mrb[0].mxu0
        %v2086 = vpop.f32.mrb[0].mxu0
        %v2087 = vadd.f32 0.0, %v2086
        %v2088 = vpop.f32.mrb[0].mxu0
        %2089 = vmatprep.mubr.bf16.mxu0 0
        %2090 = vmatmul.mubr.bf16.gmra.mrb[0].mxu0 %v1980
        %v2091 = vpop.f32.mrb[0].mxu0
        %v2092 = vadd.f32 0.0, %v2091
        %v2093 = vpop.f32.mrb[0].mxu0
        %v2094 = vpop.f32.mrb[0].mxu0
        %v2095 = vadd.f32 0.0, %v2094
        %v2096 = vpop.f32.mrb[0].mxu0
        %2097 = vmatprep.mubr.bf16.mxu0 0
        %2098 = vmatmul.mubr.bf16.gmra.mrb[0].mxu0 %v1983
        %v2099 = vpop.f32.mrb[0].mxu0
        %v2100 = vadd.f32 0.0, %v2099
        %v2101 = vpop.f32.mrb[0].mxu0
        %v2102 = vpop.f32.mrb[0].mxu0
        %v2103 = vadd.f32 0.0, %v2102
        %v2104 = vpop.f32.mrb[0].mxu0
        %2105 = vmatprep.mubr.bf16.mxu0 0
        %2106 = vmatmul.mubr.bf16.gmra.mrb[0].mxu0 %v1986
        %v2107 = vpop.f32.mrb[0].mxu0
        %v2108 = vadd.f32 0.0, %v2107
        %v2109 = vpop.f32.mrb[0].mxu0
        %v2110 = vpop.f32.mrb[0].mxu0
        %v2111 = vadd.f32 0.0, %v2110
        %v2112 = vpop.f32.mrb[0].mxu0
        %2113 = vmatprep.mubr.bf16.mxu0 0
        %2114 = vmatmul.mubr.bf16.gmra.mrb[0].mxu0 %v1989
        %v2115 = vpop.f32.mrb[0].mxu0
        %v2116 = vadd.f32 0.0, %v2115
        %v2117 = vpop.f32.mrb[0].mxu0
        %v2118 = vpop.f32.mrb[0].mxu0
        %v2119 = vadd.f32 0.0, %v2118
        %v2120 = vpop.f32.mrb[0].mxu0
        %2121 = vmatprep.mubr.bf16.mxu0 0
        %2122 = vmatmul.mubr.bf16.gmra.mrb[0].mxu0 %v1992
        %v2123 = vpop.f32.mrb[0].mxu0
        %v2124 = vadd.f32 0.0, %v2123
        %v2125 = vpop.f32.mrb[0].mxu0
        %v2126 = vpop.f32.mrb[0].mxu0
        %v2127 = vadd.f32 0.0, %v2126
        %v2128 = vpop.f32.mrb[0].mxu0
        %2129 = vmatprep.mubr.bf16.mxu0 0
        %2130 = vmatmul.mubr.bf16.gmra.mrb[0].mxu0 %v1995
        %v2131 = vpop.f32.mrb[0].mxu0
        %v2132 = vadd.f32 0.0, %v2131
        %v2133 = vpop.f32.mrb[0].mxu0
        %v2134 = vpop.f32.mrb[0].mxu0
        %v2135 = vadd.f32 0.0, %v2134
        %v2136 = vpop.f32.mrb[0].mxu0
        %2137 = vmatprep.mubr.bf16.mxu0 0
        %2138 = vmatmul.mubr.bf16.gmra.mrb[0].mxu0 %v1998
        %v2139 = vpop.f32.mrb[0].mxu0
        %v2140 = vadd.f32 0.0, %v2139
        %v2141 = vpop.f32.mrb[0].mxu0
        %v2142 = vpop.f32.mrb[0].mxu0
        %v2143 = vadd.f32 0.0, %v2142
        %v2144 = vpop.f32.mrb[0].mxu0
        %2145 = vmatprep.mubr.bf16.mxu0 0
        %2146 = vmatmul.mubr.bf16.gmra.mrb[0].mxu0 %v2001
        %v2147 = vpop.f32.mrb[0].mxu0
        %v2148 = vadd.f32 0.0, %v2147
        %v2149 = vpop.f32.mrb[0].mxu0
        %v2150 = vpop.f32.mrb[0].mxu0
        %v2151 = vadd.f32 0.0, %v2150
        %v2152 = vpop.f32.mrb[0].mxu0
        %2153 = vmatprep.mubr.bf16.mxu0 0
        %2154 = vmatmul.mubr.bf16.gmra.mrb[0].mxu0 %v2004
        %v2155 = vpop.f32.mrb[0].mxu0
        %v2156 = vadd.f32 0.0, %v2155
        %v2157 = vpop.f32.mrb[0].mxu0
        %v2158 = vpop.f32.mrb[0].mxu0
        %v2159 = vadd.f32 0.0, %v2158
        %v2160 = vpop.f32.mrb[0].mxu0
        %2161 = vmatprep.mubr.bf16.mxu0 0
        %2162 = vmatmul.mubr.bf16.gmra.mrb[0].mxu0 %v2007
        %v2163 = vpop.f32.mrb[0].mxu0
        %v2164 = vadd.f32 0.0, %v2163
        %v2165 = vpop.f32.mrb[0].mxu0
        %v2166 = vpop.f32.mrb[0].mxu0
        %v2167 = vadd.f32 0.0, %v2166
        %v2168 = vpop.f32.mrb[0].mxu0
        %2169 = vdwg.mxu0
        %v2170 = vadd.f32 %v1799, %v2044
        %v2171 = vadd.f32 %v1800, %v2047
        %v2172 = vadd.f32 %v1801, %v2052
        %v2173 = vadd.f32 %v1802, %v2055
        %v2174 = vadd.f32 %v1803, %v2060
        %v2175 = vadd.f32 %v1804, %v2063
        %v2176 = vadd.f32 %v1805, %v2068
        %v2177 = vadd.f32 %v1806, %v2071
        %v2178 = vadd.f32 %v1807, %v2076
        %v2179 = vadd.f32 %v1808, %v2079
        %v2180 = vadd.f32 %v1809, %v2084
        %v2181 = vadd.f32 %v1810, %v2087
        %v2182 = vadd.f32 %v1811, %v2092
        %v2183 = vadd.f32 %v1812, %v2095
        %v2184 = vadd.f32 %v1813, %v2100
        %v2185 = vadd.f32 %v1814, %v2103
        %v2186 = vadd.f32 %v1815, %v2108
        %v2187 = vadd.f32 %v1816, %v2111
        %v2188 = vadd.f32 %v1817, %v2116
        %v2189 = vadd.f32 %v1818, %v2119
        %v2190 = vadd.f32 %v1819, %v2124
        %v2191 = vadd.f32 %v1820, %v2127
        %v2192 = vadd.f32 %v1821, %v2132
        %v2193 = vadd.f32 %v1822, %v2135
        %v2194 = vadd.f32 %v1823, %v2140
        %v2195 = vadd.f32 %v1824, %v2143
        %v2196 = vadd.f32 %v1825, %v2148
        %v2197 = vadd.f32 %v1826, %v2151
        %v2198 = vadd.f32 %v1827, %v2156
        %v2199 = vadd.f32 %v1828, %v2159
        %v2200 = vadd.f32 %v1829, %v2164
        %v2201 = vadd.f32 %v1830, %v2167
        %v2202 = vld [vmem:[%s2] sm:$0x1]
        %v2204 = vlaneseq
        %v2205 = vshrl.u32 %v2204, 7
        %v2206 = vsub.s32 0, %v2205
        %v2207 = vrot.slane %v2202, %v2206
        %v2209 = vadd.f32 %v2170, %v2207
        %v2210 = vadd.f32 %v2171, %v2207
        %v2211 = vadd.f32 %v2172, %v2207
        %v2212 = vadd.f32 %v2173, %v2207
        %v2213 = vadd.f32 %v2174, %v2207
        %v2214 = vadd.f32 %v2175, %v2207
        %v2215 = vadd.f32 %v2176, %v2207
        %v2216 = vadd.f32 %v2177, %v2207
        %v2217 = vadd.f32 %v2178, %v2207
        %v2218 = vadd.f32 %v2179, %v2207
        %v2219 = vadd.f32 %v2180, %v2207
        %v2220 = vadd.f32 %v2181, %v2207
        %v2221 = vadd.f32 %v2182, %v2207
        %v2222 = vadd.f32 %v2183, %v2207
        %v2223 = vadd.f32 %v2184, %v2207
        %v2224 = vadd.f32 %v2185, %v2207
        %v2225 = vadd.f32 %v2186, %v2207
        %v2226 = vadd.f32 %v2187, %v2207
        %v2227 = vadd.f32 %v2188, %v2207
        %v2228 = vadd.f32 %v2189, %v2207
        %v2229 = vadd.f32 %v2190, %v2207
        %v2230 = vadd.f32 %v2191, %v2207
        %v2231 = vadd.f32 %v2192, %v2207
        %v2232 = vadd.f32 %v2193, %v2207
        %v2233 = vadd.f32 %v2194, %v2207
        %v2234 = vadd.f32 %v2195, %v2207
        %v2235 = vadd.f32 %v2196, %v2207
        %v2236 = vadd.f32 %v2197, %v2207
        %v2237 = vadd.f32 %v2198, %v2207
        %v2238 = vadd.f32 %v2199, %v2207
        %v2239 = vadd.f32 %v2200, %v2207
        %v2240 = vadd.f32 %v2201, %v2207
        %v2241 = vmax.f32 %v2209, 0.0
        %v2242 = vmax.f32 %v2210, 0.0
        %v2243 = vmax.f32 %v2211, 0.0
        %v2244 = vmax.f32 %v2212, 0.0
        %v2245 = vmax.f32 %v2213, 0.0
        %v2246 = vmax.f32 %v2214, 0.0
        %v2247 = vmax.f32 %v2215, 0.0
        %v2248 = vmax.f32 %v2216, 0.0
        %v2249 = vmax.f32 %v2217, 0.0
        %v2250 = vmax.f32 %v2218, 0.0
        %v2251 = vmax.f32 %v2219, 0.0
        %v2252 = vmax.f32 %v2220, 0.0
        %v2253 = vmax.f32 %v2221, 0.0
        %v2254 = vmax.f32 %v2222, 0.0
        %v2255 = vmax.f32 %v2223, 0.0
        %v2256 = vmax.f32 %v2224, 0.0
        %v2257 = vmax.f32 %v2225, 0.0
        %v2258 = vmax.f32 %v2226, 0.0
        %v2259 = vmax.f32 %v2227, 0.0
        %v2260 = vmax.f32 %v2228, 0.0
        %v2261 = vmax.f32 %v2229, 0.0
        %v2262 = vmax.f32 %v2230, 0.0
        %v2263 = vmax.f32 %v2231, 0.0
        %v2264 = vmax.f32 %v2232, 0.0
        %v2265 = vmax.f32 %v2233, 0.0
        %v2266 = vmax.f32 %v2234, 0.0
        %v2267 = vmax.f32 %v2235, 0.0
        %v2268 = vmax.f32 %v2236, 0.0
        %v2269 = vmax.f32 %v2237, 0.0
        %v2270 = vmax.f32 %v2238, 0.0
        %v2271 = vmax.f32 %v2239, 0.0
        %v2272 = vmax.f32 %v2240, 0.0
        %vm2273 = vcmask 916480
        %2274 = vst.msk [vmem:[#allocation2] sm:$0xff] %vm2273, %v2241
        %2275 = vst.msk [vmem:[#allocation2 + $0x8] sm:$0xff] %vm2273, %v2242
        %2276 = vst.msk [vmem:[#allocation2 + $0x10] sm:$0xff] %vm2273, %v2243
        %2277 = vst.msk [vmem:[#allocation2 + $0x18] sm:$0xff] %vm2273, %v2244
        %2278 = vst.msk [vmem:[#allocation2 + $0x20] sm:$0xff] %vm2273, %v2245
        %2279 = vst.msk [vmem:[#allocation2 + $0x28] sm:$0xff] %vm2273, %v2246
        %2280 = vst.msk [vmem:[#allocation2 + $0x30] sm:$0xff] %vm2273, %v2247
        %2281 = vst.msk [vmem:[#allocation2 + $0x38] sm:$0xff] %vm2273, %v2248
        %2282 = vst.msk [vmem:[#allocation2 + $0x40] sm:$0xff] %vm2273, %v2249
        %2283 = vst.msk [vmem:[#allocation2 + $0x48] sm:$0xff] %vm2273, %v2250
        %2284 = vst.msk [vmem:[#allocation2 + $0x50] sm:$0xff] %vm2273, %v2251
        %2285 = vst.msk [vmem:[#allocation2 + $0x58] sm:$0xff] %vm2273, %v2252
        %2286 = vst.msk [vmem:[#allocation2 + $0x60] sm:$0xff] %vm2273, %v2253
        %2287 = vst.msk [vmem:[#allocation2 + $0x68] sm:$0xff] %vm2273, %v2254
        %2288 = vst.msk [vmem:[#allocation2 + $0x70] sm:$0xff] %vm2273, %v2255
        %2289 = vst.msk [vmem:[#allocation2 + $0x78] sm:$0xff] %vm2273, %v2256
        %2290 = vst.msk [vmem:[#allocation2 + $0x80] sm:$0xff] %vm2273, %v2257
        %2291 = vst.msk [vmem:[#allocation2 + $0x88] sm:$0xff] %vm2273, %v2258
        %2292 = vst.msk [vmem:[#allocation2 + $0x90] sm:$0xff] %vm2273, %v2259
        %2293 = vst.msk [vmem:[#allocation2 + $0x98] sm:$0xff] %vm2273, %v2260
        %2294 = vst.msk [vmem:[#allocation2 + $0xa0] sm:$0xff] %vm2273, %v2261
        %2295 = vst.msk [vmem:[#allocation2 + $0xa8] sm:$0xff] %vm2273, %v2262
        %2296 = vst.msk [vmem:[#allocation2 + $0xb0] sm:$0xff] %vm2273, %v2263
        %2297 = vst.msk [vmem:[#allocation2 + $0xb8] sm:$0xff] %vm2273, %v2264
        %2298 = vst.msk [vmem:[#allocation2 + $0xc0] sm:$0xff] %vm2273, %v2265
        %2299 = vst.msk [vmem:[#allocation2 + $0xc8] sm:$0xff] %vm2273, %v2266
        %2300 = vst.msk [vmem:[#allocation2 + $0xd0] sm:$0xff] %vm2273, %v2267
        %2301 = vst.msk [vmem:[#allocation2 + $0xd8] sm:$0xff] %vm2273, %v2268
        %2302 = vst.msk [vmem:[#allocation2 + $0xe0] sm:$0xff] %vm2273, %v2269
        %2303 = vst.msk [vmem:[#allocation2 + $0xe8] sm:$0xff] %vm2273, %v2270
        %2304 = vst.msk [vmem:[#allocation2 + $0xf0] sm:$0xff] %vm2273, %v2271
        %2305 = vst.msk [vmem:[#allocation2 + $0xf8] sm:$0xff] %vm2273, %v2272
        %v2306 = vld [vmem:[#allocation2] ss:$2 sm:$0xff]
        %s2307 = scalar_lea.vmem [#allocation2], 16
        %v2308 = vld [vmem:[%s2307] ss:$2 sm:$0xff]
        %s2309 = scalar_lea.vmem [#allocation2], 32
        %v2310 = vld [vmem:[%s2309] ss:$2 sm:$0xff]
        %s2311 = scalar_lea.vmem [#allocation2], 48
        %v2312 = vld [vmem:[%s2311] ss:$2 sm:$0xff]
        %s2313 = scalar_lea.vmem [#allocation2], 64
        %v2314 = vld [vmem:[%s2313] ss:$2 sm:$0xff]
        %s2315 = scalar_lea.vmem [#allocation2], 80
        %v2316 = vld [vmem:[%s2315] ss:$2 sm:$0xff]
        %s2317 = scalar_lea.vmem [#allocation2], 96
        %v2318 = vld [vmem:[%s2317] ss:$2 sm:$0xff]
        %s2319 = scalar_lea.vmem [#allocation2], 112
        %v2320 = vld [vmem:[%s2319] ss:$2 sm:$0xff]
        %s2321 = scalar_lea.vmem [#allocation2], 128
        %v2322 = vld [vmem:[%s2321] ss:$2 sm:$0xff]
        %s2323 = scalar_lea.vmem [#allocation2], 144
        %v2324 = vld [vmem:[%s2323] ss:$2 sm:$0xff]
        %s2325 = scalar_lea.vmem [#allocation2], 160
        %v2326 = vld [vmem:[%s2325] ss:$2 sm:$0xff]
        %s2327 = scalar_lea.vmem [#allocation2], 176
        %v2328 = vld [vmem:[%s2327] ss:$2 sm:$0xff]
        %s2329 = scalar_lea.vmem [#allocation2], 192
        %v2330 = vld [vmem:[%s2329] ss:$2 sm:$0xff]
        %s2331 = scalar_lea.vmem [#allocation2], 208
        %v2332 = vld [vmem:[%s2331] ss:$2 sm:$0xff]
        %s2333 = scalar_lea.vmem [#allocation2], 224
        %v2334 = vld [vmem:[%s2333] ss:$2 sm:$0xff]
        %s2335 = scalar_lea.vmem [#allocation2], 240
        %v2336 = vld [vmem:[%s2335] ss:$2 sm:$0xff]
        %s2337 = scalar_lea.vmem [#allocation2], 1
        %v2338 = vld [vmem:[%s2337] ss:$2 sm:$0xff]
        %s2339 = scalar_lea.vmem [#allocation2], 17
        %v2340 = vld [vmem:[%s2339] ss:$2 sm:$0xff]
        %s2341 = scalar_lea.vmem [#allocation2], 33
        %v2342 = vld [vmem:[%s2341] ss:$2 sm:$0xff]
        %s2343 = scalar_lea.vmem [#allocation2], 49
        %v2344 = vld [vmem:[%s2343] ss:$2 sm:$0xff]
        %s2345 = scalar_lea.vmem [#allocation2], 65
        %v2346 = vld [vmem:[%s2345] ss:$2 sm:$0xff]
        %s2347 = scalar_lea.vmem [#allocation2], 81
        %v2348 = vld [vmem:[%s2347] ss:$2 sm:$0xff]
        %s2349 = scalar_lea.vmem [#allocation2], 97
        %v2350 = vld [vmem:[%s2349] ss:$2 sm:$0xff]
        %s2351 = scalar_lea.vmem [#allocation2], 113
        %v2352 = vld [vmem:[%s2351] ss:$2 sm:$0xff]
        %s2353 = scalar_lea.vmem [#allocation2], 129
        %v2354 = vld [vmem:[%s2353] ss:$2 sm:$0xff]
        %s2355 = scalar_lea.vmem [#allocation2], 145
        %v2356 = vld [vmem:[%s2355] ss:$2 sm:$0xff]
        %s2357 = scalar_lea.vmem [#allocation2], 161
        %v2358 = vld [vmem:[%s2357] ss:$2 sm:$0xff]
        %s2359 = scalar_lea.vmem [#allocation2], 177
        %v2360 = vld [vmem:[%s2359] ss:$2 sm:$0xff]
        %s2361 = scalar_lea.vmem [#allocation2], 193
        %v2362 = vld [vmem:[%s2361] ss:$2 sm:$0xff]
        %s2363 = scalar_lea.vmem [#allocation2], 209
        %v2364 = vld [vmem:[%s2363] ss:$2 sm:$0xff]
        %s2365 = scalar_lea.vmem [#allocation2], 225
        %v2366 = vld [vmem:[%s2365] ss:$2 sm:$0xff]
        %s2367 = scalar_lea.vmem [#allocation2], 241
        %v2368 = vld [vmem:[%s2367] ss:$2 sm:$0xff]
        %v2369 = vmax.f32 %v2306, %v2338
        %v2370 = vmax.f32 %v2308, %v2340
        %v2371 = vmax.f32 %v2310, %v2342
        %v2372 = vmax.f32 %v2312, %v2344
        %v2373 = vmax.f32 %v2314, %v2346
        %v2374 = vmax.f32 %v2316, %v2348
        %v2375 = vmax.f32 %v2318, %v2350
        %v2376 = vmax.f32 %v2320, %v2352
        %v2377 = vmax.f32 %v2322, %v2354
        %v2378 = vmax.f32 %v2324, %v2356
        %v2379 = vmax.f32 %v2326, %v2358
        %v2380 = vmax.f32 %v2328, %v2360
        %v2381 = vmax.f32 %v2330, %v2362
        %v2382 = vmax.f32 %v2332, %v2364
        %v2383 = vmax.f32 %v2334, %v2366
        %v2384 = vmax.f32 %v2336, %v2368
        %v2385 = vpack.c.bf16 %v2370, %v2369
        %v2386 = vpack.c.bf16 %v2372, %v2371
        %v2387 = vpack.c.bf16 %v2374, %v2373
        %v2388 = vpack.c.bf16 %v2376, %v2375
        %v2389 = vpack.c.bf16 %v2378, %v2377
        %v2390 = vpack.c.bf16 %v2380, %v2379
        %v2391 = vpack.c.bf16 %v2382, %v2381
        %v2392 = vpack.c.bf16 %v2384, %v2383
        %v2393 = vld [vmem:[%s3] sm:$0xf]
        %v2394 = vld [vmem:[%s3 + $0x4] sm:$0xf]
        %v2395 = vld [vmem:[%s3 + $0x8] sm:$0xf]
        %v2396 = vld [vmem:[%s3 + $0xc] sm:$0xf]
        %v2397 = vld [vmem:[%s3 + $0x10] sm:$0xf]
        %v2398 = vld [vmem:[%s3 + $0x14] sm:$0xf]
        %v2399 = vld [vmem:[%s3 + $0x18] sm:$0xf]
        %v2400 = vld [vmem:[%s3 + $0x1c] sm:$0xf]
        %v2401 = vld [vmem:[%s3 + $0x20] sm:$0xf]
        %v2402 = vld [vmem:[%s3 + $0x24] sm:$0xf]
        %v2403 = vld [vmem:[%s3 + $0x28] sm:$0xf]
        %v2404 = vld [vmem:[%s3 + $0x2c] sm:$0xf]
        %v2405 = vld [vmem:[%s3 + $0x30] sm:$0xf]
        %v2406 = vld [vmem:[%s3 + $0x34] sm:$0xf]
        %v2421 = vunpack.c.l.b16 %v2393
        %v2422 = vunpack.c.l.b16 %v2394
        %v2423 = vunpack.c.l.b16 %v2395
        %v2424 = vunpack.c.l.b16 %v2396
        %v2425 = vunpack.c.l.b16 %v2397
        %v2426 = vunpack.c.l.b16 %v2398
        %v2427 = vunpack.c.l.b16 %v2399
        %v2428 = vunpack.c.l.b16 %v2400
        %v2429 = vunpack.c.l.b16 %v2401
        %v2430 = vunpack.c.l.b16 %v2402
        %v2431 = vunpack.c.l.b16 %v2403
        %v2432 = vunpack.c.l.b16 %v2404
        %v2433 = vunpack.c.l.b16 %v2405
        %v2434 = vunpack.c.l.b16 %v2406
        %v2435 = vpack.c.b16 %v2422, %v2421
        %v2436 = vpack.c.b16 %v2424, %v2423
        %v2437 = vpack.c.b16 %v2426, %v2425
        %v2438 = vpack.c.b16 %v2428, %v2427
        %v2439 = vpack.c.b16 %v2430, %v2429
        %v2440 = vpack.c.b16 %v2432, %v2431
        %v2441 = vpack.c.b16 %v2434, %v2433
        %v2450 = vsel %vm2273, %v2385, 0
        %v2453 = vsel %vm2273, %v2386, 0
        %v2456 = vsel %vm2273, %v2387, 0
        %v2459 = vsel %vm2273, %v2388, 0
        %v2462 = vsel %vm2273, %v2389, 0
        %v2465 = vsel %vm2273, %v2390, 0
        %v2468 = vsel %vm2273, %v2391, 0
        %v2471 = vsel %vm2273, %v2392, 0
        %2473 = vmatprep.subr.bf16.mxu0 0
        %2474 = vmatpush1.bf16.msra.mxu0 %v2435
        %2475 = vmatprep.subr.bf16.mxu0 0
        %2476 = vmatpush1.bf16.msra.mxu0 %v2436
        %2477 = vmatprep.subr.bf16.mxu0 0
        %2478 = vmatpush1.bf16.msra.mxu0 %v2437
        %2479 = vmatprep.subr.bf16.mxu0 0
        %2480 = vmatpush1.bf16.msra.mxu0 %v2438
        %2481 = vmatprep.subr.bf16.mxu0 0
        %2482 = vmatpush1.bf16.msra.mxu0 %v2439
        %2483 = vmatprep.subr.bf16.mxu0 0
        %2484 = vmatpush1.bf16.msra.mxu0 %v2440
        %2485 = vmatprep.subr.bf16.mxu0 0
        %2486 = vmatpush1.bf16.msra.mxu0 %v2441
        %2487 = vmatprep.subr.bf16.mxu0 0
        %2488 = vmatpush1.bf16.msra.mxu0 0
        %2489 = vmatprep.subr.bf16.mxu0 0
        %2490 = vmatpush1.bf16.msra.mxu0 0
        %2491 = vmatprep.subr.bf16.mxu0 0
        %2492 = vmatpush1.bf16.msra.mxu0 0
        %2493 = vmatprep.subr.bf16.mxu0 0
        %2494 = vmatpush1.bf16.msra.mxu0 0
        %2495 = vmatprep.subr.bf16.mxu0 0
        %2496 = vmatpush1.bf16.msra.mxu0 0
        %2497 = vmatprep.subr.bf16.mxu0 0
        %2498 = vmatpush1.bf16.msra.mxu0 0
        %2499 = vmatprep.subr.bf16.mxu0 0
        %2500 = vmatpush1.bf16.msra.mxu0 0
        %2501 = vmatprep.subr.bf16.mxu0 0
        %2502 = vmatpush1.bf16.msra.mxu0 0
        %2503 = vmatprep.subr.bf16.mxu0 0
        %2504 = vmatpush1.bf16.msra.mxu0 0
        %2505 = vmatprep.mubr.bf16.mxu0 0
        %2506 = vmatmul.mubr.bf16.gmra.mrb[0].mxu0 %v2450
        %v2507 = vpop.f32.mrb[0].mxu0
        %v2508 = vadd.f32 0.0, %v2507
        %v2509 = vpop.f32.mrb[0].mxu0
        %v2510 = vpop.f32.mrb[0].mxu0
        %v2511 = vadd.f32 0.0, %v2510
        %v2512 = vpop.f32.mrb[0].mxu0
        %2513 = vmatprep.mubr.bf16.mxu0 0
        %2514 = vmatmul.mubr.bf16.gmra.mrb[0].mxu0 %v2453
        %v2515 = vpop.f32.mrb[0].mxu0
        %v2516 = vadd.f32 0.0, %v2515
        %v2517 = vpop.f32.mrb[0].mxu0
        %v2518 = vpop.f32.mrb[0].mxu0
        %v2519 = vadd.f32 0.0, %v2518
        %v2520 = vpop.f32.mrb[0].mxu0
        %2521 = vmatprep.mubr.bf16.mxu0 0
        %2522 = vmatmul.mubr.bf16.gmra.mrb[0].mxu0 %v2456
        %v2523 = vpop.f32.mrb[0].mxu0
        %v2524 = vadd.f32 0.0, %v2523
        %v2525 = vpop.f32.mrb[0].mxu0
        %v2526 = vpop.f32.mrb[0].mxu0
        %v2527 = vadd.f32 0.0, %v2526
        %v2528 = vpop.f32.mrb[0].mxu0
        %2529 = vmatprep.mubr.bf16.mxu0 0
        %2530 = vmatmul.mubr.bf16.gmra.mrb[0].mxu0 %v2459
        %v2531 = vpop.f32.mrb[0].mxu0
        %v2532 = vadd.f32 0.0, %v2531
        %v2533 = vpop.f32.mrb[0].mxu0
        %v2534 = vpop.f32.mrb[0].mxu0
        %v2535 = vadd.f32 0.0, %v2534
        %v2536 = vpop.f32.mrb[0].mxu0
        %2537 = vmatprep.mubr.bf16.mxu0 0
        %2538 = vmatmul.mubr.bf16.gmra.mrb[0].mxu0 %v2462
        %v2539 = vpop.f32.mrb[0].mxu0
        %v2540 = vadd.f32 0.0, %v2539
        %v2541 = vpop.f32.mrb[0].mxu0
        %v2542 = vpop.f32.mrb[0].mxu0
        %v2543 = vadd.f32 0.0, %v2542
        %v2544 = vpop.f32.mrb[0].mxu0
        %2545 = vmatprep.mubr.bf16.mxu0 0
        %2546 = vmatmul.mubr.bf16.gmra.mrb[0].mxu0 %v2465
        %v2547 = vpop.f32.mrb[0].mxu0
        %v2548 = vadd.f32 0.0, %v2547
        %v2549 = vpop.f32.mrb[0].mxu0
        %v2550 = vpop.f32.mrb[0].mxu0
        %v2551 = vadd.f32 0.0, %v2550
        %v2552 = vpop.f32.mrb[0].mxu0
        %2553 = vmatprep.mubr.bf16.mxu0 0
        %2554 = vmatmul.mubr.bf16.gmra.mrb[0].mxu0 %v2468
        %v2555 = vpop.f32.mrb[0].mxu0
        %v2556 = vadd.f32 0.0, %v2555
        %v2557 = vpop.f32.mrb[0].mxu0
        %v2558 = vpop.f32.mrb[0].mxu0
        %v2559 = vadd.f32 0.0, %v2558
        %v2560 = vpop.f32.mrb[0].mxu0
        %2561 = vmatprep.mubr.bf16.mxu0 0
        %2562 = vmatmul.mubr.bf16.gmra.mrb[0].mxu0 %v2471
        %v2563 = vpop.f32.mrb[0].mxu0
        %v2564 = vadd.f32 0.0, %v2563
        %v2565 = vpop.f32.mrb[0].mxu0
        %v2566 = vpop.f32.mrb[0].mxu0
        %v2567 = vadd.f32 0.0, %v2566
        %v2568 = vpop.f32.mrb[0].mxu0
        %2569 = vdwg.mxu0
        %s2570 = scalar_lea.vmem %s3, 56
        %v2571 = vld [vmem:[%s2570] sm:$0xf]
        %v2572 = vld [vmem:[%s2570 + $0x4] sm:$0xf]
        %v2573 = vld [vmem:[%s2570 + $0x8] sm:$0xf]
        %v2574 = vld [vmem:[%s2570 + $0xc] sm:$0xf]
        %v2575 = vld [vmem:[%s2570 + $0x10] sm:$0xf]
        %v2576 = vld [vmem:[%s2570 + $0x14] sm:$0xf]
        %v2577 = vld [vmem:[%s2570 + $0x18] sm:$0xf]
        %v2578 = vld [vmem:[%s2570 + $0x1c] sm:$0xf]
        %v2579 = vld [vmem:[%s2570 + $0x20] sm:$0xf]
        %v2580 = vld [vmem:[%s2570 + $0x24] sm:$0xf]
        %v2581 = vld [vmem:[%s2570 + $0x28] sm:$0xf]
        %v2582 = vld [vmem:[%s2570 + $0x2c] sm:$0xf]
        %v2583 = vld [vmem:[%s2570 + $0x30] sm:$0xf]
        %v2584 = vld [vmem:[%s2570 + $0x34] sm:$0xf]
        %v2599 = vunpack.c.l.b16 %v2571
        %v2600 = vunpack.c.l.b16 %v2572
        %v2601 = vunpack.c.l.b16 %v2573
        %v2602 = vunpack.c.l.b16 %v2574
        %v2603 = vunpack.c.l.b16 %v2575
        %v2604 = vunpack.c.l.b16 %v2576
        %v2605 = vunpack.c.l.b16 %v2577
        %v2606 = vunpack.c.l.b16 %v2578
        %v2607 = vunpack.c.l.b16 %v2579
        %v2608 = vunpack.c.l.b16 %v2580
        %v2609 = vunpack.c.l.b16 %v2581
        %v2610 = vunpack.c.l.b16 %v2582
        %v2611 = vunpack.c.l.b16 %v2583
        %v2612 = vunpack.c.l.b16 %v2584
        %v2613 = vpack.c.b16 %v2600, %v2599
        %v2614 = vpack.c.b16 %v2602, %v2601
        %v2615 = vpack.c.b16 %v2604, %v2603
        %v2616 = vpack.c.b16 %v2606, %v2605
        %v2617 = vpack.c.b16 %v2608, %v2607
        %v2618 = vpack.c.b16 %v2610, %v2609
        %v2619 = vpack.c.b16 %v2612, %v2611
        %2627 = vmatprep.subr.bf16.mxu0 0
        %2628 = vmatpush1.bf16.msra.mxu0 %v2613
        %2629 = vmatprep.subr.bf16.mxu0 0
        %2630 = vmatpush1.bf16.msra.mxu0 %v2614
        %2631 = vmatprep.subr.bf16.mxu0 0
        %2632 = vmatpush1.bf16.msra.mxu0 %v2615
        %2633 = vmatprep.subr.bf16.mxu0 0
        %2634 = vmatpush1.bf16.msra.mxu0 %v2616
        %2635 = vmatprep.subr.bf16.mxu0 0
        %2636 = vmatpush1.bf16.msra.mxu0 %v2617
        %2637 = vmatprep.subr.bf16.mxu0 0
        %2638 = vmatpush1.bf16.msra.mxu0 %v2618
        %2639 = vmatprep.subr.bf16.mxu0 0
        %2640 = vmatpush1.bf16.msra.mxu0 %v2619
        %2641 = vmatprep.subr.bf16.mxu0 0
        %2642 = vmatpush1.bf16.msra.mxu0 0
        %2643 = vmatprep.subr.bf16.mxu0 0
        %2644 = vmatpush1.bf16.msra.mxu0 0
        %2645 = vmatprep.subr.bf16.mxu0 0
        %2646 = vmatpush1.bf16.msra.mxu0 0
        %2647 = vmatprep.subr.bf16.mxu0 0
        %2648 = vmatpush1.bf16.msra.mxu0 0
        %2649 = vmatprep.subr.bf16.mxu0 0
        %2650 = vmatpush1.bf16.msra.mxu0 0
        %2651 = vmatprep.subr.bf16.mxu0 0
        %2652 = vmatpush1.bf16.msra.mxu0 0
        %2653 = vmatprep.subr.bf16.mxu0 0
        %2654 = vmatpush1.bf16.msra.mxu0 0
        %2655 = vmatprep.subr.bf16.mxu0 0
        %2656 = vmatpush1.bf16.msra.mxu0 0
        %2657 = vmatprep.subr.bf16.mxu0 0
        %2658 = vmatpush1.bf16.msra.mxu0 0
        %2659 = vmatprep.mubr.bf16.mxu0 0
        %2660 = vmatmul.mubr.bf16.gmra.mrb[0].mxu0 %v2450
        %v2661 = vpop.f32.mrb[0].mxu0
        %v2662 = vadd.f32 0.0, %v2661
        %v2663 = vpop.f32.mrb[0].mxu0
        %v2664 = vpop.f32.mrb[0].mxu0
        %v2665 = vadd.f32 0.0, %v2664
        %v2666 = vpop.f32.mrb[0].mxu0
        %2667 = vmatprep.mubr.bf16.mxu0 0
        %2668 = vmatmul.mubr.bf16.gmra.mrb[0].mxu0 %v2453
        %v2669 = vpop.f32.mrb[0].mxu0
        %v2670 = vadd.f32 0.0, %v2669
        %v2671 = vpop.f32.mrb[0].mxu0
        %v2672 = vpop.f32.mrb[0].mxu0
        %v2673 = vadd.f32 0.0, %v2672
        %v2674 = vpop.f32.mrb[0].mxu0
        %2675 = vmatprep.mubr.bf16.mxu0 0
        %2676 = vmatmul.mubr.bf16.gmra.mrb[0].mxu0 %v2456
        %v2677 = vpop.f32.mrb[0].mxu0
        %v2678 = vadd.f32 0.0, %v2677
        %v2679 = vpop.f32.mrb[0].mxu0
        %v2680 = vpop.f32.mrb[0].mxu0
        %v2681 = vadd.f32 0.0, %v2680
        %v2682 = vpop.f32.mrb[0].mxu0
        %2683 = vmatprep.mubr.bf16.mxu0 0
        %2684 = vmatmul.mubr.bf16.gmra.mrb[0].mxu0 %v2459
        %v2685 = vpop.f32.mrb[0].mxu0
        %v2686 = vadd.f32 0.0, %v2685
        %v2687 = vpop.f32.mrb[0].mxu0
        %v2688 = vpop.f32.mrb[0].mxu0
        %v2689 = vadd.f32 0.0, %v2688
        %v2690 = vpop.f32.mrb[0].mxu0
        %2691 = vmatprep.mubr.bf16.mxu0 0
        %2692 = vmatmul.mubr.bf16.gmra.mrb[0].mxu0 %v2462
        %v2693 = vpop.f32.mrb[0].mxu0
        %v2694 = vadd.f32 0.0, %v2693
        %v2695 = vpop.f32.mrb[0].mxu0
        %v2696 = vpop.f32.mrb[0].mxu0
        %v2697 = vadd.f32 0.0, %v2696
        %v2698 = vpop.f32.mrb[0].mxu0
        %2699 = vmatprep.mubr.bf16.mxu0 0
        %2700 = vmatmul.mubr.bf16.gmra.mrb[0].mxu0 %v2465
        %v2701 = vpop.f32.mrb[0].mxu0
        %v2702 = vadd.f32 0.0, %v2701
        %v2703 = vpop.f32.mrb[0].mxu0
        %v2704 = vpop.f32.mrb[0].mxu0
        %v2705 = vadd.f32 0.0, %v2704
        %v2706 = vpop.f32.mrb[0].mxu0
        %2707 = vmatprep.mubr.bf16.mxu0 0
        %2708 = vmatmul.mubr.bf16.gmra.mrb[0].mxu0 %v2468
        %v2709 = vpop.f32.mrb[0].mxu0
        %v2710 = vadd.f32 0.0, %v2709
        %v2711 = vpop.f32.mrb[0].mxu0
        %v2712 = vpop.f32.mrb[0].mxu0
        %v2713 = vadd.f32 0.0, %v2712
        %v2714 = vpop.f32.mrb[0].mxu0
        %2715 = vmatprep.mubr.bf16.mxu0 0
        %2716 = vmatmul.mubr.bf16.gmra.mrb[0].mxu0 %v2471
        %v2717 = vpop.f32.mrb[0].mxu0
        %v2718 = vadd.f32 0.0, %v2717
        %v2719 = vpop.f32.mrb[0].mxu0
        %v2720 = vpop.f32.mrb[0].mxu0
        %v2721 = vadd.f32 0.0, %v2720
        %v2722 = vpop.f32.mrb[0].mxu0
        %2723 = vdwg.mxu0
        %v2724 = vmax.f32 %v2508, %v2662
        %v2725 = vmax.f32 %v2511, %v2665
        %v2726 = vmax.f32 %v2516, %v2670
        %v2727 = vmax.f32 %v2519, %v2673
        %v2728 = vmax.f32 %v2524, %v2678
        %v2729 = vmax.f32 %v2527, %v2681
        %v2730 = vmax.f32 %v2532, %v2686
        %v2731 = vmax.f32 %v2535, %v2689
        %v2732 = vmax.f32 %v2540, %v2694
        %v2733 = vmax.f32 %v2543, %v2697
        %v2734 = vmax.f32 %v2548, %v2702
        %v2735 = vmax.f32 %v2551, %v2705
        %v2736 = vmax.f32 %v2556, %v2710
        %v2737 = vmax.f32 %v2559, %v2713
        %v2738 = vmax.f32 %v2564, %v2718
        %v2739 = vmax.f32 %v2567, %v2721
        %v2740 = vpack.c.bf16 %v2725, %v2724
        %v2741 = vpack.c.bf16 %v2727, %v2726
        %v2742 = vpack.c.bf16 %v2729, %v2728
        %v2743 = vpack.c.bf16 %v2731, %v2730
        %v2744 = vpack.c.bf16 %v2733, %v2732
        %v2745 = vpack.c.bf16 %v2735, %v2734
        %v2746 = vpack.c.bf16 %v2737, %v2736
        %v2747 = vpack.c.bf16 %v2739, %v2738
        %v2748 = vld [vmem:[%s4] sm:$0xf]
        %v2749 = vld [vmem:[%s4 + $0x4] sm:$0xf]
        %v2750 = vld [vmem:[%s4 + $0x8] sm:$0xf]
        %v2751 = vld [vmem:[%s4 + $0xc] sm:$0xf]
        %v2752 = vld [vmem:[%s4 + $0x10] sm:$0xf]
        %v2753 = vld [vmem:[%s4 + $0x14] sm:$0xf]
        %v2754 = vld [vmem:[%s4 + $0x18] sm:$0xf]
        %v2755 = vrot.slane %v2724, 1
        %v2756 = vrot.slane %v2725, 1
        %v2757 = vrot.slane %v2726, 1
        %v2758 = vrot.slane %v2727, 1
        %v2759 = vrot.slane %v2728, 1
        %v2760 = vrot.slane %v2729, 1
        %v2761 = vrot.slane %v2730, 1
        %v2762 = vrot.slane %v2731, 1
        %v2763 = vrot.slane %v2732, 1
        %v2764 = vrot.slane %v2733, 1
        %v2765 = vrot.slane %v2734, 1
        %v2766 = vrot.slane %v2735, 1
        %v2767 = vrot.slane %v2736, 1
        %v2768 = vrot.slane %v2737, 1
        %v2769 = vrot.slane %v2738, 1
        %v2770 = vrot.slane %v2739, 1
        %v2771 = vsel %vm536, %v2769, %v2770
        %v2772 = vsel %vm536, %v2768, %v2769
        %v2773 = vsel %vm536, %v2767, %v2768
        %v2774 = vsel %vm536, %v2766, %v2767
        %v2775 = vsel %vm536, %v2765, %v2766
        %v2776 = vsel %vm536, %v2764, %v2765
        %v2777 = vsel %vm536, %v2763, %v2764
        %v2778 = vsel %vm536, %v2762, %v2763
        %v2779 = vsel %vm536, %v2761, %v2762
        %v2780 = vsel %vm536, %v2760, %v2761
        %v2781 = vsel %vm536, %v2759, %v2760
        %v2782 = vsel %vm536, %v2758, %v2759
        %v2783 = vsel %vm536, %v2757, %v2758
        %v2784 = vsel %vm536, %v2756, %v2757
        %v2785 = vsel %vm536, %v2755, %v2756
        %v2786 = vsel %vm536, %v2770, %v2755
        %v2787 = vpack.c.bf16 %v2784, %v2785
        %v2788 = vpack.c.bf16 %v2782, %v2783
        %v2789 = vpack.c.bf16 %v2780, %v2781
        %v2790 = vpack.c.bf16 %v2778, %v2779
        %v2791 = vpack.c.bf16 %v2776, %v2777
        %v2792 = vpack.c.bf16 %v2774, %v2775
        %v2793 = vpack.c.bf16 %v2772, %v2773
        %v2794 = vpack.c.bf16 %v2786, %v2771
        %s2795 = scalar_lea.vmem %s4, 28
        %v2796 = vld [vmem:[%s2795] sm:$0xf]
        %v2797 = vld [vmem:[%s2795 + $0x4] sm:$0xf]
        %v2798 = vld [vmem:[%s2795 + $0x8] sm:$0xf]
        %v2799 = vld [vmem:[%s2795 + $0xc] sm:$0xf]
        %v2800 = vld [vmem:[%s2795 + $0x10] sm:$0xf]
        %v2801 = vld [vmem:[%s2795 + $0x14] sm:$0xf]
        %v2802 = vld [vmem:[%s2795 + $0x18] sm:$0xf]
        %v2810 = vunpack.c.l.b16 %v2796
        %v2811 = vunpack.c.l.b16 %v2797
        %v2812 = vunpack.c.l.b16 %v2798
        %v2813 = vunpack.c.l.b16 %v2799
        %v2814 = vunpack.c.l.b16 %v2800
        %v2815 = vunpack.c.l.b16 %v2801
        %v2816 = vunpack.c.l.b16 %v2802
        %v2817 = vpack.c.b16 %v2811, %v2810
        %v2818 = vpack.c.b16 %v2813, %v2812
        %v2819 = vpack.c.b16 %v2815, %v2814
        %v2820 = vpack.c.b16 %v2816, %v2816
        %vm2824 = vcmask 457728
        %v2826 = vsel %vm2824, %v2787, 0
        %v2829 = vsel %vm2824, %v2788, 0
        %v2832 = vsel %vm2824, %v2789, 0
        %v2835 = vsel %vm2824, %v2790, 0
        %v2838 = vsel %vm2824, %v2791, 0
        %v2841 = vsel %vm2824, %v2792, 0
        %v2844 = vsel %vm2824, %v2793, 0
        %v2847 = vsel %vm2824, %v2794, 0
        %vm2849 = vcmask 1043456
        %v2851 = vsel %vm2849, %v2820, 0
        %2853 = vmatprep.subr.bf16.mxu0 0
        %2854 = vmatpush1.bf16.msra.mxu0 %v2817
        %2855 = vmatprep.subr.bf16.mxu0 0
        %2856 = vmatpush1.bf16.msra.mxu0 %v2818
        %2857 = vmatprep.subr.bf16.mxu0 0
        %2858 = vmatpush1.bf16.msra.mxu0 %v2819
        %2859 = vmatprep.subr.bf16.mxu0 0
        %2860 = vmatpush1.bf16.msra.mxu0 %v2851
        %2861 = vmatprep.subr.bf16.mxu0 0
        %2862 = vmatpush1.bf16.msra.mxu0 0
        %2863 = vmatprep.subr.bf16.mxu0 0
        %2864 = vmatpush1.bf16.msra.mxu0 0
        %2865 = vmatprep.subr.bf16.mxu0 0
        %2866 = vmatpush1.bf16.msra.mxu0 0
        %2867 = vmatprep.subr.bf16.mxu0 0
        %2868 = vmatpush1.bf16.msra.mxu0 0
        %2869 = vmatprep.subr.bf16.mxu0 0
        %2870 = vmatpush1.bf16.msra.mxu0 0
        %2871 = vmatprep.subr.bf16.mxu0 0
        %2872 = vmatpush1.bf16.msra.mxu0 0
        %2873 = vmatprep.subr.bf16.mxu0 0
        %2874 = vmatpush1.bf16.msra.mxu0 0
        %2875 = vmatprep.subr.bf16.mxu0 0
        %2876 = vmatpush1.bf16.msra.mxu0 0
        %2877 = vmatprep.subr.bf16.mxu0 0
        %2878 = vmatpush1.bf16.msra.mxu0 0
        %2879 = vmatprep.subr.bf16.mxu0 0
        %2880 = vmatpush1.bf16.msra.mxu0 0
        %2881 = vmatprep.subr.bf16.mxu0 0
        %2882 = vmatpush1.bf16.msra.mxu0 0
        %2883 = vmatprep.subr.bf16.mxu0 0
        %2884 = vmatpush1.bf16.msra.mxu0 0
        %2885 = vmatprep.mubr.bf16.mxu0 0
        %2886 = vmatmul.mubr.bf16.gmra.mrb[0].mxu0 %v2826
        %v2887 = vpop.f32.mrb[0].mxu0
        %v2888 = vadd.f32 0.0, %v2887
        %v2889 = vpop.f32.mrb[0].mxu0
        %v2890 = vpop.f32.mrb[0].mxu0
        %v2891 = vadd.f32 0.0, %v2890
        %v2892 = vpop.f32.mrb[0].mxu0
        %2893 = vmatprep.mubr.bf16.mxu0 0
        %2894 = vmatmul.mubr.bf16.gmra.mrb[0].mxu0 %v2829
        %v2895 = vpop.f32.mrb[0].mxu0
        %v2896 = vadd.f32 0.0, %v2895
        %v2897 = vpop.f32.mrb[0].mxu0
        %v2898 = vpop.f32.mrb[0].mxu0
        %v2899 = vadd.f32 0.0, %v2898
        %v2900 = vpop.f32.mrb[0].mxu0
        %2901 = vmatprep.mubr.bf16.mxu0 0
        %2902 = vmatmul.mubr.bf16.gmra.mrb[0].mxu0 %v2832
        %v2903 = vpop.f32.mrb[0].mxu0
        %v2904 = vadd.f32 0.0, %v2903
        %v2905 = vpop.f32.mrb[0].mxu0
        %v2906 = vpop.f32.mrb[0].mxu0
        %v2907 = vadd.f32 0.0, %v2906
        %v2908 = vpop.f32.mrb[0].mxu0
        %2909 = vmatprep.mubr.bf16.mxu0 0
        %2910 = vmatmul.mubr.bf16.gmra.mrb[0].mxu0 %v2835
        %v2911 = vpop.f32.mrb[0].mxu0
        %v2912 = vadd.f32 0.0, %v2911
        %v2913 = vpop.f32.mrb[0].mxu0
        %v2914 = vpop.f32.mrb[0].mxu0
        %v2915 = vadd.f32 0.0, %v2914
        %v2916 = vpop.f32.mrb[0].mxu0
        %2917 = vmatprep.mubr.bf16.mxu0 0
        %2918 = vmatmul.mubr.bf16.gmra.mrb[0].mxu0 %v2838
        %v2919 = vpop.f32.mrb[0].mxu0
        %v2920 = vadd.f32 0.0, %v2919
        %v2921 = vpop.f32.mrb[0].mxu0
        %v2922 = vpop.f32.mrb[0].mxu0
        %v2923 = vadd.f32 0.0, %v2922
        %v2924 = vpop.f32.mrb[0].mxu0
        %2925 = vmatprep.mubr.bf16.mxu0 0
        %2926 = vmatmul.mubr.bf16.gmra.mrb[0].mxu0 %v2841
        %v2927 = vpop.f32.mrb[0].mxu0
        %v2928 = vadd.f32 0.0, %v2927
        %v2929 = vpop.f32.mrb[0].mxu0
        %v2930 = vpop.f32.mrb[0].mxu0
        %v2931 = vadd.f32 0.0, %v2930
        %v2932 = vpop.f32.mrb[0].mxu0
        %2933 = vmatprep.mubr.bf16.mxu0 0
        %2934 = vmatmul.mubr.bf16.gmra.mrb[0].mxu0 %v2844
        %v2935 = vpop.f32.mrb[0].mxu0
        %v2936 = vadd.f32 0.0, %v2935
        %v2937 = vpop.f32.mrb[0].mxu0
        %v2938 = vpop.f32.mrb[0].mxu0
        %v2939 = vadd.f32 0.0, %v2938
        %v2940 = vpop.f32.mrb[0].mxu0
        %2941 = vmatprep.mubr.bf16.mxu0 0
        %2942 = vmatmul.mubr.bf16.gmra.mrb[0].mxu0 %v2847
        %v2943 = vpop.f32.mrb[0].mxu0
        %v2944 = vadd.f32 0.0, %v2943
        %v2945 = vpop.f32.mrb[0].mxu0
        %v2946 = vpop.f32.mrb[0].mxu0
        %v2947 = vadd.f32 0.0, %v2946
        %v2948 = vpop.f32.mrb[0].mxu0
        %2949 = vdwg.mxu0
        %v2957 = vunpack.c.l.b16 %v2748
        %v2958 = vunpack.c.l.b16 %v2749
        %v2959 = vunpack.c.l.b16 %v2750
        %v2960 = vunpack.c.l.b16 %v2751
        %v2961 = vunpack.c.l.b16 %v2752
        %v2962 = vunpack.c.l.b16 %v2753
        %v2963 = vunpack.c.l.b16 %v2754
        %v2964 = vpack.c.b16 %v2958, %v2957
        %v2965 = vpack.c.b16 %v2960, %v2959
        %v2966 = vpack.c.b16 %v2962, %v2961
        %v2967 = vpack.c.b16 %v2963, %v2963
        %v2972 = vsel %vm2824, %v2740, 0
        %v2975 = vsel %vm2824, %v2741, 0
        %v2978 = vsel %vm2824, %v2742, 0
        %v2981 = vsel %vm2824, %v2743, 0
        %v2984 = vsel %vm2824, %v2744, 0
        %v2987 = vsel %vm2824, %v2745, 0
        %v2990 = vsel %vm2824, %v2746, 0
        %v2993 = vsel %vm2824, %v2747, 0
        %v2996 = vsel %vm2849, %v2967, 0
        %2998 = vmatprep.subr.bf16.mxu0 0
        %2999 = vmatpush1.bf16.msra.mxu0 %v2964
        %3000 = vmatprep.subr.bf16.mxu0 0
        %3001 = vmatpush1.bf16.msra.mxu0 %v2965
        %3002 = vmatprep.subr.bf16.mxu0 0
        %3003 = vmatpush1.bf16.msra.mxu0 %v2966
        %3004 = vmatprep.subr.bf16.mxu0 0
        %3005 = vmatpush1.bf16.msra.mxu0 %v2996
        %3006 = vmatprep.subr.bf16.mxu0 0
        %3007 = vmatpush1.bf16.msra.mxu0 0
        %3008 = vmatprep.subr.bf16.mxu0 0
        %3009 = vmatpush1.bf16.msra.mxu0 0
        %3010 = vmatprep.subr.bf16.mxu0 0
        %3011 = vmatpush1.bf16.msra.mxu0 0
        %3012 = vmatprep.subr.bf16.mxu0 0
        %3013 = vmatpush1.bf16.msra.mxu0 0
        %3014 = vmatprep.subr.bf16.mxu0 0
        %3015 = vmatpush1.bf16.msra.mxu0 0
        %3016 = vmatprep.subr.bf16.mxu0 0
        %3017 = vmatpush1.bf16.msra.mxu0 0
        %3018 = vmatprep.subr.bf16.mxu0 0
        %3019 = vmatpush1.bf16.msra.mxu0 0
        %3020 = vmatprep.subr.bf16.mxu0 0
        %3021 = vmatpush1.bf16.msra.mxu0 0
        %3022 = vmatprep.subr.bf16.mxu0 0
        %3023 = vmatpush1.bf16.msra.mxu0 0
        %3024 = vmatprep.subr.bf16.mxu0 0
        %3025 = vmatpush1.bf16.msra.mxu0 0
        %3026 = vmatprep.subr.bf16.mxu0 0
        %3027 = vmatpush1.bf16.msra.mxu0 0
        %3028 = vmatprep.subr.bf16.mxu0 0
        %3029 = vmatpush1.bf16.msra.mxu0 0
        %3030 = vmatprep.mubr.bf16.mxu0 0
        %3031 = vmatmul.mubr.bf16.gmra.mrb[0].mxu0 %v2972
        %v3032 = vpop.f32.mrb[0].mxu0
        %v3033 = vadd.f32 %v2888, %v3032
        %v3034 = vpop.f32.mrb[0].mxu0
        %v3035 = vpop.f32.mrb[0].mxu0
        %v3036 = vadd.f32 %v2891, %v3035
        %v3037 = vpop.f32.mrb[0].mxu0
        %3038 = vmatprep.mubr.bf16.mxu0 0
        %3039 = vmatmul.mubr.bf16.gmra.mrb[0].mxu0 %v2975
        %v3040 = vpop.f32.mrb[0].mxu0
        %v3041 = vadd.f32 %v2896, %v3040
        %v3042 = vpop.f32.mrb[0].mxu0
        %v3043 = vpop.f32.mrb[0].mxu0
        %v3044 = vadd.f32 %v2899, %v3043
        %v3045 = vpop.f32.mrb[0].mxu0
        %3046 = vmatprep.mubr.bf16.mxu0 0
        %3047 = vmatmul.mubr.bf16.gmra.mrb[0].mxu0 %v2978
        %v3048 = vpop.f32.mrb[0].mxu0
        %v3049 = vadd.f32 %v2904, %v3048
        %v3050 = vpop.f32.mrb[0].mxu0
        %v3051 = vpop.f32.mrb[0].mxu0
        %v3052 = vadd.f32 %v2907, %v3051
        %v3053 = vpop.f32.mrb[0].mxu0
        %3054 = vmatprep.mubr.bf16.mxu0 0
        %3055 = vmatmul.mubr.bf16.gmra.mrb[0].mxu0 %v2981
        %v3056 = vpop.f32.mrb[0].mxu0
        %v3057 = vadd.f32 %v2912, %v3056
        %v3058 = vpop.f32.mrb[0].mxu0
        %v3059 = vpop.f32.mrb[0].mxu0
        %v3060 = vadd.f32 %v2915, %v3059
        %v3061 = vpop.f32.mrb[0].mxu0
        %3062 = vmatprep.mubr.bf16.mxu0 0
        %3063 = vmatmul.mubr.bf16.gmra.mrb[0].mxu0 %v2984
        %v3064 = vpop.f32.mrb[0].mxu0
        %v3065 = vadd.f32 %v2920, %v3064
        %v3066 = vpop.f32.mrb[0].mxu0
        %v3067 = vpop.f32.mrb[0].mxu0
        %v3068 = vadd.f32 %v2923, %v3067
        %v3069 = vpop.f32.mrb[0].mxu0
        %3070 = vmatprep.mubr.bf16.mxu0 0
        %3071 = vmatmul.mubr.bf16.gmra.mrb[0].mxu0 %v2987
        %v3072 = vpop.f32.mrb[0].mxu0
        %v3073 = vadd.f32 %v2928, %v3072
        %v3074 = vpop.f32.mrb[0].mxu0
        %v3075 = vpop.f32.mrb[0].mxu0
        %v3076 = vadd.f32 %v2931, %v3075
        %v3077 = vpop.f32.mrb[0].mxu0
        %3078 = vmatprep.mubr.bf16.mxu0 0
        %3079 = vmatmul.mubr.bf16.gmra.mrb[0].mxu0 %v2990
        %v3080 = vpop.f32.mrb[0].mxu0
        %v3081 = vadd.f32 %v2936, %v3080
        %v3082 = vpop.f32.mrb[0].mxu0
        %v3083 = vpop.f32.mrb[0].mxu0
        %v3084 = vadd.f32 %v2939, %v3083
        %v3085 = vpop.f32.mrb[0].mxu0
        %3086 = vmatprep.mubr.bf16.mxu0 0
        %3087 = vmatmul.mubr.bf16.gmra.mrb[0].mxu0 %v2993
        %v3088 = vpop.f32.mrb[0].mxu0
        %v3089 = vadd.f32 %v2944, %v3088
        %v3090 = vpop.f32.mrb[0].mxu0
        %v3091 = vpop.f32.mrb[0].mxu0
        %v3092 = vadd.f32 %v2947, %v3091
        %v3093 = vpop.f32.mrb[0].mxu0
        %3094 = vdwg.mxu0
        %v3095 = vrot.slane %v2724, 2
        %v3096 = vrot.slane %v2725, 2
        %v3097 = vrot.slane %v2726, 2
        %v3098 = vrot.slane %v2727, 2
        %v3099 = vrot.slane %v2728, 2
        %v3100 = vrot.slane %v2729, 2
        %v3101 = vrot.slane %v2730, 2
        %v3102 = vrot.slane %v2731, 2
        %v3103 = vrot.slane %v2732, 2
        %v3104 = vrot.slane %v2733, 2
        %v3105 = vrot.slane %v2734, 2
        %v3106 = vrot.slane %v2735, 2
        %v3107 = vrot.slane %v2736, 2
        %v3108 = vrot.slane %v2737, 2
        %v3109 = vrot.slane %v2738, 2
        %v3110 = vrot.slane %v2739, 2
        %v3111 = vsel %vm1121, %v3109, %v3110
        %v3112 = vsel %vm1121, %v3108, %v3109
        %v3113 = vsel %vm1121, %v3107, %v3108
        %v3114 = vsel %vm1121, %v3106, %v3107
        %v3115 = vsel %vm1121, %v3105, %v3106
        %v3116 = vsel %vm1121, %v3104, %v3105
        %v3117 = vsel %vm1121, %v3103, %v3104
        %v3118 = vsel %vm1121, %v3102, %v3103
        %v3119 = vsel %vm1121, %v3101, %v3102
        %v3120 = vsel %vm1121, %v3100, %v3101
        %v3121 = vsel %vm1121, %v3099, %v3100
        %v3122 = vsel %vm1121, %v3098, %v3099
        %v3123 = vsel %vm1121, %v3097, %v3098
        %v3124 = vsel %vm1121, %v3096, %v3097
        %v3125 = vsel %vm1121, %v3095, %v3096
        %v3126 = vsel %vm1121, %v3110, %v3095
        %v3127 = vpack.c.bf16 %v3124, %v3125
        %v3128 = vpack.c.bf16 %v3122, %v3123
        %v3129 = vpack.c.bf16 %v3120, %v3121
        %v3130 = vpack.c.bf16 %v3118, %v3119
        %v3131 = vpack.c.bf16 %v3116, %v3117
        %v3132 = vpack.c.bf16 %v3114, %v3115
        %v3133 = vpack.c.bf16 %v3112, %v3113
        %v3134 = vpack.c.bf16 %v3126, %v3111
        %s3135 = scalar_lea.vmem %s4, 56
        %v3136 = vld [vmem:[%s3135] sm:$0xf]
        %v3137 = vld [vmem:[%s3135 + $0x4] sm:$0xf]
        %v3138 = vld [vmem:[%s3135 + $0x8] sm:$0xf]
        %v3139 = vld [vmem:[%s3135 + $0xc] sm:$0xf]
        %v3140 = vld [vmem:[%s3135 + $0x10] sm:$0xf]
        %v3141 = vld [vmem:[%s3135 + $0x14] sm:$0xf]
        %v3142 = vld [vmem:[%s3135 + $0x18] sm:$0xf]
        %v3150 = vunpack.c.l.b16 %v3136
        %v3151 = vunpack.c.l.b16 %v3137
        %v3152 = vunpack.c.l.b16 %v3138
        %v3153 = vunpack.c.l.b16 %v3139
        %v3154 = vunpack.c.l.b16 %v3140
        %v3155 = vunpack.c.l.b16 %v3141
        %v3156 = vunpack.c.l.b16 %v3142
        %v3157 = vpack.c.b16 %v3151, %v3150
        %v3158 = vpack.c.b16 %v3153, %v3152
        %v3159 = vpack.c.b16 %v3155, %v3154
        %v3160 = vpack.c.b16 %v3156, %v3156
        %v3165 = vsel %vm2824, %v3127, 0
        %v3168 = vsel %vm2824, %v3128, 0
        %v3171 = vsel %vm2824, %v3129, 0
        %v3174 = vsel %vm2824, %v3130, 0
        %v3177 = vsel %vm2824, %v3131, 0
        %v3180 = vsel %vm2824, %v3132, 0
        %v3183 = vsel %vm2824, %v3133, 0
        %v3186 = vsel %vm2824, %v3134, 0
        %v3189 = vsel %vm2849, %v3160, 0
        %3191 = vmatprep.subr.bf16.mxu0 0
        %3192 = vmatpush1.bf16.msra.mxu0 %v3157
        %3193 = vmatprep.subr.bf16.mxu0 0
        %3194 = vmatpush1.bf16.msra.mxu0 %v3158
        %3195 = vmatprep.subr.bf16.mxu0 0
        %3196 = vmatpush1.bf16.msra.mxu0 %v3159
        %3197 = vmatprep.subr.bf16.mxu0 0
        %3198 = vmatpush1.bf16.msra.mxu0 %v3189
        %3199 = vmatprep.subr.bf16.mxu0 0
        %3200 = vmatpush1.bf16.msra.mxu0 0
        %3201 = vmatprep.subr.bf16.mxu0 0
        %3202 = vmatpush1.bf16.msra.mxu0 0
        %3203 = vmatprep.subr.bf16.mxu0 0
        %3204 = vmatpush1.bf16.msra.mxu0 0
        %3205 = vmatprep.subr.bf16.mxu0 0
        %3206 = vmatpush1.bf16.msra.mxu0 0
        %3207 = vmatprep.subr.bf16.mxu0 0
        %3208 = vmatpush1.bf16.msra.mxu0 0
        %3209 = vmatprep.subr.bf16.mxu0 0
        %3210 = vmatpush1.bf16.msra.mxu0 0
        %3211 = vmatprep.subr.bf16.mxu0 0
        %3212 = vmatpush1.bf16.msra.mxu0 0
        %3213 = vmatprep.subr.bf16.mxu0 0
        %3214 = vmatpush1.bf16.msra.mxu0 0
        %3215 = vmatprep.subr.bf16.mxu0 0
        %3216 = vmatpush1.bf16.msra.mxu0 0
        %3217 = vmatprep.subr.bf16.mxu0 0
        %3218 = vmatpush1.bf16.msra.mxu0 0
        %3219 = vmatprep.subr.bf16.mxu0 0
        %3220 = vmatpush1.bf16.msra.mxu0 0
        %3221 = vmatprep.subr.bf16.mxu0 0
        %3222 = vmatpush1.bf16.msra.mxu0 0
        %3223 = vmatprep.mubr.bf16.mxu0 0
        %3224 = vmatmul.mubr.bf16.gmra.mrb[0].mxu0 %v3165
        %v3225 = vpop.f32.mrb[0].mxu0
        %v3226 = vadd.f32 0.0, %v3225
        %v3227 = vpop.f32.mrb[0].mxu0
        %v3228 = vpop.f32.mrb[0].mxu0
        %v3229 = vadd.f32 0.0, %v3228
        %v3230 = vpop.f32.mrb[0].mxu0
        %3231 = vmatprep.mubr.bf16.mxu0 0
        %3232 = vmatmul.mubr.bf16.gmra.mrb[0].mxu0 %v3168
        %v3233 = vpop.f32.mrb[0].mxu0
        %v3234 = vadd.f32 0.0, %v3233
        %v3235 = vpop.f32.mrb[0].mxu0
        %v3236 = vpop.f32.mrb[0].mxu0
        %v3237 = vadd.f32 0.0, %v3236
        %v3238 = vpop.f32.mrb[0].mxu0
        %3239 = vmatprep.mubr.bf16.mxu0 0
        %3240 = vmatmul.mubr.bf16.gmra.mrb[0].mxu0 %v3171
        %v3241 = vpop.f32.mrb[0].mxu0
        %v3242 = vadd.f32 0.0, %v3241
        %v3243 = vpop.f32.mrb[0].mxu0
        %v3244 = vpop.f32.mrb[0].mxu0
        %v3245 = vadd.f32 0.0, %v3244
        %v3246 = vpop.f32.mrb[0].mxu0
        %3247 = vmatprep.mubr.bf16.mxu0 0
        %3248 = vmatmul.mubr.bf16.gmra.mrb[0].mxu0 %v3174
        %v3249 = vpop.f32.mrb[0].mxu0
        %v3250 = vadd.f32 0.0, %v3249
        %v3251 = vpop.f32.mrb[0].mxu0
        %v3252 = vpop.f32.mrb[0].mxu0
        %v3253 = vadd.f32 0.0, %v3252
        %v3254 = vpop.f32.mrb[0].mxu0
        %3255 = vmatprep.mubr.bf16.mxu0 0
        %3256 = vmatmul.mubr.bf16.gmra.mrb[0].mxu0 %v3177
        %v3257 = vpop.f32.mrb[0].mxu0
        %v3258 = vadd.f32 0.0, %v3257
        %v3259 = vpop.f32.mrb[0].mxu0
        %v3260 = vpop.f32.mrb[0].mxu0
        %v3261 = vadd.f32 0.0, %v3260
        %v3262 = vpop.f32.mrb[0].mxu0
        %3263 = vmatprep.mubr.bf16.mxu0 0
        %3264 = vmatmul.mubr.bf16.gmra.mrb[0].mxu0 %v3180
        %v3265 = vpop.f32.mrb[0].mxu0
        %v3266 = vadd.f32 0.0, %v3265
        %v3267 = vpop.f32.mrb[0].mxu0
        %v3268 = vpop.f32.mrb[0].mxu0
        %v3269 = vadd.f32 0.0, %v3268
        %v3270 = vpop.f32.mrb[0].mxu0
        %3271 = vmatprep.mubr.bf16.mxu0 0
        %3272 = vmatmul.mubr.bf16.gmra.mrb[0].mxu0 %v3183
        %v3273 = vpop.f32.mrb[0].mxu0
        %v3274 = vadd.f32 0.0, %v3273
        %v3275 = vpop.f32.mrb[0].mxu0
        %v3276 = vpop.f32.mrb[0].mxu0
        %v3277 = vadd.f32 0.0, %v3276
        %v3278 = vpop.f32.mrb[0].mxu0
        %3279 = vmatprep.mubr.bf16.mxu0 0
        %3280 = vmatmul.mubr.bf16.gmra.mrb[0].mxu0 %v3186
        %v3281 = vpop.f32.mrb[0].mxu0
        %v3282 = vadd.f32 0.0, %v3281
        %v3283 = vpop.f32.mrb[0].mxu0
        %v3284 = vpop.f32.mrb[0].mxu0
        %v3285 = vadd.f32 0.0, %v3284
        %v3286 = vpop.f32.mrb[0].mxu0
        %3287 = vdwg.mxu0
        %v3288 = vadd.f32 %v3033, %v3226
        %v3289 = vadd.f32 %v3036, %v3229
        %v3290 = vadd.f32 %v3041, %v3234
        %v3291 = vadd.f32 %v3044, %v3237
        %v3292 = vadd.f32 %v3049, %v3242
        %v3293 = vadd.f32 %v3052, %v3245
        %v3294 = vadd.f32 %v3057, %v3250
        %v3295 = vadd.f32 %v3060, %v3253
        %v3296 = vadd.f32 %v3065, %v3258
        %v3297 = vadd.f32 %v3068, %v3261
        %v3298 = vadd.f32 %v3073, %v3266
        %v3299 = vadd.f32 %v3076, %v3269
        %v3300 = vadd.f32 %v3081, %v3274
        %v3301 = vadd.f32 %v3084, %v3277
        %v3302 = vadd.f32 %v3089, %v3282
        %v3303 = vadd.f32 %v3092, %v3285
        %v3304 = vrot.slane %v2724, 3
        %v3305 = vrot.slane %v2725, 3
        %v3306 = vrot.slane %v2726, 3
        %v3307 = vrot.slane %v2727, 3
        %v3308 = vrot.slane %v2728, 3
        %v3309 = vrot.slane %v2729, 3
        %v3310 = vrot.slane %v2730, 3
        %v3311 = vrot.slane %v2731, 3
        %v3312 = vrot.slane %v2732, 3
        %v3313 = vrot.slane %v2733, 3
        %v3314 = vrot.slane %v2734, 3
        %v3315 = vrot.slane %v2735, 3
        %v3316 = vrot.slane %v2736, 3
        %v3317 = vrot.slane %v2737, 3
        %v3318 = vrot.slane %v2738, 3
        %v3319 = vrot.slane %v2739, 3
        %v3320 = vsel %vm1492, %v3318, %v3319
        %v3321 = vsel %vm1492, %v3317, %v3318
        %v3322 = vsel %vm1492, %v3316, %v3317
        %v3323 = vsel %vm1492, %v3315, %v3316
        %v3324 = vsel %vm1492, %v3314, %v3315
        %v3325 = vsel %vm1492, %v3313, %v3314
        %v3326 = vsel %vm1492, %v3312, %v3313
        %v3327 = vsel %vm1492, %v3311, %v3312
        %v3328 = vsel %vm1492, %v3310, %v3311
        %v3329 = vsel %vm1492, %v3309, %v3310
        %v3330 = vsel %vm1492, %v3308, %v3309
        %v3331 = vsel %vm1492, %v3307, %v3308
        %v3332 = vsel %vm1492, %v3306, %v3307
        %v3333 = vsel %vm1492, %v3305, %v3306
        %v3334 = vsel %vm1492, %v3304, %v3305
        %v3335 = vsel %vm1492, %v3319, %v3304
        %v3336 = vpack.c.bf16 %v3333, %v3334
        %v3337 = vpack.c.bf16 %v3331, %v3332
        %v3338 = vpack.c.bf16 %v3329, %v3330
        %v3339 = vpack.c.bf16 %v3327, %v3328
        %v3340 = vpack.c.bf16 %v3325, %v3326
        %v3341 = vpack.c.bf16 %v3323, %v3324
        %v3342 = vpack.c.bf16 %v3321, %v3322
        %v3343 = vpack.c.bf16 %v3335, %v3320
        %s3344 = scalar_lea.vmem %s4, 84
        %v3345 = vld [vmem:[%s3344] sm:$0xf]
        %v3346 = vld [vmem:[%s3344 + $0x4] sm:$0xf]
        %v3347 = vld [vmem:[%s3344 + $0x8] sm:$0xf]
        %v3348 = vld [vmem:[%s3344 + $0xc] sm:$0xf]
        %v3349 = vld [vmem:[%s3344 + $0x10] sm:$0xf]
        %v3350 = vld [vmem:[%s3344 + $0x14] sm:$0xf]
        %v3351 = vld [vmem:[%s3344 + $0x18] sm:$0xf]
        %v3359 = vunpack.c.l.b16 %v3345
        %v3360 = vunpack.c.l.b16 %v3346
        %v3361 = vunpack.c.l.b16 %v3347
        %v3362 = vunpack.c.l.b16 %v3348
        %v3363 = vunpack.c.l.b16 %v3349
        %v3364 = vunpack.c.l.b16 %v3350
        %v3365 = vunpack.c.l.b16 %v3351
        %v3366 = vpack.c.b16 %v3360, %v3359
        %v3367 = vpack.c.b16 %v3362, %v3361
        %v3368 = vpack.c.b16 %v3364, %v3363
        %v3369 = vpack.c.b16 %v3365, %v3365
        %v3374 = vsel %vm2824, %v3336, 0
        %v3377 = vsel %vm2824, %v3337, 0
        %v3380 = vsel %vm2824, %v3338, 0
        %v3383 = vsel %vm2824, %v3339, 0
        %v3386 = vsel %vm2824, %v3340, 0
        %v3389 = vsel %vm2824, %v3341, 0
        %v3392 = vsel %vm2824, %v3342, 0
        %v3395 = vsel %vm2824, %v3343, 0
        %v3398 = vsel %vm2849, %v3369, 0
        %3400 = vmatprep.subr.bf16.mxu0 0
        %3401 = vmatpush1.bf16.msra.mxu0 %v3366
        %3402 = vmatprep.subr.bf16.mxu0 0
        %3403 = vmatpush1.bf16.msra.mxu0 %v3367
        %3404 = vmatprep.subr.bf16.mxu0 0
        %3405 = vmatpush1.bf16.msra.mxu0 %v3368
        %3406 = vmatprep.subr.bf16.mxu0 0
        %3407 = vmatpush1.bf16.msra.mxu0 %v3398
        %3408 = vmatprep.subr.bf16.mxu0 0
        %3409 = vmatpush1.bf16.msra.mxu0 0
        %3410 = vmatprep.subr.bf16.mxu0 0
        %3411 = vmatpush1.bf16.msra.mxu0 0
        %3412 = vmatprep.subr.bf16.mxu0 0
        %3413 = vmatpush1.bf16.msra.mxu0 0
        %3414 = vmatprep.subr.bf16.mxu0 0
        %3415 = vmatpush1.bf16.msra.mxu0 0
        %3416 = vmatprep.subr.bf16.mxu0 0
        %3417 = vmatpush1.bf16.msra.mxu0 0
        %3418 = vmatprep.subr.bf16.mxu0 0
        %3419 = vmatpush1.bf16.msra.mxu0 0
        %3420 = vmatprep.subr.bf16.mxu0 0
        %3421 = vmatpush1.bf16.msra.mxu0 0
        %3422 = vmatprep.subr.bf16.mxu0 0
        %3423 = vmatpush1.bf16.msra.mxu0 0
        %3424 = vmatprep.subr.bf16.mxu0 0
        %3425 = vmatpush1.bf16.msra.mxu0 0
        %3426 = vmatprep.subr.bf16.mxu0 0
        %3427 = vmatpush1.bf16.msra.mxu0 0
        %3428 = vmatprep.subr.bf16.mxu0 0
        %3429 = vmatpush1.bf16.msra.mxu0 0
        %3430 = vmatprep.subr.bf16.mxu0 0
        %3431 = vmatpush1.bf16.msra.mxu0 0
        %3432 = vmatprep.mubr.bf16.mxu0 0
        %3433 = vmatmul.mubr.bf16.gmra.mrb[0].mxu0 %v3374
        %v3434 = vpop.f32.mrb[0].mxu0
        %v3435 = vadd.f32 0.0, %v3434
        %v3436 = vpop.f32.mrb[0].mxu0
        %v3437 = vpop.f32.mrb[0].mxu0
        %v3438 = vadd.f32 0.0, %v3437
        %v3439 = vpop.f32.mrb[0].mxu0
        %3440 = vmatprep.mubr.bf16.mxu0 0
        %3441 = vmatmul.mubr.bf16.gmra.mrb[0].mxu0 %v3377
        %v3442 = vpop.f32.mrb[0].mxu0
        %v3443 = vadd.f32 0.0, %v3442
        %v3444 = vpop.f32.mrb[0].mxu0
        %v3445 = vpop.f32.mrb[0].mxu0
        %v3446 = vadd.f32 0.0, %v3445
        %v3447 = vpop.f32.mrb[0].mxu0
        %3448 = vmatprep.mubr.bf16.mxu0 0
        %3449 = vmatmul.mubr.bf16.gmra.mrb[0].mxu0 %v3380
        %v3450 = vpop.f32.mrb[0].mxu0
        %v3451 = vadd.f32 0.0, %v3450
        %v3452 = vpop.f32.mrb[0].mxu0
        %v3453 = vpop.f32.mrb[0].mxu0
        %v3454 = vadd.f32 0.0, %v3453
        %v3455 = vpop.f32.mrb[0].mxu0
        %3456 = vmatprep.mubr.bf16.mxu0 0
        %3457 = vmatmul.mubr.bf16.gmra.mrb[0].mxu0 %v3383
        %v3458 = vpop.f32.mrb[0].mxu0
        %v3459 = vadd.f32 0.0, %v3458
        %v3460 = vpop.f32.mrb[0].mxu0
        %v3461 = vpop.f32.mrb[0].mxu0
        %v3462 = vadd.f32 0.0, %v3461
        %v3463 = vpop.f32.mrb[0].mxu0
        %3464 = vmatprep.mubr.bf16.mxu0 0
        %3465 = vmatmul.mubr.bf16.gmra.mrb[0].mxu0 %v3386
        %v3466 = vpop.f32.mrb[0].mxu0
        %v3467 = vadd.f32 0.0, %v3466
        %v3468 = vpop.f32.mrb[0].mxu0
        %v3469 = vpop.f32.mrb[0].mxu0
        %v3470 = vadd.f32 0.0, %v3469
        %v3471 = vpop.f32.mrb[0].mxu0
        %3472 = vmatprep.mubr.bf16.mxu0 0
        %3473 = vmatmul.mubr.bf16.gmra.mrb[0].mxu0 %v3389
        %v3474 = vpop.f32.mrb[0].mxu0
        %v3475 = vadd.f32 0.0, %v3474
        %v3476 = vpop.f32.mrb[0].mxu0
        %v3477 = vpop.f32.mrb[0].mxu0
        %v3478 = vadd.f32 0.0, %v3477
        %v3479 = vpop.f32.mrb[0].mxu0
        %3480 = vmatprep.mubr.bf16.mxu0 0
        %3481 = vmatmul.mubr.bf16.gmra.mrb[0].mxu0 %v3392
        %v3482 = vpop.f32.mrb[0].mxu0
        %v3483 = vadd.f32 0.0, %v3482
        %v3484 = vpop.f32.mrb[0].mxu0
        %v3485 = vpop.f32.mrb[0].mxu0
        %v3486 = vadd.f32 0.0, %v3485
        %v3487 = vpop.f32.mrb[0].mxu0
        %3488 = vmatprep.mubr.bf16.mxu0 0
        %3489 = vmatmul.mubr.bf16.gmra.mrb[0].mxu0 %v3395
        %v3490 = vpop.f32.mrb[0].mxu0
        %v3491 = vadd.f32 0.0, %v3490
        %v3492 = vpop.f32.mrb[0].mxu0
        %v3493 = vpop.f32.mrb[0].mxu0
        %v3494 = vadd.f32 0.0, %v3493
        %v3495 = vpop.f32.mrb[0].mxu0
        %3496 = vdwg.mxu0
        %v3497 = vadd.f32 %v3288, %v3435
        %v3498 = vadd.f32 %v3289, %v3438
        %v3499 = vadd.f32 %v3290, %v3443
        %v3500 = vadd.f32 %v3291, %v3446
        %v3501 = vadd.f32 %v3292, %v3451
        %v3502 = vadd.f32 %v3293, %v3454
        %v3503 = vadd.f32 %v3294, %v3459
        %v3504 = vadd.f32 %v3295, %v3462
        %v3505 = vadd.f32 %v3296, %v3467
        %v3506 = vadd.f32 %v3297, %v3470
        %v3507 = vadd.f32 %v3298, %v3475
        %v3508 = vadd.f32 %v3299, %v3478
        %v3509 = vadd.f32 %v3300, %v3483
        %v3510 = vadd.f32 %v3301, %v3486
        %v3511 = vadd.f32 %v3302, %v3491
        %v3512 = vadd.f32 %v3303, %v3494
        %v3513 = vrot.slane %v2724, 4
        %v3514 = vrot.slane %v2725, 4
        %v3515 = vrot.slane %v2726, 4
        %v3516 = vrot.slane %v2727, 4
        %v3517 = vrot.slane %v2728, 4
        %v3518 = vrot.slane %v2729, 4
        %v3519 = vrot.slane %v2730, 4
        %v3520 = vrot.slane %v2731, 4
        %v3521 = vrot.slane %v2732, 4
        %v3522 = vrot.slane %v2733, 4
        %v3523 = vrot.slane %v2734, 4
        %v3524 = vrot.slane %v2735, 4
        %v3525 = vrot.slane %v2736, 4
        %v3526 = vrot.slane %v2737, 4
        %v3527 = vrot.slane %v2738, 4
        %v3528 = vrot.slane %v2739, 4
        %v3529 = vsel %vm1863, %v3527, %v3528
        %v3530 = vsel %vm1863, %v3526, %v3527
        %v3531 = vsel %vm1863, %v3525, %v3526
        %v3532 = vsel %vm1863, %v3524, %v3525
        %v3533 = vsel %vm1863, %v3523, %v3524
        %v3534 = vsel %vm1863, %v3522, %v3523
        %v3535 = vsel %vm1863, %v3521, %v3522
        %v3536 = vsel %vm1863, %v3520, %v3521
        %v3537 = vsel %vm1863, %v3519, %v3520
        %v3538 = vsel %vm1863, %v3518, %v3519
        %v3539 = vsel %vm1863, %v3517, %v3518
        %v3540 = vsel %vm1863, %v3516, %v3517
        %v3541 = vsel %vm1863, %v3515, %v3516
        %v3542 = vsel %vm1863, %v3514, %v3515
        %v3543 = vsel %vm1863, %v3513, %v3514
        %v3544 = vsel %vm1863, %v3528, %v3513
        %v3545 = vpack.c.bf16 %v3542, %v3543
        %v3546 = vpack.c.bf16 %v3540, %v3541
        %v3547 = vpack.c.bf16 %v3538, %v3539
        %v3548 = vpack.c.bf16 %v3536, %v3537
        %v3549 = vpack.c.bf16 %v3534, %v3535
        %v3550 = vpack.c.bf16 %v3532, %v3533
        %v3551 = vpack.c.bf16 %v3530, %v3531
        %v3552 = vpack.c.bf16 %v3544, %v3529
        %s3553 = scalar_lea.vmem %s4, 112
        %v3554 = vld [vmem:[%s3553] sm:$0xf]
        %v3555 = vld [vmem:[%s3553 + $0x4] sm:$0xf]
        %v3556 = vld [vmem:[%s3553 + $0x8] sm:$0xf]
        %v3557 = vld [vmem:[%s3553 + $0xc] sm:$0xf]
        %v3558 = vld [vmem:[%s3553 + $0x10] sm:$0xf]
        %v3559 = vld [vmem:[%s3553 + $0x14] sm:$0xf]
        %v3560 = vld [vmem:[%s3553 + $0x18] sm:$0xf]
        %v3568 = vunpack.c.l.b16 %v3554
        %v3569 = vunpack.c.l.b16 %v3555
        %v3570 = vunpack.c.l.b16 %v3556
        %v3571 = vunpack.c.l.b16 %v3557
        %v3572 = vunpack.c.l.b16 %v3558
        %v3573 = vunpack.c.l.b16 %v3559
        %v3574 = vunpack.c.l.b16 %v3560
        %v3575 = vpack.c.b16 %v3569, %v3568
        %v3576 = vpack.c.b16 %v3571, %v3570
        %v3577 = vpack.c.b16 %v3573, %v3572
        %v3578 = vpack.c.b16 %v3574, %v3574
        %v3583 = vsel %vm2824, %v3545, 0
        %v3586 = vsel %vm2824, %v3546, 0
        %v3589 = vsel %vm2824, %v3547, 0
        %v3592 = vsel %vm2824, %v3548, 0
        %v3595 = vsel %vm2824, %v3549, 0
        %v3598 = vsel %vm2824, %v3550, 0
        %v3601 = vsel %vm2824, %v3551, 0
        %v3604 = vsel %vm2824, %v3552, 0
        %v3607 = vsel %vm2849, %v3578, 0
        %3609 = vmatprep.subr.bf16.mxu0 0
        %3610 = vmatpush1.bf16.msra.mxu0 %v3575
        %3611 = vmatprep.subr.bf16.mxu0 0
        %3612 = vmatpush1.bf16.msra.mxu0 %v3576
        %3613 = vmatprep.subr.bf16.mxu0 0
        %3614 = vmatpush1.bf16.msra.mxu0 %v3577
        %3615 = vmatprep.subr.bf16.mxu0 0
        %3616 = vmatpush1.bf16.msra.mxu0 %v3607
        %3617 = vmatprep.subr.bf16.mxu0 0
        %3618 = vmatpush1.bf16.msra.mxu0 0
        %3619 = vmatprep.subr.bf16.mxu0 0
        %3620 = vmatpush1.bf16.msra.mxu0 0
        %3621 = vmatprep.subr.bf16.mxu0 0
        %3622 = vmatpush1.bf16.msra.mxu0 0
        %3623 = vmatprep.subr.bf16.mxu0 0
        %3624 = vmatpush1.bf16.msra.mxu0 0
        %3625 = vmatprep.subr.bf16.mxu0 0
        %3626 = vmatpush1.bf16.msra.mxu0 0
        %3627 = vmatprep.subr.bf16.mxu0 0
        %3628 = vmatpush1.bf16.msra.mxu0 0
        %3629 = vmatprep.subr.bf16.mxu0 0
        %3630 = vmatpush1.bf16.msra.mxu0 0
        %3631 = vmatprep.subr.bf16.mxu0 0
        %3632 = vmatpush1.bf16.msra.mxu0 0
        %3633 = vmatprep.subr.bf16.mxu0 0
        %3634 = vmatpush1.bf16.msra.mxu0 0
        %3635 = vmatprep.subr.bf16.mxu0 0
        %3636 = vmatpush1.bf16.msra.mxu0 0
        %3637 = vmatprep.subr.bf16.mxu0 0
        %3638 = vmatpush1.bf16.msra.mxu0 0
        %3639 = vmatprep.subr.bf16.mxu0 0
        %3640 = vmatpush1.bf16.msra.mxu0 0
        %3641 = vmatprep.mubr.bf16.mxu0 0
        %3642 = vmatmul.mubr.bf16.gmra.mrb[0].mxu0 %v3583
        %v3643 = vpop.f32.mrb[0].mxu0
        %v3644 = vadd.f32 0.0, %v3643
        %v3645 = vpop.f32.mrb[0].mxu0
        %v3646 = vpop.f32.mrb[0].mxu0
        %v3647 = vadd.f32 0.0, %v3646
        %v3648 = vpop.f32.mrb[0].mxu0
        %3649 = vmatprep.mubr.bf16.mxu0 0
        %3650 = vmatmul.mubr.bf16.gmra.mrb[0].mxu0 %v3586
        %v3651 = vpop.f32.mrb[0].mxu0
        %v3652 = vadd.f32 0.0, %v3651
        %v3653 = vpop.f32.mrb[0].mxu0
        %v3654 = vpop.f32.mrb[0].mxu0
        %v3655 = vadd.f32 0.0, %v3654
        %v3656 = vpop.f32.mrb[0].mxu0
        %3657 = vmatprep.mubr.bf16.mxu0 0
        %3658 = vmatmul.mubr.bf16.gmra.mrb[0].mxu0 %v3589
        %v3659 = vpop.f32.mrb[0].mxu0
        %v3660 = vadd.f32 0.0, %v3659
        %v3661 = vpop.f32.mrb[0].mxu0
        %v3662 = vpop.f32.mrb[0].mxu0
        %v3663 = vadd.f32 0.0, %v3662
        %v3664 = vpop.f32.mrb[0].mxu0
        %3665 = vmatprep.mubr.bf16.mxu0 0
        %3666 = vmatmul.mubr.bf16.gmra.mrb[0].mxu0 %v3592
        %v3667 = vpop.f32.mrb[0].mxu0
        %v3668 = vadd.f32 0.0, %v3667
        %v3669 = vpop.f32.mrb[0].mxu0
        %v3670 = vpop.f32.mrb[0].mxu0
        %v3671 = vadd.f32 0.0, %v3670
        %v3672 = vpop.f32.mrb[0].mxu0
        %3673 = vmatprep.mubr.bf16.mxu0 0
        %3674 = vmatmul.mubr.bf16.gmra.mrb[0].mxu0 %v3595
        %v3675 = vpop.f32.mrb[0].mxu0
        %v3676 = vadd.f32 0.0, %v3675
        %v3677 = vpop.f32.mrb[0].mxu0
        %v3678 = vpop.f32.mrb[0].mxu0
        %v3679 = vadd.f32 0.0, %v3678
        %v3680 = vpop.f32.mrb[0].mxu0
        %3681 = vmatprep.mubr.bf16.mxu0 0
        %3682 = vmatmul.mubr.bf16.gmra.mrb[0].mxu0 %v3598
        %v3683 = vpop.f32.mrb[0].mxu0
        %v3684 = vadd.f32 0.0, %v3683
        %v3685 = vpop.f32.mrb[0].mxu0
        %v3686 = vpop.f32.mrb[0].mxu0
        %v3687 = vadd.f32 0.0, %v3686
        %v3688 = vpop.f32.mrb[0].mxu0
        %3689 = vmatprep.mubr.bf16.mxu0 0
        %3690 = vmatmul.mubr.bf16.gmra.mrb[0].mxu0 %v3601
        %v3691 = vpop.f32.mrb[0].mxu0
        %v3692 = vadd.f32 0.0, %v3691
        %v3693 = vpop.f32.mrb[0].mxu0
        %v3694 = vpop.f32.mrb[0].mxu0
        %v3695 = vadd.f32 0.0, %v3694
        %v3696 = vpop.f32.mrb[0].mxu0
        %3697 = vmatprep.mubr.bf16.mxu0 0
        %3698 = vmatmul.mubr.bf16.gmra.mrb[0].mxu0 %v3604
        %v3699 = vpop.f32.mrb[0].mxu0
        %v3700 = vadd.f32 0.0, %v3699
        %v3701 = vpop.f32.mrb[0].mxu0
        %v3702 = vpop.f32.mrb[0].mxu0
        %v3703 = vadd.f32 0.0, %v3702
        %v3704 = vpop.f32.mrb[0].mxu0
        %3705 = vdwg.mxu0
        %v3706 = vadd.f32 %v3497, %v3644
        %v3707 = vadd.f32 %v3498, %v3647
        %v3708 = vadd.f32 %v3499, %v3652
        %v3709 = vadd.f32 %v3500, %v3655
        %v3710 = vadd.f32 %v3501, %v3660
        %v3711 = vadd.f32 %v3502, %v3663
        %v3712 = vadd.f32 %v3503, %v3668
        %v3713 = vadd.f32 %v3504, %v3671
        %v3714 = vadd.f32 %v3505, %v3676
        %v3715 = vadd.f32 %v3506, %v3679
        %v3716 = vadd.f32 %v3507, %v3684
        %v3717 = vadd.f32 %v3508, %v3687
        %v3718 = vadd.f32 %v3509, %v3692
        %v3719 = vadd.f32 %v3510, %v3695
        %v3720 = vadd.f32 %v3511, %v3700
        %v3721 = vadd.f32 %v3512, %v3703
        %v3722 = vld [vmem:[%s5] sm:$0x1]
        %v3724 = vlaneseq
        %v3725 = vshrl.u32 %v3724, 7
        %v3726 = vsub.s32 0, %v3725
        %v3727 = vrot.slane %v3722, %v3726
        %v3729 = vadd.f32 %v3706, %v3727
        %v3730 = vadd.f32 %v3707, %v3727
        %v3731 = vadd.f32 %v3708, %v3727
        %v3732 = vadd.f32 %v3709, %v3727
        %v3733 = vadd.f32 %v3710, %v3727
        %v3734 = vadd.f32 %v3711, %v3727
        %v3735 = vadd.f32 %v3712, %v3727
        %v3736 = vadd.f32 %v3713, %v3727
        %v3737 = vadd.f32 %v3714, %v3727
        %v3738 = vadd.f32 %v3715, %v3727
        %v3739 = vadd.f32 %v3716, %v3727
        %v3740 = vadd.f32 %v3717, %v3727
        %v3741 = vadd.f32 %v3718, %v3727
        %v3742 = vadd.f32 %v3719, %v3727
        %v3743 = vadd.f32 %v3720, %v3727
        %v3744 = vadd.f32 %v3721, %v3727
        %v3745 = vmax.f32 %v3729, 0.0
        %v3746 = vmax.f32 %v3730, 0.0
        %v3747 = vmax.f32 %v3731, 0.0
        %v3748 = vmax.f32 %v3732, 0.0
        %v3749 = vmax.f32 %v3733, 0.0
        %v3750 = vmax.f32 %v3734, 0.0
        %v3751 = vmax.f32 %v3735, 0.0
        %v3752 = vmax.f32 %v3736, 0.0
        %v3753 = vmax.f32 %v3737, 0.0
        %v3754 = vmax.f32 %v3738, 0.0
        %v3755 = vmax.f32 %v3739, 0.0
        %v3756 = vmax.f32 %v3740, 0.0
        %v3757 = vmax.f32 %v3741, 0.0
        %v3758 = vmax.f32 %v3742, 0.0
        %v3759 = vmax.f32 %v3743, 0.0
        %v3760 = vmax.f32 %v3744, 0.0
        %vm3761 = vcmask 654336
        %3762 = vst.msk [vmem:[#allocation3] sm:$0xff] %vm3761, %v3745
        %3763 = vst.msk [vmem:[#allocation3 + $0x8] sm:$0xff] %vm3761, %v3746
        %3764 = vst.msk [vmem:[#allocation3 + $0x10] sm:$0xff] %vm3761, %v3747
        %3765 = vst.msk [vmem:[#allocation3 + $0x18] sm:$0xff] %vm3761, %v3748
        %3766 = vst.msk [vmem:[#allocation3 + $0x20] sm:$0xff] %vm3761, %v3749
        %3767 = vst.msk [vmem:[#allocation3 + $0x28] sm:$0xff] %vm3761, %v3750
        %3768 = vst.msk [vmem:[#allocation3 + $0x30] sm:$0xff] %vm3761, %v3751
        %3769 = vst.msk [vmem:[#allocation3 + $0x38] sm:$0xff] %vm3761, %v3752
        %3770 = vst.msk [vmem:[#allocation3 + $0x40] sm:$0xff] %vm3761, %v3753
        %3771 = vst.msk [vmem:[#allocation3 + $0x48] sm:$0xff] %vm3761, %v3754
        %3772 = vst.msk [vmem:[#allocation3 + $0x50] sm:$0xff] %vm3761, %v3755
        %3773 = vst.msk [vmem:[#allocation3 + $0x58] sm:$0xff] %vm3761, %v3756
        %3774 = vst.msk [vmem:[#allocation3 + $0x60] sm:$0xff] %vm3761, %v3757
        %3775 = vst.msk [vmem:[#allocation3 + $0x68] sm:$0xff] %vm3761, %v3758
        %3776 = vst.msk [vmem:[#allocation3 + $0x70] sm:$0xff] %vm3761, %v3759
        %3777 = vst.msk [vmem:[#allocation3 + $0x78] sm:$0xff] %vm3761, %v3760
        %v3778 = vld [vmem:[#allocation3] ss:$2 sm:$0xff]
        %s3779 = scalar_lea.vmem [#allocation3], 16
        %v3780 = vld [vmem:[%s3779] ss:$2 sm:$0xff]
        %s3781 = scalar_lea.vmem [#allocation3], 32
        %v3782 = vld [vmem:[%s3781] ss:$2 sm:$0xff]
        %s3783 = scalar_lea.vmem [#allocation3], 48
        %v3784 = vld [vmem:[%s3783] ss:$2 sm:$0xff]
        %s3785 = scalar_lea.vmem [#allocation3], 64
        %v3786 = vld [vmem:[%s3785] ss:$2 sm:$0xff]
        %s3787 = scalar_lea.vmem [#allocation3], 80
        %v3788 = vld [vmem:[%s3787] ss:$2 sm:$0xff]
        %s3789 = scalar_lea.vmem [#allocation3], 96
        %v3790 = vld [vmem:[%s3789] ss:$2 sm:$0xff]
        %s3791 = scalar_lea.vmem [#allocation3], 112
        %v3792 = vld [vmem:[%s3791] ss:$2 sm:$0xff]
        %s3793 = scalar_lea.vmem [#allocation3], 1
        %v3794 = vld [vmem:[%s3793] ss:$2 sm:$0xff]
        %s3795 = scalar_lea.vmem [#allocation3], 17
        %v3796 = vld [vmem:[%s3795] ss:$2 sm:$0xff]
        %s3797 = scalar_lea.vmem [#allocation3], 33
        %v3798 = vld [vmem:[%s3797] ss:$2 sm:$0xff]
        %s3799 = scalar_lea.vmem [#allocation3], 49
        %v3800 = vld [vmem:[%s3799] ss:$2 sm:$0xff]
        %s3801 = scalar_lea.vmem [#allocation3], 65
        %v3802 = vld [vmem:[%s3801] ss:$2 sm:$0xff]
        %s3803 = scalar_lea.vmem [#allocation3], 81
        %v3804 = vld [vmem:[%s3803] ss:$2 sm:$0xff]
        %s3805 = scalar_lea.vmem [#allocation3], 97
        %v3806 = vld [vmem:[%s3805] ss:$2 sm:$0xff]
        %s3807 = scalar_lea.vmem [#allocation3], 113
        %v3808 = vld [vmem:[%s3807] ss:$2 sm:$0xff]
        %v3809 = vmax.f32 %v3778, %v3794
        %v3810 = vmax.f32 %v3780, %v3796
        %v3811 = vmax.f32 %v3782, %v3798
        %v3812 = vmax.f32 %v3784, %v3800
        %v3813 = vmax.f32 %v3786, %v3802
        %v3814 = vmax.f32 %v3788, %v3804
        %v3815 = vmax.f32 %v3790, %v3806
        %v3816 = vmax.f32 %v3792, %v3808
        %v3817 = vpack.c.bf16 %v3810, %v3809
        %v3818 = vpack.c.bf16 %v3812, %v3811
        %v3819 = vpack.c.bf16 %v3814, %v3813
        %v3820 = vpack.c.bf16 %v3816, %v3815
        %v3821 = vld [vmem:[%s6] sm:$0xf]
        %v3822 = vld [vmem:[%s6 + $0x4] sm:$0xf]
        %v3823 = vld [vmem:[%s6 + $0x8] sm:$0xf]
        %v3824 = vld [vmem:[%s6 + $0xc] sm:$0xf]
        %v3825 = vld [vmem:[%s6 + $0x10] sm:$0xf]
        %v3826 = vld [vmem:[%s6 + $0x14] sm:$0xf]
        %v3827 = vld [vmem:[%s6 + $0x18] sm:$0xf]
        %v3828 = vld [vmem:[%s6 + $0x1c] sm:$0xf]
        %v3829 = vld [vmem:[%s6 + $0x20] sm:$0xf]
        %v3830 = vld [vmem:[%s6 + $0x24] sm:$0xf]
        %v3841 = vunpack.c.l.b16 %v3821
        %v3842 = vunpack.c.l.b16 %v3822
        %v3843 = vunpack.c.l.b16 %v3823
        %v3844 = vunpack.c.l.b16 %v3824
        %v3845 = vunpack.c.l.b16 %v3825
        %v3846 = vunpack.c.l.b16 %v3826
        %v3847 = vunpack.c.l.b16 %v3827
        %v3848 = vunpack.c.l.b16 %v3828
        %v3849 = vunpack.c.l.b16 %v3829
        %v3850 = vunpack.c.l.b16 %v3830
        %v3851 = vpack.c.b16 %v3842, %v3841
        %v3852 = vpack.c.b16 %v3844, %v3843
        %v3853 = vpack.c.b16 %v3846, %v3845
        %v3854 = vpack.c.b16 %v3848, %v3847
        %v3855 = vpack.c.b16 %v3850, %v3849
        %v3862 = vsel %vm3761, %v3817, 0
        %v3865 = vsel %vm3761, %v3818, 0
        %v3868 = vsel %vm3761, %v3819, 0
        %v3871 = vsel %vm3761, %v3820, 0
        %3873 = vmatprep.subr.bf16.mxu0 0
        %3874 = vmatpush1.bf16.msra.mxu0 %v3851
        %3875 = vmatprep.subr.bf16.mxu0 0
        %3876 = vmatpush1.bf16.msra.mxu0 %v3852
        %3877 = vmatprep.subr.bf16.mxu0 0
        %3878 = vmatpush1.bf16.msra.mxu0 %v3853
        %3879 = vmatprep.subr.bf16.mxu0 0
        %3880 = vmatpush1.bf16.msra.mxu0 %v3854
        %3881 = vmatprep.subr.bf16.mxu0 0
        %3882 = vmatpush1.bf16.msra.mxu0 %v3855
        %3883 = vmatprep.subr.bf16.mxu0 0
        %3884 = vmatpush1.bf16.msra.mxu0 0
        %3885 = vmatprep.subr.bf16.mxu0 0
        %3886 = vmatpush1.bf16.msra.mxu0 0
        %3887 = vmatprep.subr.bf16.mxu0 0
        %3888 = vmatpush1.bf16.msra.mxu0 0
        %3889 = vmatprep.subr.bf16.mxu0 0
        %3890 = vmatpush1.bf16.msra.mxu0 0
        %3891 = vmatprep.subr.bf16.mxu0 0
        %3892 = vmatpush1.bf16.msra.mxu0 0
        %3893 = vmatprep.subr.bf16.mxu0 0
        %3894 = vmatpush1.bf16.msra.mxu0 0
        %3895 = vmatprep.subr.bf16.mxu0 0
        %3896 = vmatpush1.bf16.msra.mxu0 0
        %3897 = vmatprep.subr.bf16.mxu0 0
        %3898 = vmatpush1.bf16.msra.mxu0 0
        %3899 = vmatprep.subr.bf16.mxu0 0
        %3900 = vmatpush1.bf16.msra.mxu0 0
        %3901 = vmatprep.subr.bf16.mxu0 0
        %3902 = vmatpush1.bf16.msra.mxu0 0
        %3903 = vmatprep.subr.bf16.mxu0 0
        %3904 = vmatpush1.bf16.msra.mxu0 0
        %3905 = vmatprep.mubr.bf16.mxu0 0
        %3906 = vmatmul.mubr.bf16.gmra.mrb[0].mxu0 %v3862
        %v3907 = vpop.f32.mrb[0].mxu0
        %v3908 = vadd.f32 0.0, %v3907
        %v3909 = vpop.f32.mrb[0].mxu0
        %v3910 = vpop.f32.mrb[0].mxu0
        %v3911 = vadd.f32 0.0, %v3910
        %v3912 = vpop.f32.mrb[0].mxu0
        %3913 = vmatprep.mubr.bf16.mxu0 0
        %3914 = vmatmul.mubr.bf16.gmra.mrb[0].mxu0 %v3865
        %v3915 = vpop.f32.mrb[0].mxu0
        %v3916 = vadd.f32 0.0, %v3915
        %v3917 = vpop.f32.mrb[0].mxu0
        %v3918 = vpop.f32.mrb[0].mxu0
        %v3919 = vadd.f32 0.0, %v3918
        %v3920 = vpop.f32.mrb[0].mxu0
        %3921 = vmatprep.mubr.bf16.mxu0 0
        %3922 = vmatmul.mubr.bf16.gmra.mrb[0].mxu0 %v3868
        %v3923 = vpop.f32.mrb[0].mxu0
        %v3924 = vadd.f32 0.0, %v3923
        %v3925 = vpop.f32.mrb[0].mxu0
        %v3926 = vpop.f32.mrb[0].mxu0
        %v3927 = vadd.f32 0.0, %v3926
        %v3928 = vpop.f32.mrb[0].mxu0
        %3929 = vmatprep.mubr.bf16.mxu0 0
        %3930 = vmatmul.mubr.bf16.gmra.mrb[0].mxu0 %v3871
        %v3931 = vpop.f32.mrb[0].mxu0
        %v3932 = vadd.f32 0.0, %v3931
        %v3933 = vpop.f32.mrb[0].mxu0
        %v3934 = vpop.f32.mrb[0].mxu0
        %v3935 = vadd.f32 0.0, %v3934
        %v3936 = vpop.f32.mrb[0].mxu0
        %3937 = vdwg.mxu0
        %s3938 = scalar_lea.vmem %s6, 40
        %v3939 = vld [vmem:[%s3938] sm:$0xf]
        %v3940 = vld [vmem:[%s3938 + $0x4] sm:$0xf]
        %v3941 = vld [vmem:[%s3938 + $0x8] sm:$0xf]
        %v3942 = vld [vmem:[%s3938 + $0xc] sm:$0xf]
        %v3943 = vld [vmem:[%s3938 + $0x10] sm:$0xf]
        %v3944 = vld [vmem:[%s3938 + $0x14] sm:$0xf]
        %v3945 = vld [vmem:[%s3938 + $0x18] sm:$0xf]
        %v3946 = vld [vmem:[%s3938 + $0x1c] sm:$0xf]
        %v3947 = vld [vmem:[%s3938 + $0x20] sm:$0xf]
        %v3948 = vld [vmem:[%s3938 + $0x24] sm:$0xf]
        %v3959 = vunpack.c.l.b16 %v3939
        %v3960 = vunpack.c.l.b16 %v3940
        %v3961 = vunpack.c.l.b16 %v3941
        %v3962 = vunpack.c.l.b16 %v3942
        %v3963 = vunpack.c.l.b16 %v3943
        %v3964 = vunpack.c.l.b16 %v3944
        %v3965 = vunpack.c.l.b16 %v3945
        %v3966 = vunpack.c.l.b16 %v3946
        %v3967 = vunpack.c.l.b16 %v3947
        %v3968 = vunpack.c.l.b16 %v3948
        %v3969 = vpack.c.b16 %v3960, %v3959
        %v3970 = vpack.c.b16 %v3962, %v3961
        %v3971 = vpack.c.b16 %v3964, %v3963
        %v3972 = vpack.c.b16 %v3966, %v3965
        %v3973 = vpack.c.b16 %v3968, %v3967
        %3979 = vmatprep.subr.bf16.mxu0 0
        %3980 = vmatpush1.bf16.msra.mxu0 %v3969
        %3981 = vmatprep.subr.bf16.mxu0 0
        %3982 = vmatpush1.bf16.msra.mxu0 %v3970
        %3983 = vmatprep.subr.bf16.mxu0 0
        %3984 = vmatpush1.bf16.msra.mxu0 %v3971
        %3985 = vmatprep.subr.bf16.mxu0 0
        %3986 = vmatpush1.bf16.msra.mxu0 %v3972
        %3987 = vmatprep.subr.bf16.mxu0 0
        %3988 = vmatpush1.bf16.msra.mxu0 %v3973
        %3989 = vmatprep.subr.bf16.mxu0 0
        %3990 = vmatpush1.bf16.msra.mxu0 0
        %3991 = vmatprep.subr.bf16.mxu0 0
        %3992 = vmatpush1.bf16.msra.mxu0 0
        %3993 = vmatprep.subr.bf16.mxu0 0
        %3994 = vmatpush1.bf16.msra.mxu0 0
        %3995 = vmatprep.subr.bf16.mxu0 0
        %3996 = vmatpush1.bf16.msra.mxu0 0
        %3997 = vmatprep.subr.bf16.mxu0 0
        %3998 = vmatpush1.bf16.msra.mxu0 0
        %3999 = vmatprep.subr.bf16.mxu0 0
        %4000 = vmatpush1.bf16.msra.mxu0 0
        %4001 = vmatprep.subr.bf16.mxu0 0
        %4002 = vmatpush1.bf16.msra.mxu0 0
        %4003 = vmatprep.subr.bf16.mxu0 0
        %4004 = vmatpush1.bf16.msra.mxu0 0
        %4005 = vmatprep.subr.bf16.mxu0 0
        %4006 = vmatpush1.bf16.msra.mxu0 0
        %4007 = vmatprep.subr.bf16.mxu0 0
        %4008 = vmatpush1.bf16.msra.mxu0 0
        %4009 = vmatprep.subr.bf16.mxu0 0
        %4010 = vmatpush1.bf16.msra.mxu0 0
        %4011 = vmatprep.mubr.bf16.mxu0 0
        %4012 = vmatmul.mubr.bf16.gmra.mrb[0].mxu0 %v3862
        %v4013 = vpop.f32.mrb[0].mxu0
        %v4014 = vadd.f32 0.0, %v4013
        %v4015 = vpop.f32.mrb[0].mxu0
        %v4016 = vpop.f32.mrb[0].mxu0
        %v4017 = vadd.f32 0.0, %v4016
        %v4018 = vpop.f32.mrb[0].mxu0
        %4019 = vmatprep.mubr.bf16.mxu0 0
        %4020 = vmatmul.mubr.bf16.gmra.mrb[0].mxu0 %v3865
        %v4021 = vpop.f32.mrb[0].mxu0
        %v4022 = vadd.f32 0.0, %v4021
        %v4023 = vpop.f32.mrb[0].mxu0
        %v4024 = vpop.f32.mrb[0].mxu0
        %v4025 = vadd.f32 0.0, %v4024
        %v4026 = vpop.f32.mrb[0].mxu0
        %4027 = vmatprep.mubr.bf16.mxu0 0
        %4028 = vmatmul.mubr.bf16.gmra.mrb[0].mxu0 %v3868
        %v4029 = vpop.f32.mrb[0].mxu0
        %v4030 = vadd.f32 0.0, %v4029
        %v4031 = vpop.f32.mrb[0].mxu0
        %v4032 = vpop.f32.mrb[0].mxu0
        %v4033 = vadd.f32 0.0, %v4032
        %v4034 = vpop.f32.mrb[0].mxu0
        %4035 = vmatprep.mubr.bf16.mxu0 0
        %4036 = vmatmul.mubr.bf16.gmra.mrb[0].mxu0 %v3871
        %v4037 = vpop.f32.mrb[0].mxu0
        %v4038 = vadd.f32 0.0, %v4037
        %v4039 = vpop.f32.mrb[0].mxu0
        %v4040 = vpop.f32.mrb[0].mxu0
        %v4041 = vadd.f32 0.0, %v4040
        %v4042 = vpop.f32.mrb[0].mxu0
        %4043 = vdwg.mxu0
        %v4044 = vmax.f32 %v3908, %v4014
        %v4045 = vmax.f32 %v3911, %v4017
        %v4046 = vmax.f32 %v3916, %v4022
        %v4047 = vmax.f32 %v3919, %v4025
        %v4048 = vmax.f32 %v3924, %v4030
        %v4049 = vmax.f32 %v3927, %v4033
        %v4050 = vmax.f32 %v3932, %v4038
        %v4051 = vmax.f32 %v3935, %v4041
        %vm4052 = vcmask 326656
        %4053 = vst.msk [vmem:[#allocation4] sm:$0xff] %vm4052, %v4044
        %4054 = vst.msk [vmem:[#allocation4 + $0x8] sm:$0xff] %vm4052, %v4045
        %4055 = vst.msk [vmem:[#allocation4 + $0x10] sm:$0xff] %vm4052, %v4046
        %4056 = vst.msk [vmem:[#allocation4 + $0x18] sm:$0xff] %vm4052, %v4047
        %4057 = vst.msk [vmem:[#allocation4 + $0x20] sm:$0xff] %vm4052, %v4048
        %4058 = vst.msk [vmem:[#allocation4 + $0x28] sm:$0xff] %vm4052, %v4049
        %4059 = vst.msk [vmem:[#allocation4 + $0x30] sm:$0xff] %vm4052, %v4050
        %4060 = vst.msk [vmem:[#allocation4 + $0x38] sm:$0xff] %vm4052, %v4051
        %v4061 = vld [vmem:[#allocation4] ss:$8 sm:$0xf]
        %v4062 = vld [vmem:[#allocation4] ss:$8 sm:$0xf0]
        %v4063 = vor.u32 %v4061, %v4062
        %v4064 = vpack.c.bf16 %v4063, %v4063
        %v4065 = vld [vmem:[%s7] sm:$0xf]
        %v4066 = vld [vmem:[%s7 + $0x4] sm:$0xf]
        %v4067 = vld [vmem:[%s7 + $0x8] sm:$0xf]
        %v4068 = vld [vmem:[%s7 + $0xc] sm:$0xf]
        %v4069 = vld [vmem:[%s7 + $0x10] sm:$0xf]
        %s4070 = scalar_lea.vmem [#allocation4], 1
        %v4071 = vld [vmem:[%s4070] ss:$8 sm:$0xf]
        %v4072 = vld [vmem:[%s4070] ss:$8 sm:$0xf0]
        %v4073 = vor.u32 %v4071, %v4072
        %v4074 = vpack.c.bf16 %v4073, %v4073
        %s4075 = scalar_lea.vmem %s7, 20
        %v4076 = vld [vmem:[%s4075] sm:$0xf]
        %v4077 = vld [vmem:[%s4075 + $0x4] sm:$0xf]
        %v4078 = vld [vmem:[%s4075 + $0x8] sm:$0xf]
        %v4079 = vld [vmem:[%s4075 + $0xc] sm:$0xf]
        %v4080 = vld [vmem:[%s4075 + $0x10] sm:$0xf]
        %v4086 = vunpack.c.l.b16 %v4076
        %v4087 = vunpack.c.l.b16 %v4077
        %v4088 = vunpack.c.l.b16 %v4078
        %v4089 = vunpack.c.l.b16 %v4079
        %v4090 = vunpack.c.l.b16 %v4080
        %v4091 = vpack.c.b16 %v4087, %v4086
        %v4092 = vpack.c.b16 %v4089, %v4088
        %v4093 = vpack.c.b16 %v4090, %v4090
        %v4097 = vsel %vm4052, %v4074, 0
        %v4100 = vsel %vm2849, %v4093, 0
        %4102 = vmatprep.subr.bf16.mxu0 0
        %4103 = vmatpush1.bf16.msra.mxu0 %v4091
        %4104 = vmatprep.subr.bf16.mxu0 0
        %4105 = vmatpush1.bf16.msra.mxu0 %v4092
        %4106 = vmatprep.subr.bf16.mxu0 0
        %4107 = vmatpush1.bf16.msra.mxu0 %v4100
        %4108 = vmatprep.subr.bf16.mxu0 0
        %4109 = vmatpush1.bf16.msra.mxu0 0
        %4110 = vmatprep.subr.bf16.mxu0 0
        %4111 = vmatpush1.bf16.msra.mxu0 0
        %4112 = vmatprep.subr.bf16.mxu0 0
        %4113 = vmatpush1.bf16.msra.mxu0 0
        %4114 = vmatprep.subr.bf16.mxu0 0
        %4115 = vmatpush1.bf16.msra.mxu0 0
        %4116 = vmatprep.subr.bf16.mxu0 0
        %4117 = vmatpush1.bf16.msra.mxu0 0
        %4118 = vmatprep.subr.bf16.mxu0 0
        %4119 = vmatpush1.bf16.msra.mxu0 0
        %4120 = vmatprep.subr.bf16.mxu0 0
        %4121 = vmatpush1.bf16.msra.mxu0 0
        %4122 = vmatprep.subr.bf16.mxu0 0
        %4123 = vmatpush1.bf16.msra.mxu0 0
        %4124 = vmatprep.subr.bf16.mxu0 0
        %4125 = vmatpush1.bf16.msra.mxu0 0
        %4126 = vmatprep.subr.bf16.mxu0 0
        %4127 = vmatpush1.bf16.msra.mxu0 0
        %4128 = vmatprep.subr.bf16.mxu0 0
        %4129 = vmatpush1.bf16.msra.mxu0 0
        %4130 = vmatprep.subr.bf16.mxu0 0
        %4131 = vmatpush1.bf16.msra.mxu0 0
        %4132 = vmatprep.subr.bf16.mxu0 0
        %4133 = vmatpush1.bf16.msra.mxu0 0
        %4134 = vmatprep.mubr.bf16.mxu0 0
        %4135 = vmatmul.mubr.bf16.gmra.mrb[0].mxu0 %v4097
        %v4136 = vpop.f32.mrb[0].mxu0
        %v4137 = vadd.f32 0.0, %v4136
        %v4138 = vpop.f32.mrb[0].mxu0
        %v4139 = vpop.f32.mrb[0].mxu0
        %v4140 = vpop.f32.mrb[0].mxu0
        %4141 = vdwg.mxu0
        %v4147 = vunpack.c.l.b16 %v4065
        %v4148 = vunpack.c.l.b16 %v4066
        %v4149 = vunpack.c.l.b16 %v4067
        %v4150 = vunpack.c.l.b16 %v4068
        %v4151 = vunpack.c.l.b16 %v4069
        %v4152 = vpack.c.b16 %v4148, %v4147
        %v4153 = vpack.c.b16 %v4150, %v4149
        %v4154 = vpack.c.b16 %v4151, %v4151
        %v4158 = vsel %vm4052, %v4064, 0
        %v4161 = vsel %vm2849, %v4154, 0
        %4163 = vmatprep.subr.bf16.mxu0 0
        %4164 = vmatpush1.bf16.msra.mxu0 %v4152
        %4165 = vmatprep.subr.bf16.mxu0 0
        %4166 = vmatpush1.bf16.msra.mxu0 %v4153
        %4167 = vmatprep.subr.bf16.mxu0 0
        %4168 = vmatpush1.bf16.msra.mxu0 %v4161
        %4169 = vmatprep.subr.bf16.mxu0 0
        %4170 = vmatpush1.bf16.msra.mxu0 0
        %4171 = vmatprep.subr.bf16.mxu0 0
        %4172 = vmatpush1.bf16.msra.mxu0 0
        %4173 = vmatprep.subr.bf16.mxu0 0
        %4174 = vmatpush1.bf16.msra.mxu0 0
        %4175 = vmatprep.subr.bf16.mxu0 0
        %4176 = vmatpush1.bf16.msra.mxu0 0
        %4177 = vmatprep.subr.bf16.mxu0 0
        %4178 = vmatpush1.bf16.msra.mxu0 0
        %4179 = vmatprep.subr.bf16.mxu0 0
        %4180 = vmatpush1.bf16.msra.mxu0 0
        %4181 = vmatprep.subr.bf16.mxu0 0
        %4182 = vmatpush1.bf16.msra.mxu0 0
        %4183 = vmatprep.subr.bf16.mxu0 0
        %4184 = vmatpush1.bf16.msra.mxu0 0
        %4185 = vmatprep.subr.bf16.mxu0 0
        %4186 = vmatpush1.bf16.msra.mxu0 0
        %4187 = vmatprep.subr.bf16.mxu0 0
        %4188 = vmatpush1.bf16.msra.mxu0 0
        %4189 = vmatprep.subr.bf16.mxu0 0
        %4190 = vmatpush1.bf16.msra.mxu0 0
        %4191 = vmatprep.subr.bf16.mxu0 0
        %4192 = vmatpush1.bf16.msra.mxu0 0
        %4193 = vmatprep.subr.bf16.mxu0 0
        %4194 = vmatpush1.bf16.msra.mxu0 0
        %4195 = vmatprep.mubr.bf16.mxu0 0
        %4196 = vmatmul.mubr.bf16.gmra.mrb[0].mxu0 %v4158
        %v4197 = vpop.f32.mrb[0].mxu0
        %v4198 = vadd.f32 %v4137, %v4197
        %v4199 = vpop.f32.mrb[0].mxu0
        %v4200 = vpop.f32.mrb[0].mxu0
        %v4201 = vpop.f32.mrb[0].mxu0
        %4202 = vdwg.mxu0
        %s4203 = scalar_lea.vmem [#allocation4], 2
        %v4204 = vld [vmem:[%s4203] ss:$8 sm:$0xf]
        %v4205 = vld [vmem:[%s4203] ss:$8 sm:$0xf0]
        %v4206 = vor.u32 %v4204, %v4205
        %v4207 = vpack.c.bf16 %v4206, %v4206
        %s4208 = scalar_lea.vmem %s7, 40
        %v4209 = vld [vmem:[%s4208] sm:$0xf]
        %v4210 = vld [vmem:[%s4208 + $0x4] sm:$0xf]
        %v4211 = vld [vmem:[%s4208 + $0x8] sm:$0xf]
        %v4212 = vld [vmem:[%s4208 + $0xc] sm:$0xf]
        %v4213 = vld [vmem:[%s4208 + $0x10] sm:$0xf]
        %v4219 = vunpack.c.l.b16 %v4209
        %v4220 = vunpack.c.l.b16 %v4210
        %v4221 = vunpack.c.l.b16 %v4211
        %v4222 = vunpack.c.l.b16 %v4212
        %v4223 = vunpack.c.l.b16 %v4213
        %v4224 = vpack.c.b16 %v4220, %v4219
        %v4225 = vpack.c.b16 %v4222, %v4221
        %v4226 = vpack.c.b16 %v4223, %v4223
        %v4230 = vsel %vm4052, %v4207, 0
        %v4233 = vsel %vm2849, %v4226, 0
        %4235 = vmatprep.subr.bf16.mxu0 0
        %4236 = vmatpush1.bf16.msra.mxu0 %v4224
        %4237 = vmatprep.subr.bf16.mxu0 0
        %4238 = vmatpush1.bf16.msra.mxu0 %v4225
        %4239 = vmatprep.subr.bf16.mxu0 0
        %4240 = vmatpush1.bf16.msra.mxu0 %v4233
        %4241 = vmatprep.subr.bf16.mxu0 0
        %4242 = vmatpush1.bf16.msra.mxu0 0
        %4243 = vmatprep.subr.bf16.mxu0 0
        %4244 = vmatpush1.bf16.msra.mxu0 0
        %4245 = vmatprep.subr.bf16.mxu0 0
        %4246 = vmatpush1.bf16.msra.mxu0 0
        %4247 = vmatprep.subr.bf16.mxu0 0
        %4248 = vmatpush1.bf16.msra.mxu0 0
        %4249 = vmatprep.subr.bf16.mxu0 0
        %4250 = vmatpush1.bf16.msra.mxu0 0
        %4251 = vmatprep.subr.bf16.mxu0 0
        %4252 = vmatpush1.bf16.msra.mxu0 0
        %4253 = vmatprep.subr.bf16.mxu0 0
        %4254 = vmatpush1.bf16.msra.mxu0 0
        %4255 = vmatprep.subr.bf16.mxu0 0
        %4256 = vmatpush1.bf16.msra.mxu0 0
        %4257 = vmatprep.subr.bf16.mxu0 0
        %4258 = vmatpush1.bf16.msra.mxu0 0
        %4259 = vmatprep.subr.bf16.mxu0 0
        %4260 = vmatpush1.bf16.msra.mxu0 0
        %4261 = vmatprep.subr.bf16.mxu0 0
        %4262 = vmatpush1.bf16.msra.mxu0 0
        %4263 = vmatprep.subr.bf16.mxu0 0
        %4264 = vmatpush1.bf16.msra.mxu0 0
        %4265 = vmatprep.subr.bf16.mxu0 0
        %4266 = vmatpush1.bf16.msra.mxu0 0
        %4267 = vmatprep.mubr.bf16.mxu0 0
        %4268 = vmatmul.mubr.bf16.gmra.mrb[0].mxu0 %v4230
        %v4269 = vpop.f32.mrb[0].mxu0
        %v4270 = vadd.f32 0.0, %v4269
        %v4271 = vpop.f32.mrb[0].mxu0
        %v4272 = vpop.f32.mrb[0].mxu0
        %v4273 = vpop.f32.mrb[0].mxu0
        %4274 = vdwg.mxu0
        %v4275 = vadd.f32 %v4198, %v4270
        %s4276 = scalar_lea.vmem [#allocation4], 3
        %v4277 = vld [vmem:[%s4276] ss:$8 sm:$0xf]
        %v4278 = vld [vmem:[%s4276] ss:$8 sm:$0xf0]
        %v4279 = vor.u32 %v4277, %v4278
        %v4280 = vpack.c.bf16 %v4279, %v4279
        %s4281 = scalar_lea.vmem %s7, 60
        %v4282 = vld [vmem:[%s4281] sm:$0xf]
        %v4283 = vld [vmem:[%s4281 + $0x4] sm:$0xf]
        %v4284 = vld [vmem:[%s4281 + $0x8] sm:$0xf]
        %v4285 = vld [vmem:[%s4281 + $0xc] sm:$0xf]
        %v4286 = vld [vmem:[%s4281 + $0x10] sm:$0xf]
        %v4292 = vunpack.c.l.b16 %v4282
        %v4293 = vunpack.c.l.b16 %v4283
        %v4294 = vunpack.c.l.b16 %v4284
        %v4295 = vunpack.c.l.b16 %v4285
        %v4296 = vunpack.c.l.b16 %v4286
        %v4297 = vpack.c.b16 %v4293, %v4292
        %v4298 = vpack.c.b16 %v4295, %v4294
        %v4299 = vpack.c.b16 %v4296, %v4296
        %v4303 = vsel %vm4052, %v4280, 0
        %v4306 = vsel %vm2849, %v4299, 0
        %4308 = vmatprep.subr.bf16.mxu0 0
        %4309 = vmatpush1.bf16.msra.mxu0 %v4297
        %4310 = vmatprep.subr.bf16.mxu0 0
        %4311 = vmatpush1.bf16.msra.mxu0 %v4298
        %4312 = vmatprep.subr.bf16.mxu0 0
        %4313 = vmatpush1.bf16.msra.mxu0 %v4306
        %4314 = vmatprep.subr.bf16.mxu0 0
        %4315 = vmatpush1.bf16.msra.mxu0 0
        %4316 = vmatprep.subr.bf16.mxu0 0
        %4317 = vmatpush1.bf16.msra.mxu0 0
        %4318 = vmatprep.subr.bf16.mxu0 0
        %4319 = vmatpush1.bf16.msra.mxu0 0
        %4320 = vmatprep.subr.bf16.mxu0 0
        %4321 = vmatpush1.bf16.msra.mxu0 0
        %4322 = vmatprep.subr.bf16.mxu0 0
        %4323 = vmatpush1.bf16.msra.mxu0 0
        %4324 = vmatprep.subr.bf16.mxu0 0
        %4325 = vmatpush1.bf16.msra.mxu0 0
        %4326 = vmatprep.subr.bf16.mxu0 0
        %4327 = vmatpush1.bf16.msra.mxu0 0
        %4328 = vmatprep.subr.bf16.mxu0 0
        %4329 = vmatpush1.bf16.msra.mxu0 0
        %4330 = vmatprep.subr.bf16.mxu0 0
        %4331 = vmatpush1.bf16.msra.mxu0 0
        %4332 = vmatprep.subr.bf16.mxu0 0
        %4333 = vmatpush1.bf16.msra.mxu0 0
        %4334 = vmatprep.subr.bf16.mxu0 0
        %4335 = vmatpush1.bf16.msra.mxu0 0
        %4336 = vmatprep.subr.bf16.mxu0 0
        %4337 = vmatpush1.bf16.msra.mxu0 0
        %4338 = vmatprep.subr.bf16.mxu0 0
        %4339 = vmatpush1.bf16.msra.mxu0 0
        %4340 = vmatprep.mubr.bf16.mxu0 0
        %4341 = vmatmul.mubr.bf16.gmra.mrb[0].mxu0 %v4303
        %v4342 = vpop.f32.mrb[0].mxu0
        %v4343 = vadd.f32 0.0, %v4342
        %v4344 = vpop.f32.mrb[0].mxu0
        %v4345 = vpop.f32.mrb[0].mxu0
        %v4346 = vpop.f32.mrb[0].mxu0
        %4347 = vdwg.mxu0
        %v4348 = vadd.f32 %v4275, %v4343
        %s4349 = scalar_lea.vmem [#allocation4], 4
        %v4350 = vld [vmem:[%s4349] ss:$8 sm:$0xf]
        %v4351 = vld [vmem:[%s4349] ss:$8 sm:$0xf0]
        %v4352 = vor.u32 %v4350, %v4351
        %v4353 = vpack.c.bf16 %v4352, %v4352
        %s4354 = scalar_lea.vmem %s7, 80
        %v4355 = vld [vmem:[%s4354] sm:$0xf]
        %v4356 = vld [vmem:[%s4354 + $0x4] sm:$0xf]
        %v4357 = vld [vmem:[%s4354 + $0x8] sm:$0xf]
        %v4358 = vld [vmem:[%s4354 + $0xc] sm:$0xf]
        %v4359 = vld [vmem:[%s4354 + $0x10] sm:$0xf]
        %v4365 = vunpack.c.l.b16 %v4355
        %v4366 = vunpack.c.l.b16 %v4356
        %v4367 = vunpack.c.l.b16 %v4357
        %v4368 = vunpack.c.l.b16 %v4358
        %v4369 = vunpack.c.l.b16 %v4359
        %v4370 = vpack.c.b16 %v4366, %v4365
        %v4371 = vpack.c.b16 %v4368, %v4367
        %v4372 = vpack.c.b16 %v4369, %v4369
        %v4376 = vsel %vm4052, %v4353, 0
        %v4379 = vsel %vm2849, %v4372, 0
        %4381 = vmatprep.subr.bf16.mxu0 0
        %4382 = vmatpush1.bf16.msra.mxu0 %v4370
        %4383 = vmatprep.subr.bf16.mxu0 0
        %4384 = vmatpush1.bf16.msra.mxu0 %v4371
        %4385 = vmatprep.subr.bf16.mxu0 0
        %4386 = vmatpush1.bf16.msra.mxu0 %v4379
        %4387 = vmatprep.subr.bf16.mxu0 0
        %4388 = vmatpush1.bf16.msra.mxu0 0
        %4389 = vmatprep.subr.bf16.mxu0 0
        %4390 = vmatpush1.bf16.msra.mxu0 0
        %4391 = vmatprep.subr.bf16.mxu0 0
        %4392 = vmatpush1.bf16.msra.mxu0 0
        %4393 = vmatprep.subr.bf16.mxu0 0
        %4394 = vmatpush1.bf16.msra.mxu0 0
        %4395 = vmatprep.subr.bf16.mxu0 0
        %4396 = vmatpush1.bf16.msra.mxu0 0
        %4397 = vmatprep.subr.bf16.mxu0 0
        %4398 = vmatpush1.bf16.msra.mxu0 0
        %4399 = vmatprep.subr.bf16.mxu0 0
        %4400 = vmatpush1.bf16.msra.mxu0 0
        %4401 = vmatprep.subr.bf16.mxu0 0
        %4402 = vmatpush1.bf16.msra.mxu0 0
        %4403 = vmatprep.subr.bf16.mxu0 0
        %4404 = vmatpush1.bf16.msra.mxu0 0
        %4405 = vmatprep.subr.bf16.mxu0 0
        %4406 = vmatpush1.bf16.msra.mxu0 0
        %4407 = vmatprep.subr.bf16.mxu0 0
        %4408 = vmatpush1.bf16.msra.mxu0 0
        %4409 = vmatprep.subr.bf16.mxu0 0
        %4410 = vmatpush1.bf16.msra.mxu0 0
        %4411 = vmatprep.subr.bf16.mxu0 0
        %4412 = vmatpush1.bf16.msra.mxu0 0
        %4413 = vmatprep.mubr.bf16.mxu0 0
        %4414 = vmatmul.mubr.bf16.gmra.mrb[0].mxu0 %v4376
        %v4415 = vpop.f32.mrb[0].mxu0
        %v4416 = vadd.f32 0.0, %v4415
        %v4417 = vpop.f32.mrb[0].mxu0
        %v4418 = vpop.f32.mrb[0].mxu0
        %v4419 = vpop.f32.mrb[0].mxu0
        %4420 = vdwg.mxu0
        %v4421 = vadd.f32 %v4348, %v4416
        %v4422 = vld [vmem:[%s8] sm:$0x1]
        %v4424 = vlaneseq
        %v4425 = vshrl.u32 %v4424, 7
        %v4426 = vsub.s32 0, %v4425
        %v4427 = vrot.slane %v4422, %v4426
        %v4429 = vadd.f32 %v4421, %v4427
        %v4430 = vmax.f32 %v4429, 0.0
        %v4431 = vpack.c.bf16 %v4430, %v4430
        %v4432 = vld [vmem:[%s9] sm:$0xf]
        %v4433 = vld [vmem:[%s9 + $0x4] sm:$0xf]
        %v4434 = vld [vmem:[%s9 + $0x8] sm:$0xf]
        %v4435 = vld [vmem:[%s9 + $0xc] sm:$0xf]
        %v4436 = vld [vmem:[%s10] sm:$0x1]
        %v4438 = vlaneseq
        %v4439 = vshrl.u32 %v4438, 7
        %v4440 = vsub.s32 0, %v4439
        %v4441 = vrot.slane %v4436, %v4440
        %v4447 = vunpack.c.l.b16 %v4432
        %v4448 = vunpack.c.l.b16 %v4433
        %v4449 = vunpack.c.l.b16 %v4434
        %v4450 = vunpack.c.l.b16 %v4435
        %v4451 = vpack.c.b16 %v4448, %v4447
        %v4452 = vpack.c.b16 %v4450, %v4449
        %vm4455 = vcmask 261120
        %v4457 = vsel %vm4455, %v4431, 0
        %4459 = vmatprep.subr.bf16.mxu0 0
        %4460 = vmatpush1.bf16.msra.mxu0 %v4451
        %4461 = vmatprep.subr.bf16.mxu0 0
        %4462 = vmatpush1.bf16.msra.mxu0 %v4452
        %4463 = vmatprep.subr.bf16.mxu0 0
        %4464 = vmatpush1.bf16.msra.mxu0 0
        %4465 = vmatprep.subr.bf16.mxu0 0
        %4466 = vmatpush1.bf16.msra.mxu0 0
        %4467 = vmatprep.subr.bf16.mxu0 0
        %4468 = vmatpush1.bf16.msra.mxu0 0
        %4469 = vmatprep.subr.bf16.mxu0 0
        %4470 = vmatpush1.bf16.msra.mxu0 0
        %4471 = vmatprep.subr.bf16.mxu0 0
        %4472 = vmatpush1.bf16.msra.mxu0 0
        %4473 = vmatprep.subr.bf16.mxu0 0
        %4474 = vmatpush1.bf16.msra.mxu0 0
        %4475 = vmatprep.subr.bf16.mxu0 0
        %4476 = vmatpush1.bf16.msra.mxu0 0
        %4477 = vmatprep.subr.bf16.mxu0 0
        %4478 = vmatpush1.bf16.msra.mxu0 0
        %4479 = vmatprep.subr.bf16.mxu0 0
        %4480 = vmatpush1.bf16.msra.mxu0 0
        %4481 = vmatprep.subr.bf16.mxu0 0
        %4482 = vmatpush1.bf16.msra.mxu0 0
        %4483 = vmatprep.subr.bf16.mxu0 0
        %4484 = vmatpush1.bf16.msra.mxu0 0
        %4485 = vmatprep.subr.bf16.mxu0 0
        %4486 = vmatpush1.bf16.msra.mxu0 0
        %4487 = vmatprep.subr.bf16.mxu0 0
        %4488 = vmatpush1.bf16.msra.mxu0 0
        %4489 = vmatprep.subr.bf16.mxu0 0
        %4490 = vmatpush1.bf16.msra.mxu0 0
        %4491 = vmatprep.mubr.bf16.mxu0 0
        %4492 = vmatmul.mubr.bf16.gmra.mrb[0].mxu0 %v4457
        %v4493 = vpop.f32.mrb[0].mxu0
        %v4494 = vadd.f32 %v4441, %v4493
        %v4495 = vpop.f32.mrb[0].mxu0
        %v4496 = vpop.f32.mrb[0].mxu0
        %v4497 = vpop.f32.mrb[0].mxu0
        %4498 = vdwg.mxu0
        %v4499 = vmax.f32 %v4494, 0.0
        %v4500 = vpack.c.bf16 %v4499, %v4499
        %v4501 = vld [vmem:[%s11] sm:$0xf]
        %v4502 = vld [vmem:[%s11 + $0x4] sm:$0xf]
        %v4503 = vld [vmem:[%s12] sm:$0x1]
        %v4505 = vlaneseq
        %v4506 = vshrl.u32 %v4505, 7
        %v4507 = vsub.s32 0, %v4506
        %v4508 = vrot.slane %v4503, %v4507
        %v4512 = vunpack.c.l.b16 %v4501
        %v4513 = vunpack.c.l.b16 %v4502
        %v4514 = vpack.c.b16 %v4513, %v4512
        %vm4516 = vcmask 130048
        %v4518 = vsel %vm4516, %v4500, 0
        %4520 = vmatprep.subr.bf16.mxu0 0
        %4521 = vmatpush1.bf16.msra.mxu0 %v4514
        %4522 = vmatprep.subr.bf16.mxu0 0
        %4523 = vmatpush1.bf16.msra.mxu0 0
        %4524 = vmatprep.subr.bf16.mxu0 0
        %4525 = vmatpush1.bf16.msra.mxu0 0
        %4526 = vmatprep.subr.bf16.mxu0 0
        %4527 = vmatpush1.bf16.msra.mxu0 0
        %4528 = vmatprep.subr.bf16.mxu0 0
        %4529 = vmatpush1.bf16.msra.mxu0 0
        %4530 = vmatprep.subr.bf16.mxu0 0
        %4531 = vmatpush1.bf16.msra.mxu0 0
        %4532 = vmatprep.subr.bf16.mxu0 0
        %4533 = vmatpush1.bf16.msra.mxu0 0
        %4534 = vmatprep.subr.bf16.mxu0 0
        %4535 = vmatpush1.bf16.msra.mxu0 0
        %4536 = vmatprep.subr.bf16.mxu0 0
        %4537 = vmatpush1.bf16.msra.mxu0 0
        %4538 = vmatprep.subr.bf16.mxu0 0
        %4539 = vmatpush1.bf16.msra.mxu0 0
        %4540 = vmatprep.subr.bf16.mxu0 0
        %4541 = vmatpush1.bf16.msra.mxu0 0
        %4542 = vmatprep.subr.bf16.mxu0 0
        %4543 = vmatpush1.bf16.msra.mxu0 0
        %4544 = vmatprep.subr.bf16.mxu0 0
        %4545 = vmatpush1.bf16.msra.mxu0 0
        %4546 = vmatprep.subr.bf16.mxu0 0
        %4547 = vmatpush1.bf16.msra.mxu0 0
        %4548 = vmatprep.subr.bf16.mxu0 0
        %4549 = vmatpush1.bf16.msra.mxu0 0
        %4550 = vmatprep.subr.bf16.mxu0 0
        %4551 = vmatpush1.bf16.msra.mxu0 0
        %4552 = vmatprep.mubr.bf16.mxu0 0
        %4553 = vmatmul.mubr.bf16.gmra.mrb[0].mxu0 %v4518
        %v4554 = vpop.f32.mrb[0].mxu0
        %v4555 = vadd.f32 %v4508, %v4554
        %v4556 = vpop.f32.mrb[0].mxu0
        %v4557 = vpop.f32.mrb[0].mxu0
        %v4558 = vpop.f32.mrb[0].mxu0
        %4559 = vdwg.mxu0
        %vm4560 = vcmask 80896
        %4561 = vst.msk [vmem:[%s434] sm:$0xff] %vm4560, %v4555
        %s4562 = sand.u32 %s313, 1
        %s4563 = scalar_lea.sflag [#allocation6], %s4562
        %s4564 = sand.u32 %s313, 1
        %s4565 = smul.addr %s4564, 8
        %s4566 = scalar_lea.vmem [#allocation5], %s4565
        // Predicated region
        $region73: #{_lambda_.1} parent=71 // pred_check
          %p4567 = pneg %p323
        $region74: #{_lambda_.1} parent=71 // pred_check_branch
          %4569 = sbr.rel (%p4567) target = $region76
        $region75: #{_lambda_.1} parent=71 // pred_region
          %s4571 = ssub.s32 128, 128
          %4572 = vsyncadd %s4563, %s4571
          %s4573 = smul.addr %s27, 128
          %s4574 = scalar_lea.hbm %s13, %s4573
          %s4576 = sshll.u32 %s4566, 4
          %s4577 = int_to_ptr.vmem [resolvable:$true] %s4576
          %4579 = dma.vmem_to_hbm [thread:$0]  %s4577, 128, %s4574, %s4563
        $region76: #{_lambda_.1} parent=71 // pred_fallthru
          _
      $region72: #{_lambda_.1} parent=5 // pred_fallthru
        _
      %p4580 = scmp.le.s32.totalorder 2, %s22
      // Predicated region
      $region77: #{_lambda_.1} parent=5 // pred_check
        %p4581 = pneg %p4580
      $region78: #{_lambda_.1} parent=5 // pred_check_branch
        %4583 = sbr.rel (%p4581) target = $region80
      $region79: #{_lambda_.1} parent=5 // pred_region
        %s4584 = ssub.s32 %s22, 2
        // Predicated region
        $region81: #{_lambda_.1} parent=79 // pred_check
          %p4585 = pneg %p329
        $region82: #{_lambda_.1} parent=79 // pred_check_branch
          %4587 = sbr.rel (%p4585) target = $region84
        $region83: #{_lambda_.1} parent=79 // pred_region
          %s4588 = sand.u32 %s314, 1
          %s4589 = scalar_lea.sflag [#allocation6], %s4588
          %s4590 = sand.u32 %s314, 1
          %s4591 = smul.addr %s4590, 8
          %s4592 = scalar_lea.vmem [#allocation5], %s4591
          %4593 = dma.done %s4589, 128
        $region84: #{_lambda_.1} parent=79 // pred_fallthru
          _
      $region80: #{_lambda_.1} parent=5 // pred_fallthru
        _
    $region6: #{_lambda_.1} parent=1 // loop_footer
      %s26 = sadd.s32 1, %s22
    $region7: #{_lambda_.1} parent=1 // loop_footer_branch
      %21 = sbr.rel target = $region3
    $region8: #{_lambda_.1} parent=1 // loop_exit
      _
    %4594 = vsyncpa [#allocation6], 1
    %s4595 = scalar_lea.sflag [#allocation6], 1
    %4596 = vsyncpa %s4595, 1

</llo_original>
